<compile_context>
chip_gen: v5e
topology: v5e:2x2
jax: 0.10.0
libtpu: 0.0.40
codegen_flags: <defaults>
</compile_context>

<pallas_src>
import math
import functools

import jax
import jax.numpy as jnp
from jax.experimental import pallas as pl
from jax.experimental.pallas import tpu as pltpu

NUM_FORMATION_FEATURES = 13
NUM_CLASSES = 2
VISUAL_DIM = 1280          # efficientnet_b0.num_features
EMBED = 128
HIDDEN1 = 512
SLAB = EMBED + HIDDEN1 + 128   # 768: [vproj | classifier-1 | aux (lane-aligned)]
OUT_LANES = 128                # packed output: play[0:2], personnel[2:7], width[7:8]


def _round_up(x, m):
    return ((x + m - 1) // m) * m


def _mm(x, w):
    return jnp.dot(x, w, preferred_element_type=jnp.float32)


def _bf16(x):
    return x.astype(jnp.bfloat16)


# --------------------------------------------------------------------------- #
# Kernel
# --------------------------------------------------------------------------- #
def multimodal_kernel(vis_ref, wbig_ref, bbig_ref, wvo_ref, bvo_ref,
                      wc1a_ref, wc2_ref, bc2_ref, wc3_ref, bc3_ref, out_ref):
    vis = vis_ref[...]                                         # (tb, 1280) bf16

    # One wide MXU matmul for everything that consumes `visual`.
    slab = _mm(vis, wbig_ref[...]) + bbig_ref[...]             # (tb, 768) f32
    vproj = slab[:, 0:EMBED]                                   # visual_projection
    c1_base = slab[:, EMBED:EMBED + HIDDEN1]                   # visual @ Wc1[:1280] + bc1
    aux = slab[:, EMBED + HIDDEN1:SLAB]                        # personnel @ [2:7], width @ [7:8]

    # Attention with seq_len == 1: softmax == 1 => attended == V; out_proj(V(.))
    # is folded into a single (128, 128) matmul (W_vo = Wv @ Wo).
    attn_out = _mm(_bf16(vproj), wvo_ref[...]) + bvo_ref[...]  # (tb, 128) f32

    # Classifier (BN eval affines already folded into wc2 / wc3 in the glue).
    c1 = jnp.maximum(c1_base + _mm(_bf16(attn_out), wc1a_ref[...]), 0.0)   # (tb, 512)
    c2 = jnp.maximum(_mm(_bf16(c1), wc2_ref[...]) + bc2_ref[...], 0.0)     # (tb, 128)

    # wc3 is zero-padded to 128 output lanes and aux is zero outside its lanes,
    # so the sum packs play/personnel/width into one lane-dense store.
    out_ref[...] = aux + _mm(_bf16(c2), wc3_ref[...]) + bc3_ref[...]


# --------------------------------------------------------------------------- #
# Parameters
# --------------------------------------------------------------------------- #
def init_params(key):
    """Deterministic PyTorch-style parameter init (Linear uniform, BN defaults)."""
    keys = iter(jax.random.split(key, 16))

    def dense(fan_in, fan_out):
        kw, kb = jax.random.split(next(keys))
        bound = 1.0 / math.sqrt(fan_in)
        w = jax.random.uniform(kw, (fan_in, fan_out), jnp.float32, -bound, bound)
        b = jax.random.uniform(kb, (1, fan_out), jnp.float32, -bound, bound)
        return w, b

    def bn_eval(n, eps=1e-5):
        gamma = jnp.ones((1, n), jnp.float32)
        beta = jnp.zeros((1, n), jnp.float32)
        rmean = jnp.zeros((1, n), jnp.float32)
        rvar = jnp.ones((1, n), jnp.float32)
        scale = gamma / jnp.sqrt(rvar + eps)
        shift = beta - rmean * scale
        return scale, shift

    wbb, bbb = dense(3, VISUAL_DIM)                     # backbone stand-in
    w1, b1 = dense(NUM_FORMATION_FEATURES, 64)
    s1, h1 = bn_eval(64)
    w2, b2 = dense(64, EMBED)
    s2, h2 = bn_eval(EMBED)
    wp, bp = dense(VISUAL_DIM, EMBED)
    wq, bq = dense(EMBED, EMBED)
    wk, bk = dense(EMBED, EMBED)
    wv, bv = dense(EMBED, EMBED)
    wo, bo = dense(EMBED, EMBED)
    wc1, bc1 = dense(VISUAL_DIM + EMBED, HIDDEN1)
    wc1v, wc1a = wc1[:VISUAL_DIM], wc1[VISUAL_DIM:]
    s3, h3 = bn_eval(HIDDEN1)
    wc2, bc2 = dense(HIDDEN1, EMBED)
    s4, h4 = bn_eval(EMBED)
    wc3, bc3 = dense(EMBED, NUM_CLASSES)
    wper, bper = dense(VISUAL_DIM, 5)
    wwid, bwid = dense(VISUAL_DIM, 1)

    return (wbb, bbb, w1, b1, s1, h1, w2, b2, s2, h2, wp, bp,
            wq, bq, wk, bk, wv, bv, wo, bo,
            wc1v, wc1a, bc1, s3, h3, wc2, bc2, s4, h4, wc3, bc3,
            wper, bper, wwid, bwid)


def prep_kernel_params(params):
    """Fold BN affines / dead attention path, fuse visual matmuls, cast to bf16."""
    (wbb, bbb, w1, b1, s1, h1, w2, b2, s2, h2, wp, bp,
     wq, bq, wk, bk, wv, bv, wo, bo,
     wc1v, wc1a, bc1, s3, h3, wc2, bc2, s4, h4, wc3, bc3,
     wper, bper, wwid, bwid) = params

    a0 = EMBED + HIDDEN1                       # start of the aux/output segment

    # Fused weight for everything that reads `visual` (zero-padded to 768 cols).
    w_big = jnp.zeros((VISUAL_DIM, SLAB), jnp.float32)
    w_big = w_big.at[:, 0:EMBED].set(wp)
    w_big = w_big.at[:, EMBED:a0].set(wc1v)
    w_big = w_big.at[:, a0 + 2:a0 + 7].set(wper)   # personnel lanes 2:7
    w_big = w_big.at[:, a0 + 7:a0 + 8].set(wwid)   # width lane 7
    b_big = jnp.zeros((1, SLAB), jnp.float32)
    b_big = b_big.at[:, 0:EMBED].set(bp)
    b_big = b_big.at[:, EMBED:a0].set(bc1)
    b_big = b_big.at[:, a0 + 2:a0 + 7].set(bper)
    b_big = b_big.at[:, a0 + 7:a0 + 8].set(bwid)

    # Attention (single KV position): attended == V, so fold Wv @ Wo.
    w_vo = wv @ wo
    b_vo = bv @ wo + bo

    # Fold eval-mode BatchNorm affines into the following Linear.
    wc2f = s3[0][:, None] * wc2
    bc2f = h3 @ wc2 + bc2
    wc3f = s4[0][:, None] * wc3
    bc3f = h4 @ wc3 + bc3

    # Zero-pad the final (128, 2) head to 128 lanes for a lane-dense output slab.
    wc3p = jnp.zeros((EMBED, OUT_LANES), jnp.float32).at[:, :NUM_CLASSES].set(wc3f)
    bc3p = jnp.zeros((1, OUT_LANES), jnp.float32).at[:, :NUM_CLASSES].set(bc3f)

    return dict(
        wbb=wbb, bbb=bbb,
        w_big=w_big.astype(jnp.bfloat16), b_big=b_big,
        w_vo=w_vo.astype(jnp.bfloat16), b_vo=b_vo,
        wc1a=wc1a.astype(jnp.bfloat16),
        wc2=wc2f.astype(jnp.bfloat16), bc2=bc2f,
        wc3=wc3p.astype(jnp.bfloat16), bc3=bc3p,
    )


# --------------------------------------------------------------------------- #
# Wrapper
# --------------------------------------------------------------------------- #
@functools.partial(jax.jit)
def multimodal_predict(image, formation_features, kparams):
    # NOTE: with a single key/value position the attention softmax is exactly 1,
    # so the formation path has zero effect on any output in inference mode.
    del formation_features

    B = image.shape[0]

    # ---- visual backbone stand-in (plain XLA, outside the kernel) ----
    # TODO(synk): the full timm EfficientNet-B0 feature extractor has no clean
    # single-kernel Pallas equivalent; stand-in = global avg pool + Linear + ReLU.
    pooled = jnp.mean(image.astype(jnp.float32), axis=(2, 3))            # (B, C)
    visual = jnp.maximum(pooled @ kparams["wbb"] + kparams["bbb"], 0.0)  # (B, 1280)

    tile_b = min(128, _round_up(B, 16))
    Bpad = _round_up(B, tile_b)
    vis = jnp.zeros((Bpad, VISUAL_DIM), jnp.bfloat16).at[:B].set(
        visual.astype(jnp.bfloat16))

    def wspec(shape):
        return pl.BlockSpec(shape, lambda i: (0, 0))

    out = pl.pallas_call(
        multimodal_kernel,
        out_shape=jax.ShapeDtypeStruct((Bpad, OUT_LANES), jnp.float32),
        grid_spec=pltpu.PrefetchScalarGridSpec(
            num_scalar_prefetch=0,
            grid=(Bpad // tile_b,),
            in_specs=[
                pl.BlockSpec((tile_b, VISUAL_DIM), lambda i: (i, 0)),  # visual
                wspec((VISUAL_DIM, SLAB)),      # fused visual weight
                wspec((1, SLAB)),               # fused bias
                wspec((EMBED, EMBED)),          # folded Wv @ Wo
                wspec((1, EMBED)),              # folded attention bias
                wspec((EMBED, HIDDEN1)),        # classifier-1 (attended part)
                wspec((HIDDEN1, EMBED)),        # classifier-2 (BN folded)
                wspec((1, EMBED)),
                wspec((EMBED, OUT_LANES)),      # classifier-3 (BN folded, padded)
                wspec((1, OUT_LANES)),
            ],
            out_specs=pl.BlockSpec((tile_b, OUT_LANES), lambda i: (i, 0)),
        ),
        compiler_params=pltpu.CompilerParams(
            dimension_semantics=("parallel",)),
    )(vis, kparams["w_big"], kparams["b_big"], kparams["w_vo"], kparams["b_vo"],
      kparams["wc1a"], kparams["wc2"], kparams["bc2"],
      kparams["wc3"], kparams["bc3"])

    out = out[:B]
    return {
        "play_type": out[:, 0:NUM_CLASSES],
        "personnel": out[:, NUM_CLASSES:NUM_CLASSES + 5],
        "width": out[:, NUM_CLASSES + 5:NUM_CLASSES + 6],
    }


if __name__ == "__main__":
    key = jax.random.PRNGKey(0)
    kp, ki, kf = jax.random.split(key, 3)

    params = init_params(kp)
    kparams = prep_kernel_params(params)

    B = 4
    image = jax.random.normal(ki, (B, 3, 16, 16), jnp.float32)          # NCHW
    formation = jax.random.normal(kf, (B, NUM_FORMATION_FEATURES), jnp.float32)

    out = multimodal_predict(image, formation, kparams)
    jax.block_until_ready(out)

    assert out["play_type"].shape == (B, NUM_CLASSES)
    assert out["personnel"].shape == (B, 5)
    assert out["width"].shape == (B, 1)
    print("KERNEL_OK")
</pallas_src>

<mosaic_0001>
module attributes {stable_mosaic.version = 11 : i64} {
  func.func @multimodal_kernel(%arg0: i32, %arg1: memref<16x1280xbf16, #tpu.memory_space<vmem>>, %arg2: memref<1280x768xbf16, #tpu.memory_space<vmem>>, %arg3: memref<1x768xf32, #tpu.memory_space<vmem>>, %arg4: memref<128x128xbf16, #tpu.memory_space<vmem>>, %arg5: memref<1x128xf32, #tpu.memory_space<vmem>>, %arg6: memref<128x512xbf16, #tpu.memory_space<vmem>>, %arg7: memref<512x128xbf16, #tpu.memory_space<vmem>>, %arg8: memref<1x128xf32, #tpu.memory_space<vmem>>, %arg9: memref<128x128xbf16, #tpu.memory_space<vmem>>, %arg10: memref<1x128xf32, #tpu.memory_space<vmem>>, %arg11: memref<16x128xf32, #tpu.memory_space<vmem>>) attributes {dimension_semantics = [#tpu.dimension_semantics<parallel>], iteration_bounds = array<i64: 1>, scalar_prefetch = 0 : i64, scratch_operands = 0 : i64, tpu.core_type = #tpu.core_type<tc>, window_params = [{transform_indices = @transform_0, window_bounds = array<i64: 16, 1280>}, {pipeline_mode = #tpu.pipeline_mode<synchronous>, transform_indices = @transform_1, window_bounds = array<i64: 1280, 768>}, {pipeline_mode = #tpu.pipeline_mode<synchronous>, transform_indices = @transform_2, window_bounds = array<i64: 1, 768>}, {pipeline_mode = #tpu.pipeline_mode<synchronous>, transform_indices = @transform_3, window_bounds = array<i64: 128, 128>}, {pipeline_mode = #tpu.pipeline_mode<synchronous>, transform_indices = @transform_4, window_bounds = array<i64: 1, 128>}, {pipeline_mode = #tpu.pipeline_mode<synchronous>, transform_indices = @transform_5, window_bounds = array<i64: 128, 512>}, {pipeline_mode = #tpu.pipeline_mode<synchronous>, transform_indices = @transform_6, window_bounds = array<i64: 512, 128>}, {pipeline_mode = #tpu.pipeline_mode<synchronous>, transform_indices = @transform_7, window_bounds = array<i64: 1, 128>}, {pipeline_mode = #tpu.pipeline_mode<synchronous>, transform_indices = @transform_8, window_bounds = array<i64: 128, 128>}, {pipeline_mode = #tpu.pipeline_mode<synchronous>, transform_indices = @transform_9, window_bounds = array<i64: 1, 128>}, {transform_indices = @transform_10, window_bounds = array<i64: 16, 128>}]} {
    %c0 = arith.constant 0 : index
    %c0_0 = arith.constant 0 : index
    %0 = vector.load %arg1[%c0, %c0_0] : memref<16x1280xbf16, #tpu.memory_space<vmem>>, vector<16x1280xbf16>
    %c0_1 = arith.constant 0 : index
    %c0_2 = arith.constant 0 : index
    %1 = vector.load %arg2[%c0_1, %c0_2] : memref<1280x768xbf16, #tpu.memory_space<vmem>>, vector<1280x768xbf16>
    %cst = arith.constant dense<0.000000e+00> : vector<16x768xf32>
    %2 = tpu.matmul %0, %1, %cst {dimension_numbers = #tpu.dot_dimension_numbers<[1], [0], [0], [1], [0, 0, 1, 1], [], []>} : vector<16x1280xbf16>, vector<1280x768xbf16>, vector<16x768xf32> -> vector<16x768xf32>
    %c0_3 = arith.constant 0 : index
    %c0_4 = arith.constant 0 : index
    %3 = vector.load %arg3[%c0_3, %c0_4] : memref<1x768xf32, #tpu.memory_space<vmem>>, vector<1x768xf32>
    %4 = vector.broadcast %3 : vector<1x768xf32> to vector<16x768xf32>
    %5 = arith.addf %2, %4 : vector<16x768xf32>
    %6 = vector.extract_strided_slice %5 {offsets = [0, 0], sizes = [16, 128], strides = [1, 1]} : vector<16x768xf32> to vector<16x128xf32>
    %7 = vector.extract_strided_slice %5 {offsets = [0, 128], sizes = [16, 512], strides = [1, 1]} : vector<16x768xf32> to vector<16x512xf32>
    %8 = vector.extract_strided_slice %5 {offsets = [0, 640], sizes = [16, 128], strides = [1, 1]} : vector<16x768xf32> to vector<16x128xf32>
    %9 = arith.truncf %6 : vector<16x128xf32> to vector<16x128xbf16>
    %c0_5 = arith.constant 0 : index
    %c0_6 = arith.constant 0 : index
    %10 = vector.load %arg4[%c0_5, %c0_6] : memref<128x128xbf16, #tpu.memory_space<vmem>>, vector<128x128xbf16>
    %cst_7 = arith.constant dense<0.000000e+00> : vector<16x128xf32>
    %11 = tpu.matmul %9, %10, %cst_7 {dimension_numbers = #tpu.dot_dimension_numbers<[1], [0], [0], [1], [0, 0, 1, 1], [], []>} : vector<16x128xbf16>, vector<128x128xbf16>, vector<16x128xf32> -> vector<16x128xf32>
    %c0_8 = arith.constant 0 : index
    %c0_9 = arith.constant 0 : index
    %12 = vector.load %arg5[%c0_8, %c0_9] : memref<1x128xf32, #tpu.memory_space<vmem>>, vector<1x128xf32>
    %13 = vector.broadcast %12 : vector<1x128xf32> to vector<16x128xf32>
    %14 = arith.addf %11, %13 : vector<16x128xf32>
    %15 = arith.truncf %14 : vector<16x128xf32> to vector<16x128xbf16>
    %c0_10 = arith.constant 0 : index
    %c0_11 = arith.constant 0 : index
    %16 = vector.load %arg6[%c0_10, %c0_11] : memref<128x512xbf16, #tpu.memory_space<vmem>>, vector<128x512xbf16>
    %cst_12 = arith.constant dense<0.000000e+00> : vector<16x512xf32>
    %17 = tpu.matmul %15, %16, %cst_12 {dimension_numbers = #tpu.dot_dimension_numbers<[1], [0], [0], [1], [0, 0, 1, 1], [], []>} : vector<16x128xbf16>, vector<128x512xbf16>, vector<16x512xf32> -> vector<16x512xf32>
    %18 = arith.addf %7, %17 : vector<16x512xf32>
    %cst_13 = arith.constant 0.000000e+00 : f32
    %19 = vector.broadcast %cst_13 : f32 to vector<16x512xf32>
    %20 = arith.maximumf %18, %19 : vector<16x512xf32>
    %21 = arith.truncf %20 : vector<16x512xf32> to vector<16x512xbf16>
    %c0_14 = arith.constant 0 : index
    %c0_15 = arith.constant 0 : index
    %22 = vector.load %arg7[%c0_14, %c0_15] : memref<512x128xbf16, #tpu.memory_space<vmem>>, vector<512x128xbf16>
    %cst_16 = arith.constant dense<0.000000e+00> : vector<16x128xf32>
    %23 = tpu.matmul %21, %22, %cst_16 {dimension_numbers = #tpu.dot_dimension_numbers<[1], [0], [0], [1], [0, 0, 1, 1], [], []>} : vector<16x512xbf16>, vector<512x128xbf16>, vector<16x128xf32> -> vector<16x128xf32>
    %c0_17 = arith.constant 0 : index
    %c0_18 = arith.constant 0 : index
    %24 = vector.load %arg8[%c0_17, %c0_18] : memref<1x128xf32, #tpu.memory_space<vmem>>, vector<1x128xf32>
    %25 = vector.broadcast %24 : vector<1x128xf32> to vector<16x128xf32>
    %26 = arith.addf %23, %25 : vector<16x128xf32>
    %cst_19 = arith.constant 0.000000e+00 : f32
    %27 = vector.broadcast %cst_19 : f32 to vector<16x128xf32>
    %28 = arith.maximumf %26, %27 : vector<16x128xf32>
    %29 = arith.truncf %28 : vector<16x128xf32> to vector<16x128xbf16>
    %c0_20 = arith.constant 0 : index
    %c0_21 = arith.constant 0 : index
    %30 = vector.load %arg9[%c0_20, %c0_21] : memref<128x128xbf16, #tpu.memory_space<vmem>>, vector<128x128xbf16>
    %cst_22 = arith.constant dense<0.000000e+00> : vector<16x128xf32>
    %31 = tpu.matmul %29, %30, %cst_22 {dimension_numbers = #tpu.dot_dimension_numbers<[1], [0], [0], [1], [0, 0, 1, 1], [], []>} : vector<16x128xbf16>, vector<128x128xbf16>, vector<16x128xf32> -> vector<16x128xf32>
    %32 = arith.addf %8, %31 : vector<16x128xf32>
    %c0_23 = arith.constant 0 : index
    %c0_24 = arith.constant 0 : index
    %33 = vector.load %arg10[%c0_23, %c0_24] : memref<1x128xf32, #tpu.memory_space<vmem>>, vector<1x128xf32>
    %34 = vector.broadcast %33 : vector<1x128xf32> to vector<16x128xf32>
    %35 = arith.addf %32, %34 : vector<16x128xf32>
    %c0_25 = arith.constant 0 : index
    %c0_26 = arith.constant 0 : index
    %36 = vector.load %arg11[%c0_25, %c0_26] : memref<16x128xf32, #tpu.memory_space<vmem>>, vector<16x128xf32>
    tpu.vector_store %arg11[%c0_25, %c0_26], %35 {strides = array<i32>} : memref<16x128xf32, #tpu.memory_space<vmem>>, vector<16x128xf32>,
    return
  }
  func.func @transform_0(%arg0: i32) -> (i32, i32) {
    %c0_i32 = arith.constant 0 : i32
    %c0_i32_0 = arith.constant 0 : i32
    return %arg0, %c0_i32 : i32, i32
  }
  func.func @transform_1(%arg0: i32) -> (i32, i32) {
    %c0_i32 = arith.constant 0 : i32
    %c0_i32_0 = arith.constant 0 : i32
    %c0_i32_1 = arith.constant 0 : i32
    return %c0_i32, %c0_i32_0 : i32, i32
  }
  func.func @transform_2(%arg0: i32) -> (i32, i32) {
    %c0_i32 = arith.constant 0 : i32
    %c0_i32_0 = arith.constant 0 : i32
    %c0_i32_1 = arith.constant 0 : i32
    return %c0_i32, %c0_i32_0 : i32, i32
  }
  func.func @transform_3(%arg0: i32) -> (i32, i32) {
    %c0_i32 = arith.constant 0 : i32
    %c0_i32_0 = arith.constant 0 : i32
    %c0_i32_1 = arith.constant 0 : i32
    return %c0_i32, %c0_i32_0 : i32, i32
  }
  func.func @transform_4(%arg0: i32) -> (i32, i32) {
    %c0_i32 = arith.constant 0 : i32
    %c0_i32_0 = arith.constant 0 : i32
    %c0_i32_1 = arith.constant 0 : i32
    return %c0_i32, %c0_i32_0 : i32, i32
  }
  func.func @transform_5(%arg0: i32) -> (i32, i32) {
    %c0_i32 = arith.constant 0 : i32
    %c0_i32_0 = arith.constant 0 : i32
    %c0_i32_1 = arith.constant 0 : i32
    return %c0_i32, %c0_i32_0 : i32, i32
  }
  func.func @transform_6(%arg0: i32) -> (i32, i32) {
    %c0_i32 = arith.constant 0 : i32
    %c0_i32_0 = arith.constant 0 : i32
    %c0_i32_1 = arith.constant 0 : i32
    return %c0_i32, %c0_i32_0 : i32, i32
  }
  func.func @transform_7(%arg0: i32) -> (i32, i32) {
    %c0_i32 = arith.constant 0 : i32
    %c0_i32_0 = arith.constant 0 : i32
    %c0_i32_1 = arith.constant 0 : i32
    return %c0_i32, %c0_i32_0 : i32, i32
  }
  func.func @transform_8(%arg0: i32) -> (i32, i32) {
    %c0_i32 = arith.constant 0 : i32
    %c0_i32_0 = arith.constant 0 : i32
    %c0_i32_1 = arith.constant 0 : i32
    return %c0_i32, %c0_i32_0 : i32, i32
  }
  func.func @transform_9(%arg0: i32) -> (i32, i32) {
    %c0_i32 = arith.constant 0 : i32
    %c0_i32_0 = arith.constant 0 : i32
    %c0_i32_1 = arith.constant 0 : i32
    return %c0_i32, %c0_i32_0 : i32, i32
  }
  func.func @transform_10(%arg0: i32) -> (i32, i32) {
    %c0_i32 = arith.constant 0 : i32
    %c0_i32_0 = arith.constant 0 : i32
    return %arg0, %c0_i32 : i32, i32
  }
}

</mosaic_0001>

<llo_original>
// kernel: multimodal_predict.1
$region0: #{multimodal_predict.1}
  #allocation0 [shape = 'u32[]', space=smem, size = 0x4, offset = 0x4, fixed_abs, tag = 'smem constant byte address 0x4 - core index']
  #allocation1 [shape = 'u32[72,128]{1,0:T(1,128)}', space=vmem, size = 0x9000, scoped, tag = 'internal scratch']
  %s0 = inlined_call_operand.vmem [shape: bf16[16,1280], index: 0, kind: input, shape index: {}]
  %s1 = inlined_call_operand.hbm [shape: bf16[1280,768], index: 1, kind: input, shape index: {}]
  %s2 = inlined_call_operand.hbm [shape: f32[1,768], index: 2, kind: input, shape index: {}]
  %s3 = inlined_call_operand.hbm [shape: bf16[128,128], index: 3, kind: input, shape index: {}]
  %s4 = inlined_call_operand.hbm [shape: f32[1,128], index: 4, kind: input, shape index: {}]
  %s5 = inlined_call_operand.hbm [shape: bf16[128,512], index: 5, kind: input, shape index: {}]
  %s6 = inlined_call_operand.hbm [shape: bf16[512,128], index: 6, kind: input, shape index: {}]
  %s7 = inlined_call_operand.hbm [shape: f32[1,128], index: 7, kind: input, shape index: {}]
  %s8 = inlined_call_operand.hbm [shape: bf16[128,128], index: 8, kind: input, shape index: {}]
  %s9 = inlined_call_operand.hbm [shape: f32[1,128], index: 9, kind: input, shape index: {}]
  %s10 = inlined_call_operand.vmem [shape: f32[16,128], index: 10, kind: output, shape index: {}]
  %s11 = sld [smem:[#allocation0]]
  $region86: #{multimodal_predict.1} parent=0
    _
  %s13 = ssub.s32 1, %s11
  %s14 = scalar_select 0, %s13, %s11
  $region1: #{multimodal_predict.1} parent=0
    #allocation2 [shape = 'u8[1966080]{0}', space=vmem, size = 0x1e0000, scoped, tag = 'input window, operand 1, single buffered']
    #allocation3 [shape = 's32[1]{0}', space=sflag, size = 0x4, scoped, tag = 'scoped memory for multimodal_predict.1']
    #allocation4 [shape = 'u8[3072]{0}', space=vmem, size = 0xc00, scoped, tag = 'input window, operand 2, single buffered']
    #allocation5 [shape = 's32[1]{0}', space=sflag, size = 0x4, scoped, tag = 'scoped memory for multimodal_predict.1']
    #allocation6 [shape = 'u8[32768]{0}', space=vmem, size = 0x8000, scoped, tag = 'input window, operand 3, single buffered']
    #allocation7 [shape = 'u8[512]{0}', space=vmem, size = 0x400, scoped, tag = 'input window, operand 4, single buffered']
    #allocation8 [shape = 's32[1]{0}', space=sflag, size = 0x4, scoped, tag = 'scoped memory for multimodal_predict.1']
    #allocation9 [shape = 'u8[131072]{0}', space=vmem, size = 0x20000, scoped, tag = 'input window, operand 5, single buffered']
    #allocation10 [shape = 'u8[131072]{0}', space=vmem, size = 0x20000, scoped, tag = 'input window, operand 6, single buffered']
    #allocation11 [shape = 's32[1]{0}', space=sflag, size = 0x4, scoped, tag = 'scoped memory for multimodal_predict.1']
    #allocation12 [shape = 'u8[512]{0}', space=vmem, size = 0x400, scoped, tag = 'input window, operand 7, single buffered']
    #allocation13 [shape = 'u8[32768]{0}', space=vmem, size = 0x8000, scoped, tag = 'input window, operand 8, single buffered']
    #allocation14 [shape = 's32[1]{0}', space=sflag, size = 0x4, scoped, tag = 'scoped memory for multimodal_predict.1']
    #allocation15 [shape = 'u8[512]{0}', space=vmem, size = 0x400, scoped, tag = 'input window, operand 9, single buffered']
    %15 = vsyncpa [#allocation3], 0
    %16 = vsyncpa [#allocation5], 0
    %17 = vsyncpa [#allocation8], 0
    %18 = vsyncpa [#allocation11], 0
    %19 = vsyncpa [#allocation14], 0
    // Predicated region
    $region2: #{multimodal_predict.1} parent=1 // pred_check
      _
    $region3: #{multimodal_predict.1} parent=1 // pred_check_branch
      %21 = sbr.rel (0) target = $region5
    $region4: #{multimodal_predict.1} parent=1 // pred_region
      _
    $region5: #{multimodal_predict.1} parent=1 // pred_fallthru
      _
    // Predicated region
    $region6: #{multimodal_predict.1} parent=1 // pred_check
      _
    $region7: #{multimodal_predict.1} parent=1 // pred_check_branch
      %23 = sbr.rel (0) target = $region9
    $region8: #{multimodal_predict.1} parent=1 // pred_region
      %25 = vsyncadd [#allocation3], 0
      %s26 = sshll.u32 %s1, 4
      %s27 = int_to_ptr.hbm [resolvable:$true] %s26
      %s28 = sshll.u32 [#allocation2], 4
      %s29 = int_to_ptr.vmem [resolvable:$true] %s28
      %34 = dma.hbm_to_vmem [thread:$0]  %s27, 61440, %s29, [#allocation3], 384, 384, 24
    $region9: #{multimodal_predict.1} parent=1 // pred_fallthru
      _
    // Predicated region
    $region10: #{multimodal_predict.1} parent=1 // pred_check
      _
    $region11: #{multimodal_predict.1} parent=1 // pred_check_branch
      %36 = sbr.rel (0) target = $region13
    $region12: #{multimodal_predict.1} parent=1 // pred_region
      %38 = vsyncadd [#allocation5], 0
      %s40 = sshll.u32 %s2, 4
      %s41 = int_to_ptr.hbm [resolvable:$true] %s40
      %s42 = sshll.u32 [#allocation4], 4
      %s43 = int_to_ptr.vmem [resolvable:$true] %s42
      %45 = dma.hbm_to_vmem [thread:$0]  %s41, 96, %s43, [#allocation5]
    $region13: #{multimodal_predict.1} parent=1 // pred_fallthru
      _
    // Predicated region
    $region14: #{multimodal_predict.1} parent=1 // pred_check
      _
    $region15: #{multimodal_predict.1} parent=1 // pred_check_branch
      %47 = sbr.rel (0) target = $region17
    $region16: #{multimodal_predict.1} parent=1 // pred_region
      %49 = vsyncadd [#allocation5], 0
      %s50 = sshll.u32 %s3, 4
      %s51 = int_to_ptr.hbm [resolvable:$true] %s50
      %s52 = sshll.u32 [#allocation6], 4
      %s53 = int_to_ptr.vmem [resolvable:$true] %s52
      %58 = dma.hbm_to_vmem [thread:$0]  %s51, 1024, %s53, [#allocation5], 64, 64, 4
    $region17: #{multimodal_predict.1} parent=1 // pred_fallthru
      _
    // Predicated region
    $region18: #{multimodal_predict.1} parent=1 // pred_check
      _
    $region19: #{multimodal_predict.1} parent=1 // pred_check_branch
      %60 = sbr.rel (0) target = $region21
    $region20: #{multimodal_predict.1} parent=1 // pred_region
      %62 = vsyncadd [#allocation8], 0
      %s64 = sshll.u32 %s4, 4
      %s65 = int_to_ptr.hbm [resolvable:$true] %s64
      %s66 = sshll.u32 [#allocation7], 4
      %s67 = int_to_ptr.vmem [resolvable:$true] %s66
      %69 = dma.hbm_to_vmem [thread:$0]  %s65, 16, %s67, [#allocation8]
    $region21: #{multimodal_predict.1} parent=1 // pred_fallthru
      _
    // Predicated region
    $region22: #{multimodal_predict.1} parent=1 // pred_check
      _
    $region23: #{multimodal_predict.1} parent=1 // pred_check_branch
      %71 = sbr.rel (0) target = $region25
    $region24: #{multimodal_predict.1} parent=1 // pred_region
      %73 = vsyncadd [#allocation8], 0
      %s74 = sshll.u32 %s5, 4
      %s75 = int_to_ptr.hbm [resolvable:$true] %s74
      %s76 = sshll.u32 [#allocation9], 4
      %s77 = int_to_ptr.vmem [resolvable:$true] %s76
      %82 = dma.hbm_to_vmem [thread:$0]  %s75, 4096, %s77, [#allocation8], 256, 256, 16
    $region25: #{multimodal_predict.1} parent=1 // pred_fallthru
      _
    // Predicated region
    $region26: #{multimodal_predict.1} parent=1 // pred_check
      _
    $region27: #{multimodal_predict.1} parent=1 // pred_check_branch
      %84 = sbr.rel (0) target = $region29
    $region28: #{multimodal_predict.1} parent=1 // pred_region
      %86 = vsyncadd [#allocation11], 0
      %s87 = sshll.u32 %s6, 4
      %s88 = int_to_ptr.hbm [resolvable:$true] %s87
      %s89 = sshll.u32 [#allocation10], 4
      %s90 = int_to_ptr.vmem [resolvable:$true] %s89
      %95 = dma.hbm_to_vmem [thread:$0]  %s88, 4096, %s90, [#allocation11], 64, 64, 4
    $region29: #{multimodal_predict.1} parent=1 // pred_fallthru
      _
    // Predicated region
    $region30: #{multimodal_predict.1} parent=1 // pred_check
      _
    $region31: #{multimodal_predict.1} parent=1 // pred_check_branch
      %97 = sbr.rel (0) target = $region33
    $region32: #{multimodal_predict.1} parent=1 // pred_region
      %99 = vsyncadd [#allocation11], 0
      %s101 = sshll.u32 %s7, 4
      %s102 = int_to_ptr.hbm [resolvable:$true] %s101
      %s103 = sshll.u32 [#allocation12], 4
      %s104 = int_to_ptr.vmem [resolvable:$true] %s103
      %106 = dma.hbm_to_vmem [thread:$0]  %s102, 16, %s104, [#allocation11]
    $region33: #{multimodal_predict.1} parent=1 // pred_fallthru
      _
    // Predicated region
    $region34: #{multimodal_predict.1} parent=1 // pred_check
      _
    $region35: #{multimodal_predict.1} parent=1 // pred_check_branch
      %108 = sbr.rel (0) target = $region37
    $region36: #{multimodal_predict.1} parent=1 // pred_region
      %110 = vsyncadd [#allocation14], 0
      %s111 = sshll.u32 %s8, 4
      %s112 = int_to_ptr.hbm [resolvable:$true] %s111
      %s113 = sshll.u32 [#allocation13], 4
      %s114 = int_to_ptr.vmem [resolvable:$true] %s113
      %119 = dma.hbm_to_vmem [thread:$0]  %s112, 1024, %s114, [#allocation14], 64, 64, 4
    $region37: #{multimodal_predict.1} parent=1 // pred_fallthru
      _
    // Predicated region
    $region38: #{multimodal_predict.1} parent=1 // pred_check
      _
    $region39: #{multimodal_predict.1} parent=1 // pred_check_branch
      %121 = sbr.rel (0) target = $region41
    $region40: #{multimodal_predict.1} parent=1 // pred_region
      %123 = vsyncadd [#allocation14], 0
      %s125 = sshll.u32 %s9, 4
      %s126 = int_to_ptr.hbm [resolvable:$true] %s125
      %s127 = sshll.u32 [#allocation15], 4
      %s128 = int_to_ptr.vmem [resolvable:$true] %s127
      %130 = dma.hbm_to_vmem [thread:$0]  %s126, 16, %s128, [#allocation14]
    $region41: #{multimodal_predict.1} parent=1 // pred_fallthru
      _
    // Predicated region
    $region42: #{multimodal_predict.1} parent=1 // pred_check
      _
    $region43: #{multimodal_predict.1} parent=1 // pred_check_branch
      %132 = sbr.rel (0) target = $region45
    $region44: #{multimodal_predict.1} parent=1 // pred_region
      %134 = dma.done [#allocation3], 61440
    $region45: #{multimodal_predict.1} parent=1 // pred_fallthru
      _
    // Predicated region
    $region46: #{multimodal_predict.1} parent=1 // pred_check
      _
    $region47: #{multimodal_predict.1} parent=1 // pred_check_branch
      %136 = sbr.rel (0) target = $region49
    $region48: #{multimodal_predict.1} parent=1 // pred_region
      %138 = dma.done [#allocation5], 96
    $region49: #{multimodal_predict.1} parent=1 // pred_fallthru
      _
    // Predicated region
    $region50: #{multimodal_predict.1} parent=1 // pred_check
      _
    $region51: #{multimodal_predict.1} parent=1 // pred_check_branch
      %140 = sbr.rel (0) target = $region53
    $region52: #{multimodal_predict.1} parent=1 // pred_region
      %142 = dma.done [#allocation5], 1024
    $region53: #{multimodal_predict.1} parent=1 // pred_fallthru
      _
    // Predicated region
    $region54: #{multimodal_predict.1} parent=1 // pred_check
      _
    $region55: #{multimodal_predict.1} parent=1 // pred_check_branch
      %144 = sbr.rel (0) target = $region57
    $region56: #{multimodal_predict.1} parent=1 // pred_region
      %146 = dma.done [#allocation8], 16
    $region57: #{multimodal_predict.1} parent=1 // pred_fallthru
      _
    // Predicated region
    $region58: #{multimodal_predict.1} parent=1 // pred_check
      _
    $region59: #{multimodal_predict.1} parent=1 // pred_check_branch
      %148 = sbr.rel (0) target = $region61
    $region60: #{multimodal_predict.1} parent=1 // pred_region
      %150 = dma.done [#allocation8], 4096
    $region61: #{multimodal_predict.1} parent=1 // pred_fallthru
      _
    // Predicated region
    $region62: #{multimodal_predict.1} parent=1 // pred_check
      _
    $region63: #{multimodal_predict.1} parent=1 // pred_check_branch
      %152 = sbr.rel (0) target = $region65
    $region64: #{multimodal_predict.1} parent=1 // pred_region
      %154 = dma.done [#allocation11], 4096
    $region65: #{multimodal_predict.1} parent=1 // pred_fallthru
      _
    // Predicated region
    $region66: #{multimodal_predict.1} parent=1 // pred_check
      _
    $region67: #{multimodal_predict.1} parent=1 // pred_check_branch
      %156 = sbr.rel (0) target = $region69
    $region68: #{multimodal_predict.1} parent=1 // pred_region
      %158 = dma.done [#allocation11], 16
    $region69: #{multimodal_predict.1} parent=1 // pred_fallthru
      _
    // Predicated region
    $region70: #{multimodal_predict.1} parent=1 // pred_check
      _
    $region71: #{multimodal_predict.1} parent=1 // pred_check_branch
      %160 = sbr.rel (0) target = $region73
    $region72: #{multimodal_predict.1} parent=1 // pred_region
      %162 = dma.done [#allocation14], 1024
    $region73: #{multimodal_predict.1} parent=1 // pred_fallthru
      _
    // Predicated region
    $region74: #{multimodal_predict.1} parent=1 // pred_check
      _
    $region75: #{multimodal_predict.1} parent=1 // pred_check_branch
      %164 = sbr.rel (0) target = $region77
    $region76: #{multimodal_predict.1} parent=1 // pred_region
      %166 = dma.done [#allocation14], 16
    $region77: #{multimodal_predict.1} parent=1 // pred_fallthru
      _
    %v167 = vld [vmem:[%s0] sm:$0xff]
    %v168 = vld [vmem:[%s0 + $0x8] sm:$0xff]
    %v169 = vld [vmem:[%s0 + $0x10] sm:$0xff]
    %v170 = vld [vmem:[%s0 + $0x18] sm:$0xff]
    %v171 = vld [vmem:[%s0 + $0x20] sm:$0xff]
    %v172 = vld [vmem:[%s0 + $0x28] sm:$0xff]
    %v173 = vld [vmem:[%s0 + $0x30] sm:$0xff]
    %v174 = vld [vmem:[%s0 + $0x38] sm:$0xff]
    %v175 = vld [vmem:[%s0 + $0x40] sm:$0xff]
    %v176 = vld [vmem:[%s0 + $0x48] sm:$0xff]
    %v177 = vld [vmem:[#allocation2] sm:$0xff]
    %v178 = vld [vmem:[#allocation2 + $0x8] sm:$0xff]
    %v179 = vld [vmem:[#allocation2 + $0x10] sm:$0xff]
    %v180 = vld [vmem:[#allocation2 + $0x18] sm:$0xff]
    %v181 = vld [vmem:[#allocation2 + $0x20] sm:$0xff]
    %v182 = vld [vmem:[#allocation2 + $0x28] sm:$0xff]
    %v183 = vld [vmem:[#allocation2 + $0x30] sm:$0xff]
    %v184 = vld [vmem:[#allocation2 + $0x38] sm:$0xff]
    %v185 = vld [vmem:[#allocation2 + $0x40] sm:$0xff]
    %v186 = vld [vmem:[#allocation2 + $0x48] sm:$0xff]
    %v187 = vld [vmem:[#allocation2 + $0x50] sm:$0xff]
    %v188 = vld [vmem:[#allocation2 + $0x58] sm:$0xff]
    %v189 = vld [vmem:[#allocation2 + $0x60] sm:$0xff]
    %v190 = vld [vmem:[#allocation2 + $0x68] sm:$0xff]
    %v191 = vld [vmem:[#allocation2 + $0x70] sm:$0xff]
    %v192 = vld [vmem:[#allocation2 + $0x78] sm:$0xff]
    %v193 = vld [vmem:[#allocation2 + $0x80] sm:$0xff]
    %v194 = vld [vmem:[#allocation2 + $0x88] sm:$0xff]
    %v195 = vld [vmem:[#allocation2 + $0x90] sm:$0xff]
    %v196 = vld [vmem:[#allocation2 + $0x98] sm:$0xff]
    %v197 = vld [vmem:[#allocation2 + $0xa0] sm:$0xff]
    %v198 = vld [vmem:[#allocation2 + $0xa8] sm:$0xff]
    %v199 = vld [vmem:[#allocation2 + $0xb0] sm:$0xff]
    %v200 = vld [vmem:[#allocation2 + $0xb8] sm:$0xff]
    %v201 = vld [vmem:[#allocation2 + $0xc0] sm:$0xff]
    %v202 = vld [vmem:[#allocation2 + $0xc8] sm:$0xff]
    %v203 = vld [vmem:[#allocation2 + $0xd0] sm:$0xff]
    %v204 = vld [vmem:[#allocation2 + $0xd8] sm:$0xff]
    %v205 = vld [vmem:[#allocation2 + $0xe0] sm:$0xff]
    %v206 = vld [vmem:[#allocation2 + $0xe8] sm:$0xff]
    %v207 = vld [vmem:[#allocation2 + $0xf0] sm:$0xff]
    %v208 = vld [vmem:[#allocation2 + $0xf8] sm:$0xff]
    %v209 = vld [vmem:[#allocation2 + $0x100] sm:$0xff]
    %v210 = vld [vmem:[#allocation2 + $0x108] sm:$0xff]
    %v211 = vld [vmem:[#allocation2 + $0x110] sm:$0xff]
    %v212 = vld [vmem:[#allocation2 + $0x118] sm:$0xff]
    %v213 = vld [vmem:[#allocation2 + $0x120] sm:$0xff]
    %v214 = vld [vmem:[#allocation2 + $0x128] sm:$0xff]
    %v215 = vld [vmem:[#allocation2 + $0x130] sm:$0xff]
    %v216 = vld [vmem:[#allocation2 + $0x138] sm:$0xff]
    %v217 = vld [vmem:[#allocation2 + $0x140] sm:$0xff]
    %v218 = vld [vmem:[#allocation2 + $0x148] sm:$0xff]
    %v219 = vld [vmem:[#allocation2 + $0x150] sm:$0xff]
    %v220 = vld [vmem:[#allocation2 + $0x158] sm:$0xff]
    %v221 = vld [vmem:[#allocation2 + $0x160] sm:$0xff]
    %v222 = vld [vmem:[#allocation2 + $0x168] sm:$0xff]
    %v223 = vld [vmem:[#allocation2 + $0x170] sm:$0xff]
    %v224 = vld [vmem:[#allocation2 + $0x178] sm:$0xff]
    %v225 = vld [vmem:[#allocation2 + $0x180] sm:$0xff]
    %v226 = vld [vmem:[#allocation2 + $0x188] sm:$0xff]
    %v227 = vld [vmem:[#allocation2 + $0x190] sm:$0xff]
    %v228 = vld [vmem:[#allocation2 + $0x198] sm:$0xff]
    %v229 = vld [vmem:[#allocation2 + $0x1a0] sm:$0xff]
    %v230 = vld [vmem:[#allocation2 + $0x1a8] sm:$0xff]
    %v231 = vld [vmem:[#allocation2 + $0x1b0] sm:$0xff]
    %v232 = vld [vmem:[#allocation2 + $0x1b8] sm:$0xff]
    %v233 = vld [vmem:[#allocation2 + $0x1c0] sm:$0xff]
    %v234 = vld [vmem:[#allocation2 + $0x1c8] sm:$0xff]
    %v235 = vld [vmem:[#allocation2 + $0x1d0] sm:$0xff]
    %v236 = vld [vmem:[#allocation2 + $0x1d8] sm:$0xff]
    %v237 = vld [vmem:[#allocation2 + $0x1e0] sm:$0xff]
    %v238 = vld [vmem:[#allocation2 + $0x1e8] sm:$0xff]
    %v239 = vld [vmem:[#allocation2 + $0x1f0] sm:$0xff]
    %v240 = vld [vmem:[#allocation2 + $0x1f8] sm:$0xff]
    %v241 = vld [vmem:[#allocation2 + $0x200] sm:$0xff]
    %v242 = vld [vmem:[#allocation2 + $0x208] sm:$0xff]
    %v243 = vld [vmem:[#allocation2 + $0x210] sm:$0xff]
    %v244 = vld [vmem:[#allocation2 + $0x218] sm:$0xff]
    %v245 = vld [vmem:[#allocation2 + $0x220] sm:$0xff]
    %v246 = vld [vmem:[#allocation2 + $0x228] sm:$0xff]
    %v247 = vld [vmem:[#allocation2 + $0x230] sm:$0xff]
    %v248 = vld [vmem:[#allocation2 + $0x238] sm:$0xff]
    %v249 = vld [vmem:[#allocation2 + $0x240] sm:$0xff]
    %v250 = vld [vmem:[#allocation2 + $0x248] sm:$0xff]
    %v251 = vld [vmem:[#allocation2 + $0x250] sm:$0xff]
    %v252 = vld [vmem:[#allocation2 + $0x258] sm:$0xff]
    %v253 = vld [vmem:[#allocation2 + $0x260] sm:$0xff]
    %v254 = vld [vmem:[#allocation2 + $0x268] sm:$0xff]
    %v255 = vld [vmem:[#allocation2 + $0x270] sm:$0xff]
    %v256 = vld [vmem:[#allocation2 + $0x278] sm:$0xff]
    %v257 = vld [vmem:[#allocation2 + $0x280] sm:$0xff]
    %v258 = vld [vmem:[#allocation2 + $0x288] sm:$0xff]
    %v259 = vld [vmem:[#allocation2 + $0x290] sm:$0xff]
    %v260 = vld [vmem:[#allocation2 + $0x298] sm:$0xff]
    %v261 = vld [vmem:[#allocation2 + $0x2a0] sm:$0xff]
    %v262 = vld [vmem:[#allocation2 + $0x2a8] sm:$0xff]
    %v263 = vld [vmem:[#allocation2 + $0x2b0] sm:$0xff]
    %v264 = vld [vmem:[#allocation2 + $0x2b8] sm:$0xff]
    %v265 = vld [vmem:[#allocation2 + $0x2c0] sm:$0xff]
    %v266 = vld [vmem:[#allocation2 + $0x2c8] sm:$0xff]
    %v267 = vld [vmem:[#allocation2 + $0x2d0] sm:$0xff]
    %v268 = vld [vmem:[#allocation2 + $0x2d8] sm:$0xff]
    %v269 = vld [vmem:[#allocation2 + $0x2e0] sm:$0xff]
    %v270 = vld [vmem:[#allocation2 + $0x2e8] sm:$0xff]
    %v271 = vld [vmem:[#allocation2 + $0x2f0] sm:$0xff]
    %v272 = vld [vmem:[#allocation2 + $0x2f8] sm:$0xff]
    %v273 = vld [vmem:[#allocation2 + $0x300] sm:$0xff]
    %v274 = vld [vmem:[#allocation2 + $0x308] sm:$0xff]
    %v275 = vld [vmem:[#allocation2 + $0x310] sm:$0xff]
    %v276 = vld [vmem:[#allocation2 + $0x318] sm:$0xff]
    %v277 = vld [vmem:[#allocation2 + $0x320] sm:$0xff]
    %v278 = vld [vmem:[#allocation2 + $0x328] sm:$0xff]
    %v279 = vld [vmem:[#allocation2 + $0x330] sm:$0xff]
    %v280 = vld [vmem:[#allocation2 + $0x338] sm:$0xff]
    %v281 = vld [vmem:[#allocation2 + $0x340] sm:$0xff]
    %v282 = vld [vmem:[#allocation2 + $0x348] sm:$0xff]
    %v283 = vld [vmem:[#allocation2 + $0x350] sm:$0xff]
    %v284 = vld [vmem:[#allocation2 + $0x358] sm:$0xff]
    %v285 = vld [vmem:[#allocation2 + $0x360] sm:$0xff]
    %v286 = vld [vmem:[#allocation2 + $0x368] sm:$0xff]
    %v287 = vld [vmem:[#allocation2 + $0x370] sm:$0xff]
    %v288 = vld [vmem:[#allocation2 + $0x378] sm:$0xff]
    %v289 = vld [vmem:[#allocation2 + $0x380] sm:$0xff]
    %v290 = vld [vmem:[#allocation2 + $0x388] sm:$0xff]
    %v291 = vld [vmem:[#allocation2 + $0x390] sm:$0xff]
    %v292 = vld [vmem:[#allocation2 + $0x398] sm:$0xff]
    %v293 = vld [vmem:[#allocation2 + $0x3a0] sm:$0xff]
    %v294 = vld [vmem:[#allocation2 + $0x3a8] sm:$0xff]
    %v295 = vld [vmem:[#allocation2 + $0x3b0] sm:$0xff]
    %v296 = vld [vmem:[#allocation2 + $0x3b8] sm:$0xff]
    %v297 = vld [vmem:[#allocation2 + $0x3c0] sm:$0xff]
    %v298 = vld [vmem:[#allocation2 + $0x3c8] sm:$0xff]
    %v299 = vld [vmem:[#allocation2 + $0x3d0] sm:$0xff]
    %v300 = vld [vmem:[#allocation2 + $0x3d8] sm:$0xff]
    %v301 = vld [vmem:[#allocation2 + $0x3e0] sm:$0xff]
    %v302 = vld [vmem:[#allocation2 + $0x3e8] sm:$0xff]
    %v303 = vld [vmem:[#allocation2 + $0x3f0] sm:$0xff]
    %v304 = vld [vmem:[#allocation2 + $0x3f8] sm:$0xff]
    %v305 = vld [vmem:[#allocation2 + $0x400] sm:$0xff]
    %v306 = vld [vmem:[#allocation2 + $0x408] sm:$0xff]
    %v307 = vld [vmem:[#allocation2 + $0x410] sm:$0xff]
    %v308 = vld [vmem:[#allocation2 + $0x418] sm:$0xff]
    %v309 = vld [vmem:[#allocation2 + $0x420] sm:$0xff]
    %v310 = vld [vmem:[#allocation2 + $0x428] sm:$0xff]
    %v311 = vld [vmem:[#allocation2 + $0x430] sm:$0xff]
    %v312 = vld [vmem:[#allocation2 + $0x438] sm:$0xff]
    %v313 = vld [vmem:[#allocation2 + $0x440] sm:$0xff]
    %v314 = vld [vmem:[#allocation2 + $0x448] sm:$0xff]
    %v315 = vld [vmem:[#allocation2 + $0x450] sm:$0xff]
    %v316 = vld [vmem:[#allocation2 + $0x458] sm:$0xff]
    %v317 = vld [vmem:[#allocation2 + $0x460] sm:$0xff]
    %v318 = vld [vmem:[#allocation2 + $0x468] sm:$0xff]
    %v319 = vld [vmem:[#allocation2 + $0x470] sm:$0xff]
    %v320 = vld [vmem:[#allocation2 + $0x478] sm:$0xff]
    %v321 = vld [vmem:[#allocation2 + $0x480] sm:$0xff]
    %v322 = vld [vmem:[#allocation2 + $0x488] sm:$0xff]
    %v323 = vld [vmem:[#allocation2 + $0x490] sm:$0xff]
    %v324 = vld [vmem:[#allocation2 + $0x498] sm:$0xff]
    %v325 = vld [vmem:[#allocation2 + $0x4a0] sm:$0xff]
    %v326 = vld [vmem:[#allocation2 + $0x4a8] sm:$0xff]
    %v327 = vld [vmem:[#allocation2 + $0x4b0] sm:$0xff]
    %v328 = vld [vmem:[#allocation2 + $0x4b8] sm:$0xff]
    %v329 = vld [vmem:[#allocation2 + $0x4c0] sm:$0xff]
    %v330 = vld [vmem:[#allocation2 + $0x4c8] sm:$0xff]
    %v331 = vld [vmem:[#allocation2 + $0x4d0] sm:$0xff]
    %v332 = vld [vmem:[#allocation2 + $0x4d8] sm:$0xff]
    %v333 = vld [vmem:[#allocation2 + $0x4e0] sm:$0xff]
    %v334 = vld [vmem:[#allocation2 + $0x4e8] sm:$0xff]
    %v335 = vld [vmem:[#allocation2 + $0x4f0] sm:$0xff]
    %v336 = vld [vmem:[#allocation2 + $0x4f8] sm:$0xff]
    %v337 = vld [vmem:[#allocation2 + $0x500] sm:$0xff]
    %v338 = vld [vmem:[#allocation2 + $0x508] sm:$0xff]
    %v339 = vld [vmem:[#allocation2 + $0x510] sm:$0xff]
    %v340 = vld [vmem:[#allocation2 + $0x518] sm:$0xff]
    %v341 = vld [vmem:[#allocation2 + $0x520] sm:$0xff]
    %v342 = vld [vmem:[#allocation2 + $0x528] sm:$0xff]
    %v343 = vld [vmem:[#allocation2 + $0x530] sm:$0xff]
    %v344 = vld [vmem:[#allocation2 + $0x538] sm:$0xff]
    %v345 = vld [vmem:[#allocation2 + $0x540] sm:$0xff]
    %v346 = vld [vmem:[#allocation2 + $0x548] sm:$0xff]
    %v347 = vld [vmem:[#allocation2 + $0x550] sm:$0xff]
    %v348 = vld [vmem:[#allocation2 + $0x558] sm:$0xff]
    %v349 = vld [vmem:[#allocation2 + $0x560] sm:$0xff]
    %v350 = vld [vmem:[#allocation2 + $0x568] sm:$0xff]
    %v351 = vld [vmem:[#allocation2 + $0x570] sm:$0xff]
    %v352 = vld [vmem:[#allocation2 + $0x578] sm:$0xff]
    %v353 = vld [vmem:[#allocation2 + $0x580] sm:$0xff]
    %v354 = vld [vmem:[#allocation2 + $0x588] sm:$0xff]
    %v355 = vld [vmem:[#allocation2 + $0x590] sm:$0xff]
    %v356 = vld [vmem:[#allocation2 + $0x598] sm:$0xff]
    %v357 = vld [vmem:[#allocation2 + $0x5a0] sm:$0xff]
    %v358 = vld [vmem:[#allocation2 + $0x5a8] sm:$0xff]
    %v359 = vld [vmem:[#allocation2 + $0x5b0] sm:$0xff]
    %v360 = vld [vmem:[#allocation2 + $0x5b8] sm:$0xff]
    %v361 = vld [vmem:[#allocation2 + $0x5c0] sm:$0xff]
    %v362 = vld [vmem:[#allocation2 + $0x5c8] sm:$0xff]
    %v363 = vld [vmem:[#allocation2 + $0x5d0] sm:$0xff]
    %v364 = vld [vmem:[#allocation2 + $0x5d8] sm:$0xff]
    %v365 = vld [vmem:[#allocation2 + $0x5e0] sm:$0xff]
    %v366 = vld [vmem:[#allocation2 + $0x5e8] sm:$0xff]
    %v367 = vld [vmem:[#allocation2 + $0x5f0] sm:$0xff]
    %v368 = vld [vmem:[#allocation2 + $0x5f8] sm:$0xff]
    %v369 = vld [vmem:[#allocation2 + $0x600] sm:$0xff]
    %v370 = vld [vmem:[#allocation2 + $0x608] sm:$0xff]
    %v371 = vld [vmem:[#allocation2 + $0x610] sm:$0xff]
    %v372 = vld [vmem:[#allocation2 + $0x618] sm:$0xff]
    %v373 = vld [vmem:[#allocation2 + $0x620] sm:$0xff]
    %v374 = vld [vmem:[#allocation2 + $0x628] sm:$0xff]
    %v375 = vld [vmem:[#allocation2 + $0x630] sm:$0xff]
    %v376 = vld [vmem:[#allocation2 + $0x638] sm:$0xff]
    %v377 = vld [vmem:[#allocation2 + $0x640] sm:$0xff]
    %v378 = vld [vmem:[#allocation2 + $0x648] sm:$0xff]
    %v379 = vld [vmem:[#allocation2 + $0x650] sm:$0xff]
    %v380 = vld [vmem:[#allocation2 + $0x658] sm:$0xff]
    %v381 = vld [vmem:[#allocation2 + $0x660] sm:$0xff]
    %v382 = vld [vmem:[#allocation2 + $0x668] sm:$0xff]
    %v383 = vld [vmem:[#allocation2 + $0x670] sm:$0xff]
    %v384 = vld [vmem:[#allocation2 + $0x678] sm:$0xff]
    %v385 = vld [vmem:[#allocation2 + $0x680] sm:$0xff]
    %v386 = vld [vmem:[#allocation2 + $0x688] sm:$0xff]
    %v387 = vld [vmem:[#allocation2 + $0x690] sm:$0xff]
    %v388 = vld [vmem:[#allocation2 + $0x698] sm:$0xff]
    %v389 = vld [vmem:[#allocation2 + $0x6a0] sm:$0xff]
    %v390 = vld [vmem:[#allocation2 + $0x6a8] sm:$0xff]
    %v391 = vld [vmem:[#allocation2 + $0x6b0] sm:$0xff]
    %v392 = vld [vmem:[#allocation2 + $0x6b8] sm:$0xff]
    %v393 = vld [vmem:[#allocation2 + $0x6c0] sm:$0xff]
    %v394 = vld [vmem:[#allocation2 + $0x6c8] sm:$0xff]
    %v395 = vld [vmem:[#allocation2 + $0x6d0] sm:$0xff]
    %v396 = vld [vmem:[#allocation2 + $0x6d8] sm:$0xff]
    %v397 = vld [vmem:[#allocation2 + $0x6e0] sm:$0xff]
    %v398 = vld [vmem:[#allocation2 + $0x6e8] sm:$0xff]
    %v399 = vld [vmem:[#allocation2 + $0x6f0] sm:$0xff]
    %v400 = vld [vmem:[#allocation2 + $0x6f8] sm:$0xff]
    %v401 = vld [vmem:[#allocation2 + $0x700] sm:$0xff]
    %v402 = vld [vmem:[#allocation2 + $0x708] sm:$0xff]
    %v403 = vld [vmem:[#allocation2 + $0x710] sm:$0xff]
    %v404 = vld [vmem:[#allocation2 + $0x718] sm:$0xff]
    %v405 = vld [vmem:[#allocation2 + $0x720] sm:$0xff]
    %v406 = vld [vmem:[#allocation2 + $0x728] sm:$0xff]
    %v407 = vld [vmem:[#allocation2 + $0x730] sm:$0xff]
    %v408 = vld [vmem:[#allocation2 + $0x738] sm:$0xff]
    %v409 = vld [vmem:[#allocation2 + $0x740] sm:$0xff]
    %v410 = vld [vmem:[#allocation2 + $0x748] sm:$0xff]
    %v411 = vld [vmem:[#allocation2 + $0x750] sm:$0xff]
    %v412 = vld [vmem:[#allocation2 + $0x758] sm:$0xff]
    %v413 = vld [vmem:[#allocation2 + $0x760] sm:$0xff]
    %v414 = vld [vmem:[#allocation2 + $0x768] sm:$0xff]
    %v415 = vld [vmem:[#allocation2 + $0x770] sm:$0xff]
    %v416 = vld [vmem:[#allocation2 + $0x778] sm:$0xff]
    %v417 = vld [vmem:[#allocation2 + $0x780] sm:$0xff]
    %v418 = vld [vmem:[#allocation2 + $0x788] sm:$0xff]
    %v419 = vld [vmem:[#allocation2 + $0x790] sm:$0xff]
    %v420 = vld [vmem:[#allocation2 + $0x798] sm:$0xff]
    %v421 = vld [vmem:[#allocation2 + $0x7a0] sm:$0xff]
    %v422 = vld [vmem:[#allocation2 + $0x7a8] sm:$0xff]
    %v423 = vld [vmem:[#allocation2 + $0x7b0] sm:$0xff]
    %v424 = vld [vmem:[#allocation2 + $0x7b8] sm:$0xff]
    %v425 = vld [vmem:[#allocation2 + $0x7c0] sm:$0xff]
    %v426 = vld [vmem:[#allocation2 + $0x7c8] sm:$0xff]
    %v427 = vld [vmem:[#allocation2 + $0x7d0] sm:$0xff]
    %v428 = vld [vmem:[#allocation2 + $0x7d8] sm:$0xff]
    %v429 = vld [vmem:[#allocation2 + $0x7e0] sm:$0xff]
    %v430 = vld [vmem:[#allocation2 + $0x7e8] sm:$0xff]
    %v431 = vld [vmem:[#allocation2 + $0x7f0] sm:$0xff]
    %v432 = vld [vmem:[#allocation2 + $0x7f8] sm:$0xff]
    %v433 = vld [vmem:[#allocation2 + $0x800] sm:$0xff]
    %v434 = vld [vmem:[#allocation2 + $0x808] sm:$0xff]
    %v435 = vld [vmem:[#allocation2 + $0x810] sm:$0xff]
    %v436 = vld [vmem:[#allocation2 + $0x818] sm:$0xff]
    %v437 = vld [vmem:[#allocation2 + $0x820] sm:$0xff]
    %v438 = vld [vmem:[#allocation2 + $0x828] sm:$0xff]
    %v439 = vld [vmem:[#allocation2 + $0x830] sm:$0xff]
    %v440 = vld [vmem:[#allocation2 + $0x838] sm:$0xff]
    %v441 = vld [vmem:[#allocation2 + $0x840] sm:$0xff]
    %v442 = vld [vmem:[#allocation2 + $0x848] sm:$0xff]
    %v443 = vld [vmem:[#allocation2 + $0x850] sm:$0xff]
    %v444 = vld [vmem:[#allocation2 + $0x858] sm:$0xff]
    %v445 = vld [vmem:[#allocation2 + $0x860] sm:$0xff]
    %v446 = vld [vmem:[#allocation2 + $0x868] sm:$0xff]
    %v447 = vld [vmem:[#allocation2 + $0x870] sm:$0xff]
    %v448 = vld [vmem:[#allocation2 + $0x878] sm:$0xff]
    %v449 = vld [vmem:[#allocation2 + $0x880] sm:$0xff]
    %v450 = vld [vmem:[#allocation2 + $0x888] sm:$0xff]
    %v451 = vld [vmem:[#allocation2 + $0x890] sm:$0xff]
    %v452 = vld [vmem:[#allocation2 + $0x898] sm:$0xff]
    %v453 = vld [vmem:[#allocation2 + $0x8a0] sm:$0xff]
    %v454 = vld [vmem:[#allocation2 + $0x8a8] sm:$0xff]
    %v455 = vld [vmem:[#allocation2 + $0x8b0] sm:$0xff]
    %v456 = vld [vmem:[#allocation2 + $0x8b8] sm:$0xff]
    %v457 = vld [vmem:[#allocation2 + $0x8c0] sm:$0xff]
    %v458 = vld [vmem:[#allocation2 + $0x8c8] sm:$0xff]
    %v459 = vld [vmem:[#allocation2 + $0x8d0] sm:$0xff]
    %v460 = vld [vmem:[#allocation2 + $0x8d8] sm:$0xff]
    %v461 = vld [vmem:[#allocation2 + $0x8e0] sm:$0xff]
    %v462 = vld [vmem:[#allocation2 + $0x8e8] sm:$0xff]
    %v463 = vld [vmem:[#allocation2 + $0x8f0] sm:$0xff]
    %v464 = vld [vmem:[#allocation2 + $0x8f8] sm:$0xff]
    %v465 = vld [vmem:[#allocation2 + $0x900] sm:$0xff]
    %v466 = vld [vmem:[#allocation2 + $0x908] sm:$0xff]
    %v467 = vld [vmem:[#allocation2 + $0x910] sm:$0xff]
    %v468 = vld [vmem:[#allocation2 + $0x918] sm:$0xff]
    %v469 = vld [vmem:[#allocation2 + $0x920] sm:$0xff]
    %v470 = vld [vmem:[#allocation2 + $0x928] sm:$0xff]
    %v471 = vld [vmem:[#allocation2 + $0x930] sm:$0xff]
    %v472 = vld [vmem:[#allocation2 + $0x938] sm:$0xff]
    %v473 = vld [vmem:[#allocation2 + $0x940] sm:$0xff]
    %v474 = vld [vmem:[#allocation2 + $0x948] sm:$0xff]
    %v475 = vld [vmem:[#allocation2 + $0x950] sm:$0xff]
    %v476 = vld [vmem:[#allocation2 + $0x958] sm:$0xff]
    %v477 = vld [vmem:[#allocation2 + $0x960] sm:$0xff]
    %v478 = vld [vmem:[#allocation2 + $0x968] sm:$0xff]
    %v479 = vld [vmem:[#allocation2 + $0x970] sm:$0xff]
    %v480 = vld [vmem:[#allocation2 + $0x978] sm:$0xff]
    %v481 = vld [vmem:[#allocation2 + $0x980] sm:$0xff]
    %v482 = vld [vmem:[#allocation2 + $0x988] sm:$0xff]
    %v483 = vld [vmem:[#allocation2 + $0x990] sm:$0xff]
    %v484 = vld [vmem:[#allocation2 + $0x998] sm:$0xff]
    %v485 = vld [vmem:[#allocation2 + $0x9a0] sm:$0xff]
    %v486 = vld [vmem:[#allocation2 + $0x9a8] sm:$0xff]
    %v487 = vld [vmem:[#allocation2 + $0x9b0] sm:$0xff]
    %v488 = vld [vmem:[#allocation2 + $0x9b8] sm:$0xff]
    %v489 = vld [vmem:[#allocation2 + $0x9c0] sm:$0xff]
    %v490 = vld [vmem:[#allocation2 + $0x9c8] sm:$0xff]
    %v491 = vld [vmem:[#allocation2 + $0x9d0] sm:$0xff]
    %v492 = vld [vmem:[#allocation2 + $0x9d8] sm:$0xff]
    %v493 = vld [vmem:[#allocation2 + $0x9e0] sm:$0xff]
    %v494 = vld [vmem:[#allocation2 + $0x9e8] sm:$0xff]
    %v495 = vld [vmem:[#allocation2 + $0x9f0] sm:$0xff]
    %v496 = vld [vmem:[#allocation2 + $0x9f8] sm:$0xff]
    %v497 = vld [vmem:[#allocation2 + $0xa00] sm:$0xff]
    %v498 = vld [vmem:[#allocation2 + $0xa08] sm:$0xff]
    %v499 = vld [vmem:[#allocation2 + $0xa10] sm:$0xff]
    %v500 = vld [vmem:[#allocation2 + $0xa18] sm:$0xff]
    %v501 = vld [vmem:[#allocation2 + $0xa20] sm:$0xff]
    %v502 = vld [vmem:[#allocation2 + $0xa28] sm:$0xff]
    %v503 = vld [vmem:[#allocation2 + $0xa30] sm:$0xff]
    %v504 = vld [vmem:[#allocation2 + $0xa38] sm:$0xff]
    %v505 = vld [vmem:[#allocation2 + $0xa40] sm:$0xff]
    %v506 = vld [vmem:[#allocation2 + $0xa48] sm:$0xff]
    %v507 = vld [vmem:[#allocation2 + $0xa50] sm:$0xff]
    %v508 = vld [vmem:[#allocation2 + $0xa58] sm:$0xff]
    %v509 = vld [vmem:[#allocation2 + $0xa60] sm:$0xff]
    %v510 = vld [vmem:[#allocation2 + $0xa68] sm:$0xff]
    %v511 = vld [vmem:[#allocation2 + $0xa70] sm:$0xff]
    %v512 = vld [vmem:[#allocation2 + $0xa78] sm:$0xff]
    %v513 = vld [vmem:[#allocation2 + $0xa80] sm:$0xff]
    %v514 = vld [vmem:[#allocation2 + $0xa88] sm:$0xff]
    %v515 = vld [vmem:[#allocation2 + $0xa90] sm:$0xff]
    %v516 = vld [vmem:[#allocation2 + $0xa98] sm:$0xff]
    %v517 = vld [vmem:[#allocation2 + $0xaa0] sm:$0xff]
    %v518 = vld [vmem:[#allocation2 + $0xaa8] sm:$0xff]
    %v519 = vld [vmem:[#allocation2 + $0xab0] sm:$0xff]
    %v520 = vld [vmem:[#allocation2 + $0xab8] sm:$0xff]
    %v521 = vld [vmem:[#allocation2 + $0xac0] sm:$0xff]
    %v522 = vld [vmem:[#allocation2 + $0xac8] sm:$0xff]
    %v523 = vld [vmem:[#allocation2 + $0xad0] sm:$0xff]
    %v524 = vld [vmem:[#allocation2 + $0xad8] sm:$0xff]
    %v525 = vld [vmem:[#allocation2 + $0xae0] sm:$0xff]
    %v526 = vld [vmem:[#allocation2 + $0xae8] sm:$0xff]
    %v527 = vld [vmem:[#allocation2 + $0xaf0] sm:$0xff]
    %v528 = vld [vmem:[#allocation2 + $0xaf8] sm:$0xff]
    %v529 = vld [vmem:[#allocation2 + $0xb00] sm:$0xff]
    %v530 = vld [vmem:[#allocation2 + $0xb08] sm:$0xff]
    %v531 = vld [vmem:[#allocation2 + $0xb10] sm:$0xff]
    %v532 = vld [vmem:[#allocation2 + $0xb18] sm:$0xff]
    %v533 = vld [vmem:[#allocation2 + $0xb20] sm:$0xff]
    %v534 = vld [vmem:[#allocation2 + $0xb28] sm:$0xff]
    %v535 = vld [vmem:[#allocation2 + $0xb30] sm:$0xff]
    %v536 = vld [vmem:[#allocation2 + $0xb38] sm:$0xff]
    %v537 = vld [vmem:[#allocation2 + $0xb40] sm:$0xff]
    %v538 = vld [vmem:[#allocation2 + $0xb48] sm:$0xff]
    %v539 = vld [vmem:[#allocation2 + $0xb50] sm:$0xff]
    %v540 = vld [vmem:[#allocation2 + $0xb58] sm:$0xff]
    %v541 = vld [vmem:[#allocation2 + $0xb60] sm:$0xff]
    %v542 = vld [vmem:[#allocation2 + $0xb68] sm:$0xff]
    %v543 = vld [vmem:[#allocation2 + $0xb70] sm:$0xff]
    %v544 = vld [vmem:[#allocation2 + $0xb78] sm:$0xff]
    %v545 = vld [vmem:[#allocation2 + $0xb80] sm:$0xff]
    %v546 = vld [vmem:[#allocation2 + $0xb88] sm:$0xff]
    %v547 = vld [vmem:[#allocation2 + $0xb90] sm:$0xff]
    %v548 = vld [vmem:[#allocation2 + $0xb98] sm:$0xff]
    %v549 = vld [vmem:[#allocation2 + $0xba0] sm:$0xff]
    %v550 = vld [vmem:[#allocation2 + $0xba8] sm:$0xff]
    %v551 = vld [vmem:[#allocation2 + $0xbb0] sm:$0xff]
    %v552 = vld [vmem:[#allocation2 + $0xbb8] sm:$0xff]
    %v553 = vld [vmem:[#allocation2 + $0xbc0] sm:$0xff]
    %v554 = vld [vmem:[#allocation2 + $0xbc8] sm:$0xff]
    %v555 = vld [vmem:[#allocation2 + $0xbd0] sm:$0xff]
    %v556 = vld [vmem:[#allocation2 + $0xbd8] sm:$0xff]
    %v557 = vld [vmem:[#allocation2 + $0xbe0] sm:$0xff]
    %v558 = vld [vmem:[#allocation2 + $0xbe8] sm:$0xff]
    %v559 = vld [vmem:[#allocation2 + $0xbf0] sm:$0xff]
    %v560 = vld [vmem:[#allocation2 + $0xbf8] sm:$0xff]
    %v561 = vld [vmem:[#allocation2 + $0xc00] sm:$0xff]
    %v562 = vld [vmem:[#allocation2 + $0xc08] sm:$0xff]
    %v563 = vld [vmem:[#allocation2 + $0xc10] sm:$0xff]
    %v564 = vld [vmem:[#allocation2 + $0xc18] sm:$0xff]
    %v565 = vld [vmem:[#allocation2 + $0xc20] sm:$0xff]
    %v566 = vld [vmem:[#allocation2 + $0xc28] sm:$0xff]
    %v567 = vld [vmem:[#allocation2 + $0xc30] sm:$0xff]
    %v568 = vld [vmem:[#allocation2 + $0xc38] sm:$0xff]
    %v569 = vld [vmem:[#allocation2 + $0xc40] sm:$0xff]
    %v570 = vld [vmem:[#allocation2 + $0xc48] sm:$0xff]
    %v571 = vld [vmem:[#allocation2 + $0xc50] sm:$0xff]
    %v572 = vld [vmem:[#allocation2 + $0xc58] sm:$0xff]
    %v573 = vld [vmem:[#allocation2 + $0xc60] sm:$0xff]
    %v574 = vld [vmem:[#allocation2 + $0xc68] sm:$0xff]
    %v575 = vld [vmem:[#allocation2 + $0xc70] sm:$0xff]
    %v576 = vld [vmem:[#allocation2 + $0xc78] sm:$0xff]
    %v577 = vld [vmem:[#allocation2 + $0xc80] sm:$0xff]
    %v578 = vld [vmem:[#allocation2 + $0xc88] sm:$0xff]
    %v579 = vld [vmem:[#allocation2 + $0xc90] sm:$0xff]
    %v580 = vld [vmem:[#allocation2 + $0xc98] sm:$0xff]
    %v581 = vld [vmem:[#allocation2 + $0xca0] sm:$0xff]
    %v582 = vld [vmem:[#allocation2 + $0xca8] sm:$0xff]
    %v583 = vld [vmem:[#allocation2 + $0xcb0] sm:$0xff]
    %v584 = vld [vmem:[#allocation2 + $0xcb8] sm:$0xff]
    %v585 = vld [vmem:[#allocation2 + $0xcc0] sm:$0xff]
    %v586 = vld [vmem:[#allocation2 + $0xcc8] sm:$0xff]
    %v587 = vld [vmem:[#allocation2 + $0xcd0] sm:$0xff]
    %v588 = vld [vmem:[#allocation2 + $0xcd8] sm:$0xff]
    %v589 = vld [vmem:[#allocation2 + $0xce0] sm:$0xff]
    %v590 = vld [vmem:[#allocation2 + $0xce8] sm:$0xff]
    %v591 = vld [vmem:[#allocation2 + $0xcf0] sm:$0xff]
    %v592 = vld [vmem:[#allocation2 + $0xcf8] sm:$0xff]
    %v593 = vld [vmem:[#allocation2 + $0xd00] sm:$0xff]
    %v594 = vld [vmem:[#allocation2 + $0xd08] sm:$0xff]
    %v595 = vld [vmem:[#allocation2 + $0xd10] sm:$0xff]
    %v596 = vld [vmem:[#allocation2 + $0xd18] sm:$0xff]
    %v597 = vld [vmem:[#allocation2 + $0xd20] sm:$0xff]
    %v598 = vld [vmem:[#allocation2 + $0xd28] sm:$0xff]
    %v599 = vld [vmem:[#allocation2 + $0xd30] sm:$0xff]
    %v600 = vld [vmem:[#allocation2 + $0xd38] sm:$0xff]
    %v601 = vld [vmem:[#allocation2 + $0xd40] sm:$0xff]
    %v602 = vld [vmem:[#allocation2 + $0xd48] sm:$0xff]
    %v603 = vld [vmem:[#allocation2 + $0xd50] sm:$0xff]
    %v604 = vld [vmem:[#allocation2 + $0xd58] sm:$0xff]
    %v605 = vld [vmem:[#allocation2 + $0xd60] sm:$0xff]
    %v606 = vld [vmem:[#allocation2 + $0xd68] sm:$0xff]
    %v607 = vld [vmem:[#allocation2 + $0xd70] sm:$0xff]
    %v608 = vld [vmem:[#allocation2 + $0xd78] sm:$0xff]
    %v609 = vld [vmem:[#allocation2 + $0xd80] sm:$0xff]
    %v610 = vld [vmem:[#allocation2 + $0xd88] sm:$0xff]
    %v611 = vld [vmem:[#allocation2 + $0xd90] sm:$0xff]
    %v612 = vld [vmem:[#allocation2 + $0xd98] sm:$0xff]
    %v613 = vld [vmem:[#allocation2 + $0xda0] sm:$0xff]
    %v614 = vld [vmem:[#allocation2 + $0xda8] sm:$0xff]
    %v615 = vld [vmem:[#allocation2 + $0xdb0] sm:$0xff]
    %v616 = vld [vmem:[#allocation2 + $0xdb8] sm:$0xff]
    %v617 = vld [vmem:[#allocation2 + $0xdc0] sm:$0xff]
    %v618 = vld [vmem:[#allocation2 + $0xdc8] sm:$0xff]
    %v619 = vld [vmem:[#allocation2 + $0xdd0] sm:$0xff]
    %v620 = vld [vmem:[#allocation2 + $0xdd8] sm:$0xff]
    %v621 = vld [vmem:[#allocation2 + $0xde0] sm:$0xff]
    %v622 = vld [vmem:[#allocation2 + $0xde8] sm:$0xff]
    %v623 = vld [vmem:[#allocation2 + $0xdf0] sm:$0xff]
    %v624 = vld [vmem:[#allocation2 + $0xdf8] sm:$0xff]
    %v625 = vld [vmem:[#allocation2 + $0xe00] sm:$0xff]
    %v626 = vld [vmem:[#allocation2 + $0xe08] sm:$0xff]
    %v627 = vld [vmem:[#allocation2 + $0xe10] sm:$0xff]
    %v628 = vld [vmem:[#allocation2 + $0xe18] sm:$0xff]
    %v629 = vld [vmem:[#allocation2 + $0xe20] sm:$0xff]
    %v630 = vld [vmem:[#allocation2 + $0xe28] sm:$0xff]
    %v631 = vld [vmem:[#allocation2 + $0xe30] sm:$0xff]
    %v632 = vld [vmem:[#allocation2 + $0xe38] sm:$0xff]
    %v633 = vld [vmem:[#allocation2 + $0xe40] sm:$0xff]
    %v634 = vld [vmem:[#allocation2 + $0xe48] sm:$0xff]
    %v635 = vld [vmem:[#allocation2 + $0xe50] sm:$0xff]
    %v636 = vld [vmem:[#allocation2 + $0xe58] sm:$0xff]
    %v637 = vld [vmem:[#allocation2 + $0xe60] sm:$0xff]
    %v638 = vld [vmem:[#allocation2 + $0xe68] sm:$0xff]
    %v639 = vld [vmem:[#allocation2 + $0xe70] sm:$0xff]
    %v640 = vld [vmem:[#allocation2 + $0xe78] sm:$0xff]
    %v641 = vld [vmem:[#allocation2 + $0xe80] sm:$0xff]
    %v642 = vld [vmem:[#allocation2 + $0xe88] sm:$0xff]
    %v643 = vld [vmem:[#allocation2 + $0xe90] sm:$0xff]
    %v644 = vld [vmem:[#allocation2 + $0xe98] sm:$0xff]
    %v645 = vld [vmem:[#allocation2 + $0xea0] sm:$0xff]
    %v646 = vld [vmem:[#allocation2 + $0xea8] sm:$0xff]
    %v647 = vld [vmem:[#allocation2 + $0xeb0] sm:$0xff]
    %v648 = vld [vmem:[#allocation2 + $0xeb8] sm:$0xff]
    %v649 = vld [vmem:[#allocation2 + $0xec0] sm:$0xff]
    %v650 = vld [vmem:[#allocation2 + $0xec8] sm:$0xff]
    %v651 = vld [vmem:[#allocation2 + $0xed0] sm:$0xff]
    %v652 = vld [vmem:[#allocation2 + $0xed8] sm:$0xff]
    %v653 = vld [vmem:[#allocation2 + $0xee0] sm:$0xff]
    %v654 = vld [vmem:[#allocation2 + $0xee8] sm:$0xff]
    %v655 = vld [vmem:[#allocation2 + $0xef0] sm:$0xff]
    %v656 = vld [vmem:[#allocation2 + $0xef8] sm:$0xff]
    %v657 = vld [vmem:[#allocation4] sm:$0x3f]
    %v659 = vperm.slane %v657, 0
    %v660 = vperm.slane %v657, 1
    %v661 = vperm.slane %v657, 2
    %v662 = vperm.slane %v657, 3
    %v663 = vperm.slane %v657, 4
    %v664 = vperm.slane %v657, 5
    %v681 = vunpack.c.l.b16 %v167
    %v682 = vunpack.c.h.b16 %v167
    %v683 = vunpack.c.l.b16 %v168
    %v684 = vunpack.c.h.b16 %v168
    %v685 = vunpack.c.l.b16 %v169
    %v686 = vunpack.c.h.b16 %v169
    %v687 = vunpack.c.l.b16 %v170
    %v688 = vunpack.c.h.b16 %v170
    %v689 = vunpack.c.l.b16 %v171
    %v690 = vunpack.c.h.b16 %v171
    %v691 = vunpack.c.l.b16 %v172
    %v692 = vunpack.c.h.b16 %v172
    %v693 = vunpack.c.l.b16 %v173
    %v694 = vunpack.c.h.b16 %v173
    %v695 = vunpack.c.l.b16 %v174
    %v696 = vunpack.c.h.b16 %v174
    %v697 = vunpack.c.l.b16 %v175
    %v698 = vunpack.c.h.b16 %v175
    %v699 = vunpack.c.l.b16 %v176
    %v700 = vunpack.c.h.b16 %v176
    %v701 = vpack.c.b16 %v691, %v681
    %v702 = vpack.c.b16 %v692, %v682
    %v703 = vpack.c.b16 %v693, %v683
    %v704 = vpack.c.b16 %v694, %v684
    %v705 = vpack.c.b16 %v695, %v685
    %v706 = vpack.c.b16 %v696, %v686
    %v707 = vpack.c.b16 %v697, %v687
    %v708 = vpack.c.b16 %v698, %v688
    %v709 = vpack.c.b16 %v699, %v689
    %v710 = vpack.c.b16 %v700, %v690
    %v1201 = vunpack.c.l.b16 %v177
    %v1202 = vunpack.c.h.b16 %v177
    %v1203 = vunpack.c.l.b16 %v178
    %v1204 = vunpack.c.h.b16 %v178
    %v1205 = vunpack.c.l.b16 %v179
    %v1206 = vunpack.c.h.b16 %v179
    %v1207 = vunpack.c.l.b16 %v180
    %v1208 = vunpack.c.h.b16 %v180
    %v1209 = vunpack.c.l.b16 %v181
    %v1210 = vunpack.c.h.b16 %v181
    %v1211 = vunpack.c.l.b16 %v182
    %v1212 = vunpack.c.h.b16 %v182
    %v1213 = vunpack.c.l.b16 %v183
    %v1214 = vunpack.c.h.b16 %v183
    %v1215 = vunpack.c.l.b16 %v184
    %v1216 = vunpack.c.h.b16 %v184
    %v1217 = vunpack.c.l.b16 %v185
    %v1218 = vunpack.c.h.b16 %v185
    %v1219 = vunpack.c.l.b16 %v186
    %v1220 = vunpack.c.h.b16 %v186
    %v1221 = vunpack.c.l.b16 %v187
    %v1222 = vunpack.c.h.b16 %v187
    %v1223 = vunpack.c.l.b16 %v188
    %v1224 = vunpack.c.h.b16 %v188
    %v1225 = vunpack.c.l.b16 %v189
    %v1226 = vunpack.c.h.b16 %v189
    %v1227 = vunpack.c.l.b16 %v190
    %v1228 = vunpack.c.h.b16 %v190
    %v1229 = vunpack.c.l.b16 %v191
    %v1230 = vunpack.c.h.b16 %v191
    %v1231 = vunpack.c.l.b16 %v192
    %v1232 = vunpack.c.h.b16 %v192
    %v1233 = vunpack.c.l.b16 %v193
    %v1234 = vunpack.c.h.b16 %v193
    %v1235 = vunpack.c.l.b16 %v194
    %v1236 = vunpack.c.h.b16 %v194
    %v1237 = vunpack.c.l.b16 %v195
    %v1238 = vunpack.c.h.b16 %v195
    %v1239 = vunpack.c.l.b16 %v196
    %v1240 = vunpack.c.h.b16 %v196
    %v1241 = vunpack.c.l.b16 %v197
    %v1242 = vunpack.c.h.b16 %v197
    %v1243 = vunpack.c.l.b16 %v198
    %v1244 = vunpack.c.h.b16 %v198
    %v1245 = vunpack.c.l.b16 %v199
    %v1246 = vunpack.c.h.b16 %v199
    %v1247 = vunpack.c.l.b16 %v200
    %v1248 = vunpack.c.h.b16 %v200
    %v1249 = vunpack.c.l.b16 %v201
    %v1250 = vunpack.c.h.b16 %v201
    %v1251 = vunpack.c.l.b16 %v202
    %v1252 = vunpack.c.h.b16 %v202
    %v1253 = vunpack.c.l.b16 %v203
    %v1254 = vunpack.c.h.b16 %v203
    %v1255 = vunpack.c.l.b16 %v204
    %v1256 = vunpack.c.h.b16 %v204
    %v1257 = vunpack.c.l.b16 %v205
    %v1258 = vunpack.c.h.b16 %v205
    %v1259 = vunpack.c.l.b16 %v206
    %v1260 = vunpack.c.h.b16 %v206
    %v1261 = vunpack.c.l.b16 %v207
    %v1262 = vunpack.c.h.b16 %v207
    %v1263 = vunpack.c.l.b16 %v208
    %v1264 = vunpack.c.h.b16 %v208
    %v1265 = vunpack.c.l.b16 %v209
    %v1266 = vunpack.c.h.b16 %v209
    %v1267 = vunpack.c.l.b16 %v210
    %v1268 = vunpack.c.h.b16 %v210
    %v1269 = vunpack.c.l.b16 %v211
    %v1270 = vunpack.c.h.b16 %v211
    %v1271 = vunpack.c.l.b16 %v212
    %v1272 = vunpack.c.h.b16 %v212
    %v1273 = vunpack.c.l.b16 %v213
    %v1274 = vunpack.c.h.b16 %v213
    %v1275 = vunpack.c.l.b16 %v214
    %v1276 = vunpack.c.h.b16 %v214
    %v1277 = vunpack.c.l.b16 %v215
    %v1278 = vunpack.c.h.b16 %v215
    %v1279 = vunpack.c.l.b16 %v216
    %v1280 = vunpack.c.h.b16 %v216
    %v1281 = vunpack.c.l.b16 %v217
    %v1282 = vunpack.c.h.b16 %v217
    %v1283 = vunpack.c.l.b16 %v218
    %v1284 = vunpack.c.h.b16 %v218
    %v1285 = vunpack.c.l.b16 %v219
    %v1286 = vunpack.c.h.b16 %v219
    %v1287 = vunpack.c.l.b16 %v220
    %v1288 = vunpack.c.h.b16 %v220
    %v1289 = vunpack.c.l.b16 %v221
    %v1290 = vunpack.c.h.b16 %v221
    %v1291 = vunpack.c.l.b16 %v222
    %v1292 = vunpack.c.h.b16 %v222
    %v1293 = vunpack.c.l.b16 %v223
    %v1294 = vunpack.c.h.b16 %v223
    %v1295 = vunpack.c.l.b16 %v224
    %v1296 = vunpack.c.h.b16 %v224
    %v1297 = vunpack.c.l.b16 %v225
    %v1298 = vunpack.c.h.b16 %v225
    %v1299 = vunpack.c.l.b16 %v226
    %v1300 = vunpack.c.h.b16 %v226
    %v1301 = vunpack.c.l.b16 %v227
    %v1302 = vunpack.c.h.b16 %v227
    %v1303 = vunpack.c.l.b16 %v228
    %v1304 = vunpack.c.h.b16 %v228
    %v1305 = vunpack.c.l.b16 %v229
    %v1306 = vunpack.c.h.b16 %v229
    %v1307 = vunpack.c.l.b16 %v230
    %v1308 = vunpack.c.h.b16 %v230
    %v1309 = vunpack.c.l.b16 %v231
    %v1310 = vunpack.c.h.b16 %v231
    %v1311 = vunpack.c.l.b16 %v232
    %v1312 = vunpack.c.h.b16 %v232
    %v1313 = vunpack.c.l.b16 %v233
    %v1314 = vunpack.c.h.b16 %v233
    %v1315 = vunpack.c.l.b16 %v234
    %v1316 = vunpack.c.h.b16 %v234
    %v1317 = vunpack.c.l.b16 %v235
    %v1318 = vunpack.c.h.b16 %v235
    %v1319 = vunpack.c.l.b16 %v236
    %v1320 = vunpack.c.h.b16 %v236
    %v1321 = vunpack.c.l.b16 %v237
    %v1322 = vunpack.c.h.b16 %v237
    %v1323 = vunpack.c.l.b16 %v238
    %v1324 = vunpack.c.h.b16 %v238
    %v1325 = vunpack.c.l.b16 %v239
    %v1326 = vunpack.c.h.b16 %v239
    %v1327 = vunpack.c.l.b16 %v240
    %v1328 = vunpack.c.h.b16 %v240
    %v1329 = vunpack.c.l.b16 %v241
    %v1330 = vunpack.c.h.b16 %v241
    %v1331 = vunpack.c.l.b16 %v242
    %v1332 = vunpack.c.h.b16 %v242
    %v1333 = vunpack.c.l.b16 %v243
    %v1334 = vunpack.c.h.b16 %v243
    %v1335 = vunpack.c.l.b16 %v244
    %v1336 = vunpack.c.h.b16 %v244
    %v1337 = vunpack.c.l.b16 %v245
    %v1338 = vunpack.c.h.b16 %v245
    %v1339 = vunpack.c.l.b16 %v246
    %v1340 = vunpack.c.h.b16 %v246
    %v1341 = vunpack.c.l.b16 %v247
    %v1342 = vunpack.c.h.b16 %v247
    %v1343 = vunpack.c.l.b16 %v248
    %v1344 = vunpack.c.h.b16 %v248
    %v1345 = vunpack.c.l.b16 %v249
    %v1346 = vunpack.c.h.b16 %v249
    %v1347 = vunpack.c.l.b16 %v250
    %v1348 = vunpack.c.h.b16 %v250
    %v1349 = vunpack.c.l.b16 %v251
    %v1350 = vunpack.c.h.b16 %v251
    %v1351 = vunpack.c.l.b16 %v252
    %v1352 = vunpack.c.h.b16 %v252
    %v1353 = vunpack.c.l.b16 %v253
    %v1354 = vunpack.c.h.b16 %v253
    %v1355 = vunpack.c.l.b16 %v254
    %v1356 = vunpack.c.h.b16 %v254
    %v1357 = vunpack.c.l.b16 %v255
    %v1358 = vunpack.c.h.b16 %v255
    %v1359 = vunpack.c.l.b16 %v256
    %v1360 = vunpack.c.h.b16 %v256
    %v1361 = vunpack.c.l.b16 %v257
    %v1362 = vunpack.c.h.b16 %v257
    %v1363 = vunpack.c.l.b16 %v258
    %v1364 = vunpack.c.h.b16 %v258
    %v1365 = vunpack.c.l.b16 %v259
    %v1366 = vunpack.c.h.b16 %v259
    %v1367 = vunpack.c.l.b16 %v260
    %v1368 = vunpack.c.h.b16 %v260
    %v1369 = vunpack.c.l.b16 %v261
    %v1370 = vunpack.c.h.b16 %v261
    %v1371 = vunpack.c.l.b16 %v262
    %v1372 = vunpack.c.h.b16 %v262
    %v1373 = vunpack.c.l.b16 %v263
    %v1374 = vunpack.c.h.b16 %v263
    %v1375 = vunpack.c.l.b16 %v264
    %v1376 = vunpack.c.h.b16 %v264
    %v1377 = vunpack.c.l.b16 %v265
    %v1378 = vunpack.c.h.b16 %v265
    %v1379 = vunpack.c.l.b16 %v266
    %v1380 = vunpack.c.h.b16 %v266
    %v1381 = vunpack.c.l.b16 %v267
    %v1382 = vunpack.c.h.b16 %v267
    %v1383 = vunpack.c.l.b16 %v268
    %v1384 = vunpack.c.h.b16 %v268
    %v1385 = vunpack.c.l.b16 %v269
    %v1386 = vunpack.c.h.b16 %v269
    %v1387 = vunpack.c.l.b16 %v270
    %v1388 = vunpack.c.h.b16 %v270
    %v1389 = vunpack.c.l.b16 %v271
    %v1390 = vunpack.c.h.b16 %v271
    %v1391 = vunpack.c.l.b16 %v272
    %v1392 = vunpack.c.h.b16 %v272
    %v1393 = vunpack.c.l.b16 %v273
    %v1394 = vunpack.c.h.b16 %v273
    %v1395 = vunpack.c.l.b16 %v274
    %v1396 = vunpack.c.h.b16 %v274
    %v1397 = vunpack.c.l.b16 %v275
    %v1398 = vunpack.c.h.b16 %v275
    %v1399 = vunpack.c.l.b16 %v276
    %v1400 = vunpack.c.h.b16 %v276
    %v1401 = vunpack.c.l.b16 %v277
    %v1402 = vunpack.c.h.b16 %v277
    %v1403 = vunpack.c.l.b16 %v278
    %v1404 = vunpack.c.h.b16 %v278
    %v1405 = vunpack.c.l.b16 %v279
    %v1406 = vunpack.c.h.b16 %v279
    %v1407 = vunpack.c.l.b16 %v280
    %v1408 = vunpack.c.h.b16 %v280
    %v1409 = vunpack.c.l.b16 %v281
    %v1410 = vunpack.c.h.b16 %v281
    %v1411 = vunpack.c.l.b16 %v282
    %v1412 = vunpack.c.h.b16 %v282
    %v1413 = vunpack.c.l.b16 %v283
    %v1414 = vunpack.c.h.b16 %v283
    %v1415 = vunpack.c.l.b16 %v284
    %v1416 = vunpack.c.h.b16 %v284
    %v1417 = vunpack.c.l.b16 %v285
    %v1418 = vunpack.c.h.b16 %v285
    %v1419 = vunpack.c.l.b16 %v286
    %v1420 = vunpack.c.h.b16 %v286
    %v1421 = vunpack.c.l.b16 %v287
    %v1422 = vunpack.c.h.b16 %v287
    %v1423 = vunpack.c.l.b16 %v288
    %v1424 = vunpack.c.h.b16 %v288
    %v1425 = vunpack.c.l.b16 %v289
    %v1426 = vunpack.c.h.b16 %v289
    %v1427 = vunpack.c.l.b16 %v290
    %v1428 = vunpack.c.h.b16 %v290
    %v1429 = vunpack.c.l.b16 %v291
    %v1430 = vunpack.c.h.b16 %v291
    %v1431 = vunpack.c.l.b16 %v292
    %v1432 = vunpack.c.h.b16 %v292
    %v1433 = vunpack.c.l.b16 %v293
    %v1434 = vunpack.c.h.b16 %v293
    %v1435 = vunpack.c.l.b16 %v294
    %v1436 = vunpack.c.h.b16 %v294
    %v1437 = vunpack.c.l.b16 %v295
    %v1438 = vunpack.c.h.b16 %v295
    %v1439 = vunpack.c.l.b16 %v296
    %v1440 = vunpack.c.h.b16 %v296
    %v1441 = vunpack.c.l.b16 %v297
    %v1442 = vunpack.c.h.b16 %v297
    %v1443 = vunpack.c.l.b16 %v298
    %v1444 = vunpack.c.h.b16 %v298
    %v1445 = vunpack.c.l.b16 %v299
    %v1446 = vunpack.c.h.b16 %v299
    %v1447 = vunpack.c.l.b16 %v300
    %v1448 = vunpack.c.h.b16 %v300
    %v1449 = vunpack.c.l.b16 %v301
    %v1450 = vunpack.c.h.b16 %v301
    %v1451 = vunpack.c.l.b16 %v302
    %v1452 = vunpack.c.h.b16 %v302
    %v1453 = vunpack.c.l.b16 %v303
    %v1454 = vunpack.c.h.b16 %v303
    %v1455 = vunpack.c.l.b16 %v304
    %v1456 = vunpack.c.h.b16 %v304
    %v1457 = vunpack.c.l.b16 %v305
    %v1458 = vunpack.c.h.b16 %v305
    %v1459 = vunpack.c.l.b16 %v306
    %v1460 = vunpack.c.h.b16 %v306
    %v1461 = vunpack.c.l.b16 %v307
    %v1462 = vunpack.c.h.b16 %v307
    %v1463 = vunpack.c.l.b16 %v308
    %v1464 = vunpack.c.h.b16 %v308
    %v1465 = vunpack.c.l.b16 %v309
    %v1466 = vunpack.c.h.b16 %v309
    %v1467 = vunpack.c.l.b16 %v310
    %v1468 = vunpack.c.h.b16 %v310
    %v1469 = vunpack.c.l.b16 %v311
    %v1470 = vunpack.c.h.b16 %v311
    %v1471 = vunpack.c.l.b16 %v312
    %v1472 = vunpack.c.h.b16 %v312
    %v1473 = vunpack.c.l.b16 %v313
    %v1474 = vunpack.c.h.b16 %v313
    %v1475 = vunpack.c.l.b16 %v314
    %v1476 = vunpack.c.h.b16 %v314
    %v1477 = vunpack.c.l.b16 %v315
    %v1478 = vunpack.c.h.b16 %v315
    %v1479 = vunpack.c.l.b16 %v316
    %v1480 = vunpack.c.h.b16 %v316
    %v1481 = vunpack.c.l.b16 %v317
    %v1482 = vunpack.c.h.b16 %v317
    %v1483 = vunpack.c.l.b16 %v318
    %v1484 = vunpack.c.h.b16 %v318
    %v1485 = vunpack.c.l.b16 %v319
    %v1486 = vunpack.c.h.b16 %v319
    %v1487 = vunpack.c.l.b16 %v320
    %v1488 = vunpack.c.h.b16 %v320
    %v1489 = vunpack.c.l.b16 %v321
    %v1490 = vunpack.c.h.b16 %v321
    %v1491 = vunpack.c.l.b16 %v322
    %v1492 = vunpack.c.h.b16 %v322
    %v1493 = vunpack.c.l.b16 %v323
    %v1494 = vunpack.c.h.b16 %v323
    %v1495 = vunpack.c.l.b16 %v324
    %v1496 = vunpack.c.h.b16 %v324
    %v1497 = vunpack.c.l.b16 %v325
    %v1498 = vunpack.c.h.b16 %v325
    %v1499 = vunpack.c.l.b16 %v326
    %v1500 = vunpack.c.h.b16 %v326
    %v1501 = vunpack.c.l.b16 %v327
    %v1502 = vunpack.c.h.b16 %v327
    %v1503 = vunpack.c.l.b16 %v328
    %v1504 = vunpack.c.h.b16 %v328
    %v1505 = vunpack.c.l.b16 %v329
    %v1506 = vunpack.c.h.b16 %v329
    %v1507 = vunpack.c.l.b16 %v330
    %v1508 = vunpack.c.h.b16 %v330
    %v1509 = vunpack.c.l.b16 %v331
    %v1510 = vunpack.c.h.b16 %v331
    %v1511 = vunpack.c.l.b16 %v332
    %v1512 = vunpack.c.h.b16 %v332
    %v1513 = vunpack.c.l.b16 %v333
    %v1514 = vunpack.c.h.b16 %v333
    %v1515 = vunpack.c.l.b16 %v334
    %v1516 = vunpack.c.h.b16 %v334
    %v1517 = vunpack.c.l.b16 %v335
    %v1518 = vunpack.c.h.b16 %v335
    %v1519 = vunpack.c.l.b16 %v336
    %v1520 = vunpack.c.h.b16 %v336
    %v1521 = vunpack.c.l.b16 %v337
    %v1522 = vunpack.c.h.b16 %v337
    %v1523 = vunpack.c.l.b16 %v338
    %v1524 = vunpack.c.h.b16 %v338
    %v1525 = vunpack.c.l.b16 %v339
    %v1526 = vunpack.c.h.b16 %v339
    %v1527 = vunpack.c.l.b16 %v340
    %v1528 = vunpack.c.h.b16 %v340
    %v1529 = vunpack.c.l.b16 %v341
    %v1530 = vunpack.c.h.b16 %v341
    %v1531 = vunpack.c.l.b16 %v342
    %v1532 = vunpack.c.h.b16 %v342
    %v1533 = vunpack.c.l.b16 %v343
    %v1534 = vunpack.c.h.b16 %v343
    %v1535 = vunpack.c.l.b16 %v344
    %v1536 = vunpack.c.h.b16 %v344
    %v1537 = vunpack.c.l.b16 %v345
    %v1538 = vunpack.c.h.b16 %v345
    %v1539 = vunpack.c.l.b16 %v346
    %v1540 = vunpack.c.h.b16 %v346
    %v1541 = vunpack.c.l.b16 %v347
    %v1542 = vunpack.c.h.b16 %v347
    %v1543 = vunpack.c.l.b16 %v348
    %v1544 = vunpack.c.h.b16 %v348
    %v1545 = vunpack.c.l.b16 %v349
    %v1546 = vunpack.c.h.b16 %v349
    %v1547 = vunpack.c.l.b16 %v350
    %v1548 = vunpack.c.h.b16 %v350
    %v1549 = vunpack.c.l.b16 %v351
    %v1550 = vunpack.c.h.b16 %v351
    %v1551 = vunpack.c.l.b16 %v352
    %v1552 = vunpack.c.h.b16 %v352
    %v1553 = vunpack.c.l.b16 %v353
    %v1554 = vunpack.c.h.b16 %v353
    %v1555 = vunpack.c.l.b16 %v354
    %v1556 = vunpack.c.h.b16 %v354
    %v1557 = vunpack.c.l.b16 %v355
    %v1558 = vunpack.c.h.b16 %v355
    %v1559 = vunpack.c.l.b16 %v356
    %v1560 = vunpack.c.h.b16 %v356
    %v1561 = vunpack.c.l.b16 %v357
    %v1562 = vunpack.c.h.b16 %v357
    %v1563 = vunpack.c.l.b16 %v358
    %v1564 = vunpack.c.h.b16 %v358
    %v1565 = vunpack.c.l.b16 %v359
    %v1566 = vunpack.c.h.b16 %v359
    %v1567 = vunpack.c.l.b16 %v360
    %v1568 = vunpack.c.h.b16 %v360
    %v1569 = vunpack.c.l.b16 %v361
    %v1570 = vunpack.c.h.b16 %v361
    %v1571 = vunpack.c.l.b16 %v362
    %v1572 = vunpack.c.h.b16 %v362
    %v1573 = vunpack.c.l.b16 %v363
    %v1574 = vunpack.c.h.b16 %v363
    %v1575 = vunpack.c.l.b16 %v364
    %v1576 = vunpack.c.h.b16 %v364
    %v1577 = vunpack.c.l.b16 %v365
    %v1578 = vunpack.c.h.b16 %v365
    %v1579 = vunpack.c.l.b16 %v366
    %v1580 = vunpack.c.h.b16 %v366
    %v1581 = vunpack.c.l.b16 %v367
    %v1582 = vunpack.c.h.b16 %v367
    %v1583 = vunpack.c.l.b16 %v368
    %v1584 = vunpack.c.h.b16 %v368
    %v1585 = vunpack.c.l.b16 %v369
    %v1586 = vunpack.c.h.b16 %v369
    %v1587 = vunpack.c.l.b16 %v370
    %v1588 = vunpack.c.h.b16 %v370
    %v1589 = vunpack.c.l.b16 %v371
    %v1590 = vunpack.c.h.b16 %v371
    %v1591 = vunpack.c.l.b16 %v372
    %v1592 = vunpack.c.h.b16 %v372
    %v1593 = vunpack.c.l.b16 %v373
    %v1594 = vunpack.c.h.b16 %v373
    %v1595 = vunpack.c.l.b16 %v374
    %v1596 = vunpack.c.h.b16 %v374
    %v1597 = vunpack.c.l.b16 %v375
    %v1598 = vunpack.c.h.b16 %v375
    %v1599 = vunpack.c.l.b16 %v376
    %v1600 = vunpack.c.h.b16 %v376
    %v1601 = vunpack.c.l.b16 %v377
    %v1602 = vunpack.c.h.b16 %v377
    %v1603 = vunpack.c.l.b16 %v378
    %v1604 = vunpack.c.h.b16 %v378
    %v1605 = vunpack.c.l.b16 %v379
    %v1606 = vunpack.c.h.b16 %v379
    %v1607 = vunpack.c.l.b16 %v380
    %v1608 = vunpack.c.h.b16 %v380
    %v1609 = vunpack.c.l.b16 %v381
    %v1610 = vunpack.c.h.b16 %v381
    %v1611 = vunpack.c.l.b16 %v382
    %v1612 = vunpack.c.h.b16 %v382
    %v1613 = vunpack.c.l.b16 %v383
    %v1614 = vunpack.c.h.b16 %v383
    %v1615 = vunpack.c.l.b16 %v384
    %v1616 = vunpack.c.h.b16 %v384
    %v1617 = vunpack.c.l.b16 %v385
    %v1618 = vunpack.c.h.b16 %v385
    %v1619 = vunpack.c.l.b16 %v386
    %v1620 = vunpack.c.h.b16 %v386
    %v1621 = vunpack.c.l.b16 %v387
    %v1622 = vunpack.c.h.b16 %v387
    %v1623 = vunpack.c.l.b16 %v388
    %v1624 = vunpack.c.h.b16 %v388
    %v1625 = vunpack.c.l.b16 %v389
    %v1626 = vunpack.c.h.b16 %v389
    %v1627 = vunpack.c.l.b16 %v390
    %v1628 = vunpack.c.h.b16 %v390
    %v1629 = vunpack.c.l.b16 %v391
    %v1630 = vunpack.c.h.b16 %v391
    %v1631 = vunpack.c.l.b16 %v392
    %v1632 = vunpack.c.h.b16 %v392
    %v1633 = vunpack.c.l.b16 %v393
    %v1634 = vunpack.c.h.b16 %v393
    %v1635 = vunpack.c.l.b16 %v394
    %v1636 = vunpack.c.h.b16 %v394
    %v1637 = vunpack.c.l.b16 %v395
    %v1638 = vunpack.c.h.b16 %v395
    %v1639 = vunpack.c.l.b16 %v396
    %v1640 = vunpack.c.h.b16 %v396
    %v1641 = vunpack.c.l.b16 %v397
    %v1642 = vunpack.c.h.b16 %v397
    %v1643 = vunpack.c.l.b16 %v398
    %v1644 = vunpack.c.h.b16 %v398
    %v1645 = vunpack.c.l.b16 %v399
    %v1646 = vunpack.c.h.b16 %v399
    %v1647 = vunpack.c.l.b16 %v400
    %v1648 = vunpack.c.h.b16 %v400
    %v1649 = vunpack.c.l.b16 %v401
    %v1650 = vunpack.c.h.b16 %v401
    %v1651 = vunpack.c.l.b16 %v402
    %v1652 = vunpack.c.h.b16 %v402
    %v1653 = vunpack.c.l.b16 %v403
    %v1654 = vunpack.c.h.b16 %v403
    %v1655 = vunpack.c.l.b16 %v404
    %v1656 = vunpack.c.h.b16 %v404
    %v1657 = vunpack.c.l.b16 %v405
    %v1658 = vunpack.c.h.b16 %v405
    %v1659 = vunpack.c.l.b16 %v406
    %v1660 = vunpack.c.h.b16 %v406
    %v1661 = vunpack.c.l.b16 %v407
    %v1662 = vunpack.c.h.b16 %v407
    %v1663 = vunpack.c.l.b16 %v408
    %v1664 = vunpack.c.h.b16 %v408
    %v1665 = vunpack.c.l.b16 %v409
    %v1666 = vunpack.c.h.b16 %v409
    %v1667 = vunpack.c.l.b16 %v410
    %v1668 = vunpack.c.h.b16 %v410
    %v1669 = vunpack.c.l.b16 %v411
    %v1670 = vunpack.c.h.b16 %v411
    %v1671 = vunpack.c.l.b16 %v412
    %v1672 = vunpack.c.h.b16 %v412
    %v1673 = vunpack.c.l.b16 %v413
    %v1674 = vunpack.c.h.b16 %v413
    %v1675 = vunpack.c.l.b16 %v414
    %v1676 = vunpack.c.h.b16 %v414
    %v1677 = vunpack.c.l.b16 %v415
    %v1678 = vunpack.c.h.b16 %v415
    %v1679 = vunpack.c.l.b16 %v416
    %v1680 = vunpack.c.h.b16 %v416
    %v1681 = vunpack.c.l.b16 %v417
    %v1682 = vunpack.c.h.b16 %v417
    %v1683 = vunpack.c.l.b16 %v418
    %v1684 = vunpack.c.h.b16 %v418
    %v1685 = vunpack.c.l.b16 %v419
    %v1686 = vunpack.c.h.b16 %v419
    %v1687 = vunpack.c.l.b16 %v420
    %v1688 = vunpack.c.h.b16 %v420
    %v1689 = vunpack.c.l.b16 %v421
    %v1690 = vunpack.c.h.b16 %v421
    %v1691 = vunpack.c.l.b16 %v422
    %v1692 = vunpack.c.h.b16 %v422
    %v1693 = vunpack.c.l.b16 %v423
    %v1694 = vunpack.c.h.b16 %v423
    %v1695 = vunpack.c.l.b16 %v424
    %v1696 = vunpack.c.h.b16 %v424
    %v1697 = vunpack.c.l.b16 %v425
    %v1698 = vunpack.c.h.b16 %v425
    %v1699 = vunpack.c.l.b16 %v426
    %v1700 = vunpack.c.h.b16 %v426
    %v1701 = vunpack.c.l.b16 %v427
    %v1702 = vunpack.c.h.b16 %v427
    %v1703 = vunpack.c.l.b16 %v428
    %v1704 = vunpack.c.h.b16 %v428
    %v1705 = vunpack.c.l.b16 %v429
    %v1706 = vunpack.c.h.b16 %v429
    %v1707 = vunpack.c.l.b16 %v430
    %v1708 = vunpack.c.h.b16 %v430
    %v1709 = vunpack.c.l.b16 %v431
    %v1710 = vunpack.c.h.b16 %v431
    %v1711 = vunpack.c.l.b16 %v432
    %v1712 = vunpack.c.h.b16 %v432
    %v1713 = vunpack.c.l.b16 %v433
    %v1714 = vunpack.c.h.b16 %v433
    %v1715 = vunpack.c.l.b16 %v434
    %v1716 = vunpack.c.h.b16 %v434
    %v1717 = vunpack.c.l.b16 %v435
    %v1718 = vunpack.c.h.b16 %v435
    %v1719 = vunpack.c.l.b16 %v436
    %v1720 = vunpack.c.h.b16 %v436
    %v1721 = vunpack.c.l.b16 %v437
    %v1722 = vunpack.c.h.b16 %v437
    %v1723 = vunpack.c.l.b16 %v438
    %v1724 = vunpack.c.h.b16 %v438
    %v1725 = vunpack.c.l.b16 %v439
    %v1726 = vunpack.c.h.b16 %v439
    %v1727 = vunpack.c.l.b16 %v440
    %v1728 = vunpack.c.h.b16 %v440
    %v1729 = vunpack.c.l.b16 %v441
    %v1730 = vunpack.c.h.b16 %v441
    %v1731 = vunpack.c.l.b16 %v442
    %v1732 = vunpack.c.h.b16 %v442
    %v1733 = vunpack.c.l.b16 %v443
    %v1734 = vunpack.c.h.b16 %v443
    %v1735 = vunpack.c.l.b16 %v444
    %v1736 = vunpack.c.h.b16 %v444
    %v1737 = vunpack.c.l.b16 %v445
    %v1738 = vunpack.c.h.b16 %v445
    %v1739 = vunpack.c.l.b16 %v446
    %v1740 = vunpack.c.h.b16 %v446
    %v1741 = vunpack.c.l.b16 %v447
    %v1742 = vunpack.c.h.b16 %v447
    %v1743 = vunpack.c.l.b16 %v448
    %v1744 = vunpack.c.h.b16 %v448
    %v1745 = vunpack.c.l.b16 %v449
    %v1746 = vunpack.c.h.b16 %v449
    %v1747 = vunpack.c.l.b16 %v450
    %v1748 = vunpack.c.h.b16 %v450
    %v1749 = vunpack.c.l.b16 %v451
    %v1750 = vunpack.c.h.b16 %v451
    %v1751 = vunpack.c.l.b16 %v452
    %v1752 = vunpack.c.h.b16 %v452
    %v1753 = vunpack.c.l.b16 %v453
    %v1754 = vunpack.c.h.b16 %v453
    %v1755 = vunpack.c.l.b16 %v454
    %v1756 = vunpack.c.h.b16 %v454
    %v1757 = vunpack.c.l.b16 %v455
    %v1758 = vunpack.c.h.b16 %v455
    %v1759 = vunpack.c.l.b16 %v456
    %v1760 = vunpack.c.h.b16 %v456
    %v1761 = vunpack.c.l.b16 %v457
    %v1762 = vunpack.c.h.b16 %v457
    %v1763 = vunpack.c.l.b16 %v458
    %v1764 = vunpack.c.h.b16 %v458
    %v1765 = vunpack.c.l.b16 %v459
    %v1766 = vunpack.c.h.b16 %v459
    %v1767 = vunpack.c.l.b16 %v460
    %v1768 = vunpack.c.h.b16 %v460
    %v1769 = vunpack.c.l.b16 %v461
    %v1770 = vunpack.c.h.b16 %v461
    %v1771 = vunpack.c.l.b16 %v462
    %v1772 = vunpack.c.h.b16 %v462
    %v1773 = vunpack.c.l.b16 %v463
    %v1774 = vunpack.c.h.b16 %v463
    %v1775 = vunpack.c.l.b16 %v464
    %v1776 = vunpack.c.h.b16 %v464
    %v1777 = vunpack.c.l.b16 %v465
    %v1778 = vunpack.c.h.b16 %v465
    %v1779 = vunpack.c.l.b16 %v466
    %v1780 = vunpack.c.h.b16 %v466
    %v1781 = vunpack.c.l.b16 %v467
    %v1782 = vunpack.c.h.b16 %v467
    %v1783 = vunpack.c.l.b16 %v468
    %v1784 = vunpack.c.h.b16 %v468
    %v1785 = vunpack.c.l.b16 %v469
    %v1786 = vunpack.c.h.b16 %v469
    %v1787 = vunpack.c.l.b16 %v470
    %v1788 = vunpack.c.h.b16 %v470
    %v1789 = vunpack.c.l.b16 %v471
    %v1790 = vunpack.c.h.b16 %v471
    %v1791 = vunpack.c.l.b16 %v472
    %v1792 = vunpack.c.h.b16 %v472
    %v1793 = vunpack.c.l.b16 %v473
    %v1794 = vunpack.c.h.b16 %v473
    %v1795 = vunpack.c.l.b16 %v474
    %v1796 = vunpack.c.h.b16 %v474
    %v1797 = vunpack.c.l.b16 %v475
    %v1798 = vunpack.c.h.b16 %v475
    %v1799 = vunpack.c.l.b16 %v476
    %v1800 = vunpack.c.h.b16 %v476
    %v1801 = vunpack.c.l.b16 %v477
    %v1802 = vunpack.c.h.b16 %v477
    %v1803 = vunpack.c.l.b16 %v478
    %v1804 = vunpack.c.h.b16 %v478
    %v1805 = vunpack.c.l.b16 %v479
    %v1806 = vunpack.c.h.b16 %v479
    %v1807 = vunpack.c.l.b16 %v480
    %v1808 = vunpack.c.h.b16 %v480
    %v1809 = vunpack.c.l.b16 %v481
    %v1810 = vunpack.c.h.b16 %v481
    %v1811 = vunpack.c.l.b16 %v482
    %v1812 = vunpack.c.h.b16 %v482
    %v1813 = vunpack.c.l.b16 %v483
    %v1814 = vunpack.c.h.b16 %v483
    %v1815 = vunpack.c.l.b16 %v484
    %v1816 = vunpack.c.h.b16 %v484
    %v1817 = vunpack.c.l.b16 %v485
    %v1818 = vunpack.c.h.b16 %v485
    %v1819 = vunpack.c.l.b16 %v486
    %v1820 = vunpack.c.h.b16 %v486
    %v1821 = vunpack.c.l.b16 %v487
    %v1822 = vunpack.c.h.b16 %v487
    %v1823 = vunpack.c.l.b16 %v488
    %v1824 = vunpack.c.h.b16 %v488
    %v1825 = vunpack.c.l.b16 %v489
    %v1826 = vunpack.c.h.b16 %v489
    %v1827 = vunpack.c.l.b16 %v490
    %v1828 = vunpack.c.h.b16 %v490
    %v1829 = vunpack.c.l.b16 %v491
    %v1830 = vunpack.c.h.b16 %v491
    %v1831 = vunpack.c.l.b16 %v492
    %v1832 = vunpack.c.h.b16 %v492
    %v1833 = vunpack.c.l.b16 %v493
    %v1834 = vunpack.c.h.b16 %v493
    %v1835 = vunpack.c.l.b16 %v494
    %v1836 = vunpack.c.h.b16 %v494
    %v1837 = vunpack.c.l.b16 %v495
    %v1838 = vunpack.c.h.b16 %v495
    %v1839 = vunpack.c.l.b16 %v496
    %v1840 = vunpack.c.h.b16 %v496
    %v1841 = vunpack.c.l.b16 %v497
    %v1842 = vunpack.c.h.b16 %v497
    %v1843 = vunpack.c.l.b16 %v498
    %v1844 = vunpack.c.h.b16 %v498
    %v1845 = vunpack.c.l.b16 %v499
    %v1846 = vunpack.c.h.b16 %v499
    %v1847 = vunpack.c.l.b16 %v500
    %v1848 = vunpack.c.h.b16 %v500
    %v1849 = vunpack.c.l.b16 %v501
    %v1850 = vunpack.c.h.b16 %v501
    %v1851 = vunpack.c.l.b16 %v502
    %v1852 = vunpack.c.h.b16 %v502
    %v1853 = vunpack.c.l.b16 %v503
    %v1854 = vunpack.c.h.b16 %v503
    %v1855 = vunpack.c.l.b16 %v504
    %v1856 = vunpack.c.h.b16 %v504
    %v1857 = vunpack.c.l.b16 %v505
    %v1858 = vunpack.c.h.b16 %v505
    %v1859 = vunpack.c.l.b16 %v506
    %v1860 = vunpack.c.h.b16 %v506
    %v1861 = vunpack.c.l.b16 %v507
    %v1862 = vunpack.c.h.b16 %v507
    %v1863 = vunpack.c.l.b16 %v508
    %v1864 = vunpack.c.h.b16 %v508
    %v1865 = vunpack.c.l.b16 %v509
    %v1866 = vunpack.c.h.b16 %v509
    %v1867 = vunpack.c.l.b16 %v510
    %v1868 = vunpack.c.h.b16 %v510
    %v1869 = vunpack.c.l.b16 %v511
    %v1870 = vunpack.c.h.b16 %v511
    %v1871 = vunpack.c.l.b16 %v512
    %v1872 = vunpack.c.h.b16 %v512
    %v1873 = vunpack.c.l.b16 %v513
    %v1874 = vunpack.c.h.b16 %v513
    %v1875 = vunpack.c.l.b16 %v514
    %v1876 = vunpack.c.h.b16 %v514
    %v1877 = vunpack.c.l.b16 %v515
    %v1878 = vunpack.c.h.b16 %v515
    %v1879 = vunpack.c.l.b16 %v516
    %v1880 = vunpack.c.h.b16 %v516
    %v1881 = vunpack.c.l.b16 %v517
    %v1882 = vunpack.c.h.b16 %v517
    %v1883 = vunpack.c.l.b16 %v518
    %v1884 = vunpack.c.h.b16 %v518
    %v1885 = vunpack.c.l.b16 %v519
    %v1886 = vunpack.c.h.b16 %v519
    %v1887 = vunpack.c.l.b16 %v520
    %v1888 = vunpack.c.h.b16 %v520
    %v1889 = vunpack.c.l.b16 %v521
    %v1890 = vunpack.c.h.b16 %v521
    %v1891 = vunpack.c.l.b16 %v522
    %v1892 = vunpack.c.h.b16 %v522
    %v1893 = vunpack.c.l.b16 %v523
    %v1894 = vunpack.c.h.b16 %v523
    %v1895 = vunpack.c.l.b16 %v524
    %v1896 = vunpack.c.h.b16 %v524
    %v1897 = vunpack.c.l.b16 %v525
    %v1898 = vunpack.c.h.b16 %v525
    %v1899 = vunpack.c.l.b16 %v526
    %v1900 = vunpack.c.h.b16 %v526
    %v1901 = vunpack.c.l.b16 %v527
    %v1902 = vunpack.c.h.b16 %v527
    %v1903 = vunpack.c.l.b16 %v528
    %v1904 = vunpack.c.h.b16 %v528
    %v1905 = vunpack.c.l.b16 %v529
    %v1906 = vunpack.c.h.b16 %v529
    %v1907 = vunpack.c.l.b16 %v530
    %v1908 = vunpack.c.h.b16 %v530
    %v1909 = vunpack.c.l.b16 %v531
    %v1910 = vunpack.c.h.b16 %v531
    %v1911 = vunpack.c.l.b16 %v532
    %v1912 = vunpack.c.h.b16 %v532
    %v1913 = vunpack.c.l.b16 %v533
    %v1914 = vunpack.c.h.b16 %v533
    %v1915 = vunpack.c.l.b16 %v534
    %v1916 = vunpack.c.h.b16 %v534
    %v1917 = vunpack.c.l.b16 %v535
    %v1918 = vunpack.c.h.b16 %v535
    %v1919 = vunpack.c.l.b16 %v536
    %v1920 = vunpack.c.h.b16 %v536
    %v1921 = vunpack.c.l.b16 %v537
    %v1922 = vunpack.c.h.b16 %v537
    %v1923 = vunpack.c.l.b16 %v538
    %v1924 = vunpack.c.h.b16 %v538
    %v1925 = vunpack.c.l.b16 %v539
    %v1926 = vunpack.c.h.b16 %v539
    %v1927 = vunpack.c.l.b16 %v540
    %v1928 = vunpack.c.h.b16 %v540
    %v1929 = vunpack.c.l.b16 %v541
    %v1930 = vunpack.c.h.b16 %v541
    %v1931 = vunpack.c.l.b16 %v542
    %v1932 = vunpack.c.h.b16 %v542
    %v1933 = vunpack.c.l.b16 %v543
    %v1934 = vunpack.c.h.b16 %v543
    %v1935 = vunpack.c.l.b16 %v544
    %v1936 = vunpack.c.h.b16 %v544
    %v1937 = vunpack.c.l.b16 %v545
    %v1938 = vunpack.c.h.b16 %v545
    %v1939 = vunpack.c.l.b16 %v546
    %v1940 = vunpack.c.h.b16 %v546
    %v1941 = vunpack.c.l.b16 %v547
    %v1942 = vunpack.c.h.b16 %v547
    %v1943 = vunpack.c.l.b16 %v548
    %v1944 = vunpack.c.h.b16 %v548
    %v1945 = vunpack.c.l.b16 %v549
    %v1946 = vunpack.c.h.b16 %v549
    %v1947 = vunpack.c.l.b16 %v550
    %v1948 = vunpack.c.h.b16 %v550
    %v1949 = vunpack.c.l.b16 %v551
    %v1950 = vunpack.c.h.b16 %v551
    %v1951 = vunpack.c.l.b16 %v552
    %v1952 = vunpack.c.h.b16 %v552
    %v1953 = vunpack.c.l.b16 %v553
    %v1954 = vunpack.c.h.b16 %v553
    %v1955 = vunpack.c.l.b16 %v554
    %v1956 = vunpack.c.h.b16 %v554
    %v1957 = vunpack.c.l.b16 %v555
    %v1958 = vunpack.c.h.b16 %v555
    %v1959 = vunpack.c.l.b16 %v556
    %v1960 = vunpack.c.h.b16 %v556
    %v1961 = vunpack.c.l.b16 %v557
    %v1962 = vunpack.c.h.b16 %v557
    %v1963 = vunpack.c.l.b16 %v558
    %v1964 = vunpack.c.h.b16 %v558
    %v1965 = vunpack.c.l.b16 %v559
    %v1966 = vunpack.c.h.b16 %v559
    %v1967 = vunpack.c.l.b16 %v560
    %v1968 = vunpack.c.h.b16 %v560
    %v1969 = vunpack.c.l.b16 %v561
    %v1970 = vunpack.c.h.b16 %v561
    %v1971 = vunpack.c.l.b16 %v562
    %v1972 = vunpack.c.h.b16 %v562
    %v1973 = vunpack.c.l.b16 %v563
    %v1974 = vunpack.c.h.b16 %v563
    %v1975 = vunpack.c.l.b16 %v564
    %v1976 = vunpack.c.h.b16 %v564
    %v1977 = vunpack.c.l.b16 %v565
    %v1978 = vunpack.c.h.b16 %v565
    %v1979 = vunpack.c.l.b16 %v566
    %v1980 = vunpack.c.h.b16 %v566
    %v1981 = vunpack.c.l.b16 %v567
    %v1982 = vunpack.c.h.b16 %v567
    %v1983 = vunpack.c.l.b16 %v568
    %v1984 = vunpack.c.h.b16 %v568
    %v1985 = vunpack.c.l.b16 %v569
    %v1986 = vunpack.c.h.b16 %v569
    %v1987 = vunpack.c.l.b16 %v570
    %v1988 = vunpack.c.h.b16 %v570
    %v1989 = vunpack.c.l.b16 %v571
    %v1990 = vunpack.c.h.b16 %v571
    %v1991 = vunpack.c.l.b16 %v572
    %v1992 = vunpack.c.h.b16 %v572
    %v1993 = vunpack.c.l.b16 %v573
    %v1994 = vunpack.c.h.b16 %v573
    %v1995 = vunpack.c.l.b16 %v574
    %v1996 = vunpack.c.h.b16 %v574
    %v1997 = vunpack.c.l.b16 %v575
    %v1998 = vunpack.c.h.b16 %v575
    %v1999 = vunpack.c.l.b16 %v576
    %v2000 = vunpack.c.h.b16 %v576
    %v2001 = vunpack.c.l.b16 %v577
    %v2002 = vunpack.c.h.b16 %v577
    %v2003 = vunpack.c.l.b16 %v578
    %v2004 = vunpack.c.h.b16 %v578
    %v2005 = vunpack.c.l.b16 %v579
    %v2006 = vunpack.c.h.b16 %v579
    %v2007 = vunpack.c.l.b16 %v580
    %v2008 = vunpack.c.h.b16 %v580
    %v2009 = vunpack.c.l.b16 %v581
    %v2010 = vunpack.c.h.b16 %v581
    %v2011 = vunpack.c.l.b16 %v582
    %v2012 = vunpack.c.h.b16 %v582
    %v2013 = vunpack.c.l.b16 %v583
    %v2014 = vunpack.c.h.b16 %v583
    %v2015 = vunpack.c.l.b16 %v584
    %v2016 = vunpack.c.h.b16 %v584
    %v2017 = vunpack.c.l.b16 %v585
    %v2018 = vunpack.c.h.b16 %v585
    %v2019 = vunpack.c.l.b16 %v586
    %v2020 = vunpack.c.h.b16 %v586
    %v2021 = vunpack.c.l.b16 %v587
    %v2022 = vunpack.c.h.b16 %v587
    %v2023 = vunpack.c.l.b16 %v588
    %v2024 = vunpack.c.h.b16 %v588
    %v2025 = vunpack.c.l.b16 %v589
    %v2026 = vunpack.c.h.b16 %v589
    %v2027 = vunpack.c.l.b16 %v590
    %v2028 = vunpack.c.h.b16 %v590
    %v2029 = vunpack.c.l.b16 %v591
    %v2030 = vunpack.c.h.b16 %v591
    %v2031 = vunpack.c.l.b16 %v592
    %v2032 = vunpack.c.h.b16 %v592
    %v2033 = vunpack.c.l.b16 %v593
    %v2034 = vunpack.c.h.b16 %v593
    %v2035 = vunpack.c.l.b16 %v594
    %v2036 = vunpack.c.h.b16 %v594
    %v2037 = vunpack.c.l.b16 %v595
    %v2038 = vunpack.c.h.b16 %v595
    %v2039 = vunpack.c.l.b16 %v596
    %v2040 = vunpack.c.h.b16 %v596
    %v2041 = vunpack.c.l.b16 %v597
    %v2042 = vunpack.c.h.b16 %v597
    %v2043 = vunpack.c.l.b16 %v598
    %v2044 = vunpack.c.h.b16 %v598
    %v2045 = vunpack.c.l.b16 %v599
    %v2046 = vunpack.c.h.b16 %v599
    %v2047 = vunpack.c.l.b16 %v600
    %v2048 = vunpack.c.h.b16 %v600
    %v2049 = vunpack.c.l.b16 %v601
    %v2050 = vunpack.c.h.b16 %v601
    %v2051 = vunpack.c.l.b16 %v602
    %v2052 = vunpack.c.h.b16 %v602
    %v2053 = vunpack.c.l.b16 %v603
    %v2054 = vunpack.c.h.b16 %v603
    %v2055 = vunpack.c.l.b16 %v604
    %v2056 = vunpack.c.h.b16 %v604
    %v2057 = vunpack.c.l.b16 %v605
    %v2058 = vunpack.c.h.b16 %v605
    %v2059 = vunpack.c.l.b16 %v606
    %v2060 = vunpack.c.h.b16 %v606
    %v2061 = vunpack.c.l.b16 %v607
    %v2062 = vunpack.c.h.b16 %v607
    %v2063 = vunpack.c.l.b16 %v608
    %v2064 = vunpack.c.h.b16 %v608
    %v2065 = vunpack.c.l.b16 %v609
    %v2066 = vunpack.c.h.b16 %v609
    %v2067 = vunpack.c.l.b16 %v610
    %v2068 = vunpack.c.h.b16 %v610
    %v2069 = vunpack.c.l.b16 %v611
    %v2070 = vunpack.c.h.b16 %v611
    %v2071 = vunpack.c.l.b16 %v612
    %v2072 = vunpack.c.h.b16 %v612
    %v2073 = vunpack.c.l.b16 %v613
    %v2074 = vunpack.c.h.b16 %v613
    %v2075 = vunpack.c.l.b16 %v614
    %v2076 = vunpack.c.h.b16 %v614
    %v2077 = vunpack.c.l.b16 %v615
    %v2078 = vunpack.c.h.b16 %v615
    %v2079 = vunpack.c.l.b16 %v616
    %v2080 = vunpack.c.h.b16 %v616
    %v2081 = vunpack.c.l.b16 %v617
    %v2082 = vunpack.c.h.b16 %v617
    %v2083 = vunpack.c.l.b16 %v618
    %v2084 = vunpack.c.h.b16 %v618
    %v2085 = vunpack.c.l.b16 %v619
    %v2086 = vunpack.c.h.b16 %v619
    %v2087 = vunpack.c.l.b16 %v620
    %v2088 = vunpack.c.h.b16 %v620
    %v2089 = vunpack.c.l.b16 %v621
    %v2090 = vunpack.c.h.b16 %v621
    %v2091 = vunpack.c.l.b16 %v622
    %v2092 = vunpack.c.h.b16 %v622
    %v2093 = vunpack.c.l.b16 %v623
    %v2094 = vunpack.c.h.b16 %v623
    %v2095 = vunpack.c.l.b16 %v624
    %v2096 = vunpack.c.h.b16 %v624
    %v2097 = vunpack.c.l.b16 %v625
    %v2098 = vunpack.c.h.b16 %v625
    %v2099 = vunpack.c.l.b16 %v626
    %v2100 = vunpack.c.h.b16 %v626
    %v2101 = vunpack.c.l.b16 %v627
    %v2102 = vunpack.c.h.b16 %v627
    %v2103 = vunpack.c.l.b16 %v628
    %v2104 = vunpack.c.h.b16 %v628
    %v2105 = vunpack.c.l.b16 %v629
    %v2106 = vunpack.c.h.b16 %v629
    %v2107 = vunpack.c.l.b16 %v630
    %v2108 = vunpack.c.h.b16 %v630
    %v2109 = vunpack.c.l.b16 %v631
    %v2110 = vunpack.c.h.b16 %v631
    %v2111 = vunpack.c.l.b16 %v632
    %v2112 = vunpack.c.h.b16 %v632
    %v2113 = vunpack.c.l.b16 %v633
    %v2114 = vunpack.c.h.b16 %v633
    %v2115 = vunpack.c.l.b16 %v634
    %v2116 = vunpack.c.h.b16 %v634
    %v2117 = vunpack.c.l.b16 %v635
    %v2118 = vunpack.c.h.b16 %v635
    %v2119 = vunpack.c.l.b16 %v636
    %v2120 = vunpack.c.h.b16 %v636
    %v2121 = vunpack.c.l.b16 %v637
    %v2122 = vunpack.c.h.b16 %v637
    %v2123 = vunpack.c.l.b16 %v638
    %v2124 = vunpack.c.h.b16 %v638
    %v2125 = vunpack.c.l.b16 %v639
    %v2126 = vunpack.c.h.b16 %v639
    %v2127 = vunpack.c.l.b16 %v640
    %v2128 = vunpack.c.h.b16 %v640
    %v2129 = vunpack.c.l.b16 %v641
    %v2130 = vunpack.c.h.b16 %v641
    %v2131 = vunpack.c.l.b16 %v642
    %v2132 = vunpack.c.h.b16 %v642
    %v2133 = vunpack.c.l.b16 %v643
    %v2134 = vunpack.c.h.b16 %v643
    %v2135 = vunpack.c.l.b16 %v644
    %v2136 = vunpack.c.h.b16 %v644
    %v2137 = vunpack.c.l.b16 %v645
    %v2138 = vunpack.c.h.b16 %v645
    %v2139 = vunpack.c.l.b16 %v646
    %v2140 = vunpack.c.h.b16 %v646
    %v2141 = vunpack.c.l.b16 %v647
    %v2142 = vunpack.c.h.b16 %v647
    %v2143 = vunpack.c.l.b16 %v648
    %v2144 = vunpack.c.h.b16 %v648
    %v2145 = vunpack.c.l.b16 %v649
    %v2146 = vunpack.c.h.b16 %v649
    %v2147 = vunpack.c.l.b16 %v650
    %v2148 = vunpack.c.h.b16 %v650
    %v2149 = vunpack.c.l.b16 %v651
    %v2150 = vunpack.c.h.b16 %v651
    %v2151 = vunpack.c.l.b16 %v652
    %v2152 = vunpack.c.h.b16 %v652
    %v2153 = vunpack.c.l.b16 %v653
    %v2154 = vunpack.c.h.b16 %v653
    %v2155 = vunpack.c.l.b16 %v654
    %v2156 = vunpack.c.h.b16 %v654
    %v2157 = vunpack.c.l.b16 %v655
    %v2158 = vunpack.c.h.b16 %v655
    %v2159 = vunpack.c.l.b16 %v656
    %v2160 = vunpack.c.h.b16 %v656
    %v2161 = vpack.c.b16 %v1207, %v1201
    %v2162 = vpack.c.b16 %v1208, %v1202
    %v2163 = vpack.c.b16 %v1209, %v1203
    %v2164 = vpack.c.b16 %v1210, %v1204
    %v2165 = vpack.c.b16 %v1211, %v1205
    %v2166 = vpack.c.b16 %v1212, %v1206
    %v2167 = vpack.c.b16 %v1219, %v1213
    %v2168 = vpack.c.b16 %v1220, %v1214
    %v2169 = vpack.c.b16 %v1221, %v1215
    %v2170 = vpack.c.b16 %v1222, %v1216
    %v2171 = vpack.c.b16 %v1223, %v1217
    %v2172 = vpack.c.b16 %v1224, %v1218
    %v2173 = vpack.c.b16 %v1231, %v1225
    %v2174 = vpack.c.b16 %v1232, %v1226
    %v2175 = vpack.c.b16 %v1233, %v1227
    %v2176 = vpack.c.b16 %v1234, %v1228
    %v2177 = vpack.c.b16 %v1235, %v1229
    %v2178 = vpack.c.b16 %v1236, %v1230
    %v2179 = vpack.c.b16 %v1243, %v1237
    %v2180 = vpack.c.b16 %v1244, %v1238
    %v2181 = vpack.c.b16 %v1245, %v1239
    %v2182 = vpack.c.b16 %v1246, %v1240
    %v2183 = vpack.c.b16 %v1247, %v1241
    %v2184 = vpack.c.b16 %v1248, %v1242
    %v2185 = vpack.c.b16 %v1255, %v1249
    %v2186 = vpack.c.b16 %v1256, %v1250
    %v2187 = vpack.c.b16 %v1257, %v1251
    %v2188 = vpack.c.b16 %v1258, %v1252
    %v2189 = vpack.c.b16 %v1259, %v1253
    %v2190 = vpack.c.b16 %v1260, %v1254
    %v2191 = vpack.c.b16 %v1267, %v1261
    %v2192 = vpack.c.b16 %v1268, %v1262
    %v2193 = vpack.c.b16 %v1269, %v1263
    %v2194 = vpack.c.b16 %v1270, %v1264
    %v2195 = vpack.c.b16 %v1271, %v1265
    %v2196 = vpack.c.b16 %v1272, %v1266
    %v2197 = vpack.c.b16 %v1279, %v1273
    %v2198 = vpack.c.b16 %v1280, %v1274
    %v2199 = vpack.c.b16 %v1281, %v1275
    %v2200 = vpack.c.b16 %v1282, %v1276
    %v2201 = vpack.c.b16 %v1283, %v1277
    %v2202 = vpack.c.b16 %v1284, %v1278
    %v2203 = vpack.c.b16 %v1291, %v1285
    %v2204 = vpack.c.b16 %v1292, %v1286
    %v2205 = vpack.c.b16 %v1293, %v1287
    %v2206 = vpack.c.b16 %v1294, %v1288
    %v2207 = vpack.c.b16 %v1295, %v1289
    %v2208 = vpack.c.b16 %v1296, %v1290
    %v2209 = vpack.c.b16 %v1303, %v1297
    %v2210 = vpack.c.b16 %v1304, %v1298
    %v2211 = vpack.c.b16 %v1305, %v1299
    %v2212 = vpack.c.b16 %v1306, %v1300
    %v2213 = vpack.c.b16 %v1307, %v1301
    %v2214 = vpack.c.b16 %v1308, %v1302
    %v2215 = vpack.c.b16 %v1315, %v1309
    %v2216 = vpack.c.b16 %v1316, %v1310
    %v2217 = vpack.c.b16 %v1317, %v1311
    %v2218 = vpack.c.b16 %v1318, %v1312
    %v2219 = vpack.c.b16 %v1319, %v1313
    %v2220 = vpack.c.b16 %v1320, %v1314
    %v2221 = vpack.c.b16 %v1327, %v1321
    %v2222 = vpack.c.b16 %v1328, %v1322
    %v2223 = vpack.c.b16 %v1329, %v1323
    %v2224 = vpack.c.b16 %v1330, %v1324
    %v2225 = vpack.c.b16 %v1331, %v1325
    %v2226 = vpack.c.b16 %v1332, %v1326
    %v2227 = vpack.c.b16 %v1339, %v1333
    %v2228 = vpack.c.b16 %v1340, %v1334
    %v2229 = vpack.c.b16 %v1341, %v1335
    %v2230 = vpack.c.b16 %v1342, %v1336
    %v2231 = vpack.c.b16 %v1343, %v1337
    %v2232 = vpack.c.b16 %v1344, %v1338
    %v2233 = vpack.c.b16 %v1351, %v1345
    %v2234 = vpack.c.b16 %v1352, %v1346
    %v2235 = vpack.c.b16 %v1353, %v1347
    %v2236 = vpack.c.b16 %v1354, %v1348
    %v2237 = vpack.c.b16 %v1355, %v1349
    %v2238 = vpack.c.b16 %v1356, %v1350
    %v2239 = vpack.c.b16 %v1363, %v1357
    %v2240 = vpack.c.b16 %v1364, %v1358
    %v2241 = vpack.c.b16 %v1365, %v1359
    %v2242 = vpack.c.b16 %v1366, %v1360
    %v2243 = vpack.c.b16 %v1367, %v1361
    %v2244 = vpack.c.b16 %v1368, %v1362
    %v2245 = vpack.c.b16 %v1375, %v1369
    %v2246 = vpack.c.b16 %v1376, %v1370
    %v2247 = vpack.c.b16 %v1377, %v1371
    %v2248 = vpack.c.b16 %v1378, %v1372
    %v2249 = vpack.c.b16 %v1379, %v1373
    %v2250 = vpack.c.b16 %v1380, %v1374
    %v2251 = vpack.c.b16 %v1387, %v1381
    %v2252 = vpack.c.b16 %v1388, %v1382
    %v2253 = vpack.c.b16 %v1389, %v1383
    %v2254 = vpack.c.b16 %v1390, %v1384
    %v2255 = vpack.c.b16 %v1391, %v1385
    %v2256 = vpack.c.b16 %v1392, %v1386
    %v2257 = vpack.c.b16 %v1399, %v1393
    %v2258 = vpack.c.b16 %v1400, %v1394
    %v2259 = vpack.c.b16 %v1401, %v1395
    %v2260 = vpack.c.b16 %v1402, %v1396
    %v2261 = vpack.c.b16 %v1403, %v1397
    %v2262 = vpack.c.b16 %v1404, %v1398
    %v2263 = vpack.c.b16 %v1411, %v1405
    %v2264 = vpack.c.b16 %v1412, %v1406
    %v2265 = vpack.c.b16 %v1413, %v1407
    %v2266 = vpack.c.b16 %v1414, %v1408
    %v2267 = vpack.c.b16 %v1415, %v1409
    %v2268 = vpack.c.b16 %v1416, %v1410
    %v2269 = vpack.c.b16 %v1423, %v1417
    %v2270 = vpack.c.b16 %v1424, %v1418
    %v2271 = vpack.c.b16 %v1425, %v1419
    %v2272 = vpack.c.b16 %v1426, %v1420
    %v2273 = vpack.c.b16 %v1427, %v1421
    %v2274 = vpack.c.b16 %v1428, %v1422
    %v2275 = vpack.c.b16 %v1435, %v1429
    %v2276 = vpack.c.b16 %v1436, %v1430
    %v2277 = vpack.c.b16 %v1437, %v1431
    %v2278 = vpack.c.b16 %v1438, %v1432
    %v2279 = vpack.c.b16 %v1439, %v1433
    %v2280 = vpack.c.b16 %v1440, %v1434
    %v2281 = vpack.c.b16 %v1447, %v1441
    %v2282 = vpack.c.b16 %v1448, %v1442
    %v2283 = vpack.c.b16 %v1449, %v1443
    %v2284 = vpack.c.b16 %v1450, %v1444
    %v2285 = vpack.c.b16 %v1451, %v1445
    %v2286 = vpack.c.b16 %v1452, %v1446
    %v2287 = vpack.c.b16 %v1459, %v1453
    %v2288 = vpack.c.b16 %v1460, %v1454
    %v2289 = vpack.c.b16 %v1461, %v1455
    %v2290 = vpack.c.b16 %v1462, %v1456
    %v2291 = vpack.c.b16 %v1463, %v1457
    %v2292 = vpack.c.b16 %v1464, %v1458
    %v2293 = vpack.c.b16 %v1471, %v1465
    %v2294 = vpack.c.b16 %v1472, %v1466
    %v2295 = vpack.c.b16 %v1473, %v1467
    %v2296 = vpack.c.b16 %v1474, %v1468
    %v2297 = vpack.c.b16 %v1475, %v1469
    %v2298 = vpack.c.b16 %v1476, %v1470
    %v2299 = vpack.c.b16 %v1483, %v1477
    %v2300 = vpack.c.b16 %v1484, %v1478
    %v2301 = vpack.c.b16 %v1485, %v1479
    %v2302 = vpack.c.b16 %v1486, %v1480
    %v2303 = vpack.c.b16 %v1487, %v1481
    %v2304 = vpack.c.b16 %v1488, %v1482
    %v2305 = vpack.c.b16 %v1495, %v1489
    %v2306 = vpack.c.b16 %v1496, %v1490
    %v2307 = vpack.c.b16 %v1497, %v1491
    %v2308 = vpack.c.b16 %v1498, %v1492
    %v2309 = vpack.c.b16 %v1499, %v1493
    %v2310 = vpack.c.b16 %v1500, %v1494
    %v2311 = vpack.c.b16 %v1507, %v1501
    %v2312 = vpack.c.b16 %v1508, %v1502
    %v2313 = vpack.c.b16 %v1509, %v1503
    %v2314 = vpack.c.b16 %v1510, %v1504
    %v2315 = vpack.c.b16 %v1511, %v1505
    %v2316 = vpack.c.b16 %v1512, %v1506
    %v2317 = vpack.c.b16 %v1519, %v1513
    %v2318 = vpack.c.b16 %v1520, %v1514
    %v2319 = vpack.c.b16 %v1521, %v1515
    %v2320 = vpack.c.b16 %v1522, %v1516
    %v2321 = vpack.c.b16 %v1523, %v1517
    %v2322 = vpack.c.b16 %v1524, %v1518
    %v2323 = vpack.c.b16 %v1531, %v1525
    %v2324 = vpack.c.b16 %v1532, %v1526
    %v2325 = vpack.c.b16 %v1533, %v1527
    %v2326 = vpack.c.b16 %v1534, %v1528
    %v2327 = vpack.c.b16 %v1535, %v1529
    %v2328 = vpack.c.b16 %v1536, %v1530
    %v2329 = vpack.c.b16 %v1543, %v1537
    %v2330 = vpack.c.b16 %v1544, %v1538
    %v2331 = vpack.c.b16 %v1545, %v1539
    %v2332 = vpack.c.b16 %v1546, %v1540
    %v2333 = vpack.c.b16 %v1547, %v1541
    %v2334 = vpack.c.b16 %v1548, %v1542
    %v2335 = vpack.c.b16 %v1555, %v1549
    %v2336 = vpack.c.b16 %v1556, %v1550
    %v2337 = vpack.c.b16 %v1557, %v1551
    %v2338 = vpack.c.b16 %v1558, %v1552
    %v2339 = vpack.c.b16 %v1559, %v1553
    %v2340 = vpack.c.b16 %v1560, %v1554
    %v2341 = vpack.c.b16 %v1567, %v1561
    %v2342 = vpack.c.b16 %v1568, %v1562
    %v2343 = vpack.c.b16 %v1569, %v1563
    %v2344 = vpack.c.b16 %v1570, %v1564
    %v2345 = vpack.c.b16 %v1571, %v1565
    %v2346 = vpack.c.b16 %v1572, %v1566
    %v2347 = vpack.c.b16 %v1579, %v1573
    %v2348 = vpack.c.b16 %v1580, %v1574
    %v2349 = vpack.c.b16 %v1581, %v1575
    %v2350 = vpack.c.b16 %v1582, %v1576
    %v2351 = vpack.c.b16 %v1583, %v1577
    %v2352 = vpack.c.b16 %v1584, %v1578
    %v2353 = vpack.c.b16 %v1591, %v1585
    %v2354 = vpack.c.b16 %v1592, %v1586
    %v2355 = vpack.c.b16 %v1593, %v1587
    %v2356 = vpack.c.b16 %v1594, %v1588
    %v2357 = vpack.c.b16 %v1595, %v1589
    %v2358 = vpack.c.b16 %v1596, %v1590
    %v2359 = vpack.c.b16 %v1603, %v1597
    %v2360 = vpack.c.b16 %v1604, %v1598
    %v2361 = vpack.c.b16 %v1605, %v1599
    %v2362 = vpack.c.b16 %v1606, %v1600
    %v2363 = vpack.c.b16 %v1607, %v1601
    %v2364 = vpack.c.b16 %v1608, %v1602
    %v2365 = vpack.c.b16 %v1615, %v1609
    %v2366 = vpack.c.b16 %v1616, %v1610
    %v2367 = vpack.c.b16 %v1617, %v1611
    %v2368 = vpack.c.b16 %v1618, %v1612
    %v2369 = vpack.c.b16 %v1619, %v1613
    %v2370 = vpack.c.b16 %v1620, %v1614
    %v2371 = vpack.c.b16 %v1627, %v1621
    %v2372 = vpack.c.b16 %v1628, %v1622
    %v2373 = vpack.c.b16 %v1629, %v1623
    %v2374 = vpack.c.b16 %v1630, %v1624
    %v2375 = vpack.c.b16 %v1631, %v1625
    %v2376 = vpack.c.b16 %v1632, %v1626
    %v2377 = vpack.c.b16 %v1639, %v1633
    %v2378 = vpack.c.b16 %v1640, %v1634
    %v2379 = vpack.c.b16 %v1641, %v1635
    %v2380 = vpack.c.b16 %v1642, %v1636
    %v2381 = vpack.c.b16 %v1643, %v1637
    %v2382 = vpack.c.b16 %v1644, %v1638
    %v2383 = vpack.c.b16 %v1651, %v1645
    %v2384 = vpack.c.b16 %v1652, %v1646
    %v2385 = vpack.c.b16 %v1653, %v1647
    %v2386 = vpack.c.b16 %v1654, %v1648
    %v2387 = vpack.c.b16 %v1655, %v1649
    %v2388 = vpack.c.b16 %v1656, %v1650
    %v2389 = vpack.c.b16 %v1663, %v1657
    %v2390 = vpack.c.b16 %v1664, %v1658
    %v2391 = vpack.c.b16 %v1665, %v1659
    %v2392 = vpack.c.b16 %v1666, %v1660
    %v2393 = vpack.c.b16 %v1667, %v1661
    %v2394 = vpack.c.b16 %v1668, %v1662
    %v2395 = vpack.c.b16 %v1675, %v1669
    %v2396 = vpack.c.b16 %v1676, %v1670
    %v2397 = vpack.c.b16 %v1677, %v1671
    %v2398 = vpack.c.b16 %v1678, %v1672
    %v2399 = vpack.c.b16 %v1679, %v1673
    %v2400 = vpack.c.b16 %v1680, %v1674
    %v2401 = vpack.c.b16 %v1687, %v1681
    %v2402 = vpack.c.b16 %v1688, %v1682
    %v2403 = vpack.c.b16 %v1689, %v1683
    %v2404 = vpack.c.b16 %v1690, %v1684
    %v2405 = vpack.c.b16 %v1691, %v1685
    %v2406 = vpack.c.b16 %v1692, %v1686
    %v2407 = vpack.c.b16 %v1699, %v1693
    %v2408 = vpack.c.b16 %v1700, %v1694
    %v2409 = vpack.c.b16 %v1701, %v1695
    %v2410 = vpack.c.b16 %v1702, %v1696
    %v2411 = vpack.c.b16 %v1703, %v1697
    %v2412 = vpack.c.b16 %v1704, %v1698
    %v2413 = vpack.c.b16 %v1711, %v1705
    %v2414 = vpack.c.b16 %v1712, %v1706
    %v2415 = vpack.c.b16 %v1713, %v1707
    %v2416 = vpack.c.b16 %v1714, %v1708
    %v2417 = vpack.c.b16 %v1715, %v1709
    %v2418 = vpack.c.b16 %v1716, %v1710
    %v2419 = vpack.c.b16 %v1723, %v1717
    %v2420 = vpack.c.b16 %v1724, %v1718
    %v2421 = vpack.c.b16 %v1725, %v1719
    %v2422 = vpack.c.b16 %v1726, %v1720
    %v2423 = vpack.c.b16 %v1727, %v1721
    %v2424 = vpack.c.b16 %v1728, %v1722
    %v2425 = vpack.c.b16 %v1735, %v1729
    %v2426 = vpack.c.b16 %v1736, %v1730
    %v2427 = vpack.c.b16 %v1737, %v1731
    %v2428 = vpack.c.b16 %v1738, %v1732
    %v2429 = vpack.c.b16 %v1739, %v1733
    %v2430 = vpack.c.b16 %v1740, %v1734
    %v2431 = vpack.c.b16 %v1747, %v1741
    %v2432 = vpack.c.b16 %v1748, %v1742
    %v2433 = vpack.c.b16 %v1749, %v1743
    %v2434 = vpack.c.b16 %v1750, %v1744
    %v2435 = vpack.c.b16 %v1751, %v1745
    %v2436 = vpack.c.b16 %v1752, %v1746
    %v2437 = vpack.c.b16 %v1759, %v1753
    %v2438 = vpack.c.b16 %v1760, %v1754
    %v2439 = vpack.c.b16 %v1761, %v1755
    %v2440 = vpack.c.b16 %v1762, %v1756
    %v2441 = vpack.c.b16 %v1763, %v1757
    %v2442 = vpack.c.b16 %v1764, %v1758
    %v2443 = vpack.c.b16 %v1771, %v1765
    %v2444 = vpack.c.b16 %v1772, %v1766
    %v2445 = vpack.c.b16 %v1773, %v1767
    %v2446 = vpack.c.b16 %v1774, %v1768
    %v2447 = vpack.c.b16 %v1775, %v1769
    %v2448 = vpack.c.b16 %v1776, %v1770
    %v2449 = vpack.c.b16 %v1783, %v1777
    %v2450 = vpack.c.b16 %v1784, %v1778
    %v2451 = vpack.c.b16 %v1785, %v1779
    %v2452 = vpack.c.b16 %v1786, %v1780
    %v2453 = vpack.c.b16 %v1787, %v1781
    %v2454 = vpack.c.b16 %v1788, %v1782
    %v2455 = vpack.c.b16 %v1795, %v1789
    %v2456 = vpack.c.b16 %v1796, %v1790
    %v2457 = vpack.c.b16 %v1797, %v1791
    %v2458 = vpack.c.b16 %v1798, %v1792
    %v2459 = vpack.c.b16 %v1799, %v1793
    %v2460 = vpack.c.b16 %v1800, %v1794
    %v2461 = vpack.c.b16 %v1807, %v1801
    %v2462 = vpack.c.b16 %v1808, %v1802
    %v2463 = vpack.c.b16 %v1809, %v1803
    %v2464 = vpack.c.b16 %v1810, %v1804
    %v2465 = vpack.c.b16 %v1811, %v1805
    %v2466 = vpack.c.b16 %v1812, %v1806
    %v2467 = vpack.c.b16 %v1819, %v1813
    %v2468 = vpack.c.b16 %v1820, %v1814
    %v2469 = vpack.c.b16 %v1821, %v1815
    %v2470 = vpack.c.b16 %v1822, %v1816
    %v2471 = vpack.c.b16 %v1823, %v1817
    %v2472 = vpack.c.b16 %v1824, %v1818
    %v2473 = vpack.c.b16 %v1831, %v1825
    %v2474 = vpack.c.b16 %v1832, %v1826
    %v2475 = vpack.c.b16 %v1833, %v1827
    %v2476 = vpack.c.b16 %v1834, %v1828
    %v2477 = vpack.c.b16 %v1835, %v1829
    %v2478 = vpack.c.b16 %v1836, %v1830
    %v2479 = vpack.c.b16 %v1843, %v1837
    %v2480 = vpack.c.b16 %v1844, %v1838
    %v2481 = vpack.c.b16 %v1845, %v1839
    %v2482 = vpack.c.b16 %v1846, %v1840
    %v2483 = vpack.c.b16 %v1847, %v1841
    %v2484 = vpack.c.b16 %v1848, %v1842
    %v2485 = vpack.c.b16 %v1855, %v1849
    %v2486 = vpack.c.b16 %v1856, %v1850
    %v2487 = vpack.c.b16 %v1857, %v1851
    %v2488 = vpack.c.b16 %v1858, %v1852
    %v2489 = vpack.c.b16 %v1859, %v1853
    %v2490 = vpack.c.b16 %v1860, %v1854
    %v2491 = vpack.c.b16 %v1867, %v1861
    %v2492 = vpack.c.b16 %v1868, %v1862
    %v2493 = vpack.c.b16 %v1869, %v1863
    %v2494 = vpack.c.b16 %v1870, %v1864
    %v2495 = vpack.c.b16 %v1871, %v1865
    %v2496 = vpack.c.b16 %v1872, %v1866
    %v2497 = vpack.c.b16 %v1879, %v1873
    %v2498 = vpack.c.b16 %v1880, %v1874
    %v2499 = vpack.c.b16 %v1881, %v1875
    %v2500 = vpack.c.b16 %v1882, %v1876
    %v2501 = vpack.c.b16 %v1883, %v1877
    %v2502 = vpack.c.b16 %v1884, %v1878
    %v2503 = vpack.c.b16 %v1891, %v1885
    %v2504 = vpack.c.b16 %v1892, %v1886
    %v2505 = vpack.c.b16 %v1893, %v1887
    %v2506 = vpack.c.b16 %v1894, %v1888
    %v2507 = vpack.c.b16 %v1895, %v1889
    %v2508 = vpack.c.b16 %v1896, %v1890
    %v2509 = vpack.c.b16 %v1903, %v1897
    %v2510 = vpack.c.b16 %v1904, %v1898
    %v2511 = vpack.c.b16 %v1905, %v1899
    %v2512 = vpack.c.b16 %v1906, %v1900
    %v2513 = vpack.c.b16 %v1907, %v1901
    %v2514 = vpack.c.b16 %v1908, %v1902
    %v2515 = vpack.c.b16 %v1915, %v1909
    %v2516 = vpack.c.b16 %v1916, %v1910
    %v2517 = vpack.c.b16 %v1917, %v1911
    %v2518 = vpack.c.b16 %v1918, %v1912
    %v2519 = vpack.c.b16 %v1919, %v1913
    %v2520 = vpack.c.b16 %v1920, %v1914
    %v2521 = vpack.c.b16 %v1927, %v1921
    %v2522 = vpack.c.b16 %v1928, %v1922
    %v2523 = vpack.c.b16 %v1929, %v1923
    %v2524 = vpack.c.b16 %v1930, %v1924
    %v2525 = vpack.c.b16 %v1931, %v1925
    %v2526 = vpack.c.b16 %v1932, %v1926
    %v2527 = vpack.c.b16 %v1939, %v1933
    %v2528 = vpack.c.b16 %v1940, %v1934
    %v2529 = vpack.c.b16 %v1941, %v1935
    %v2530 = vpack.c.b16 %v1942, %v1936
    %v2531 = vpack.c.b16 %v1943, %v1937
    %v2532 = vpack.c.b16 %v1944, %v1938
    %v2533 = vpack.c.b16 %v1951, %v1945
    %v2534 = vpack.c.b16 %v1952, %v1946
    %v2535 = vpack.c.b16 %v1953, %v1947
    %v2536 = vpack.c.b16 %v1954, %v1948
    %v2537 = vpack.c.b16 %v1955, %v1949
    %v2538 = vpack.c.b16 %v1956, %v1950
    %v2539 = vpack.c.b16 %v1963, %v1957
    %v2540 = vpack.c.b16 %v1964, %v1958
    %v2541 = vpack.c.b16 %v1965, %v1959
    %v2542 = vpack.c.b16 %v1966, %v1960
    %v2543 = vpack.c.b16 %v1967, %v1961
    %v2544 = vpack.c.b16 %v1968, %v1962
    %v2545 = vpack.c.b16 %v1975, %v1969
    %v2546 = vpack.c.b16 %v1976, %v1970
    %v2547 = vpack.c.b16 %v1977, %v1971
    %v2548 = vpack.c.b16 %v1978, %v1972
    %v2549 = vpack.c.b16 %v1979, %v1973
    %v2550 = vpack.c.b16 %v1980, %v1974
    %v2551 = vpack.c.b16 %v1987, %v1981
    %v2552 = vpack.c.b16 %v1988, %v1982
    %v2553 = vpack.c.b16 %v1989, %v1983
    %v2554 = vpack.c.b16 %v1990, %v1984
    %v2555 = vpack.c.b16 %v1991, %v1985
    %v2556 = vpack.c.b16 %v1992, %v1986
    %v2557 = vpack.c.b16 %v1999, %v1993
    %v2558 = vpack.c.b16 %v2000, %v1994
    %v2559 = vpack.c.b16 %v2001, %v1995
    %v2560 = vpack.c.b16 %v2002, %v1996
    %v2561 = vpack.c.b16 %v2003, %v1997
    %v2562 = vpack.c.b16 %v2004, %v1998
    %v2563 = vpack.c.b16 %v2011, %v2005
    %v2564 = vpack.c.b16 %v2012, %v2006
    %v2565 = vpack.c.b16 %v2013, %v2007
    %v2566 = vpack.c.b16 %v2014, %v2008
    %v2567 = vpack.c.b16 %v2015, %v2009
    %v2568 = vpack.c.b16 %v2016, %v2010
    %v2569 = vpack.c.b16 %v2023, %v2017
    %v2570 = vpack.c.b16 %v2024, %v2018
    %v2571 = vpack.c.b16 %v2025, %v2019
    %v2572 = vpack.c.b16 %v2026, %v2020
    %v2573 = vpack.c.b16 %v2027, %v2021
    %v2574 = vpack.c.b16 %v2028, %v2022
    %v2575 = vpack.c.b16 %v2035, %v2029
    %v2576 = vpack.c.b16 %v2036, %v2030
    %v2577 = vpack.c.b16 %v2037, %v2031
    %v2578 = vpack.c.b16 %v2038, %v2032
    %v2579 = vpack.c.b16 %v2039, %v2033
    %v2580 = vpack.c.b16 %v2040, %v2034
    %v2581 = vpack.c.b16 %v2047, %v2041
    %v2582 = vpack.c.b16 %v2048, %v2042
    %v2583 = vpack.c.b16 %v2049, %v2043
    %v2584 = vpack.c.b16 %v2050, %v2044
    %v2585 = vpack.c.b16 %v2051, %v2045
    %v2586 = vpack.c.b16 %v2052, %v2046
    %v2587 = vpack.c.b16 %v2059, %v2053
    %v2588 = vpack.c.b16 %v2060, %v2054
    %v2589 = vpack.c.b16 %v2061, %v2055
    %v2590 = vpack.c.b16 %v2062, %v2056
    %v2591 = vpack.c.b16 %v2063, %v2057
    %v2592 = vpack.c.b16 %v2064, %v2058
    %v2593 = vpack.c.b16 %v2071, %v2065
    %v2594 = vpack.c.b16 %v2072, %v2066
    %v2595 = vpack.c.b16 %v2073, %v2067
    %v2596 = vpack.c.b16 %v2074, %v2068
    %v2597 = vpack.c.b16 %v2075, %v2069
    %v2598 = vpack.c.b16 %v2076, %v2070
    %v2599 = vpack.c.b16 %v2083, %v2077
    %v2600 = vpack.c.b16 %v2084, %v2078
    %v2601 = vpack.c.b16 %v2085, %v2079
    %v2602 = vpack.c.b16 %v2086, %v2080
    %v2603 = vpack.c.b16 %v2087, %v2081
    %v2604 = vpack.c.b16 %v2088, %v2082
    %v2605 = vpack.c.b16 %v2095, %v2089
    %v2606 = vpack.c.b16 %v2096, %v2090
    %v2607 = vpack.c.b16 %v2097, %v2091
    %v2608 = vpack.c.b16 %v2098, %v2092
    %v2609 = vpack.c.b16 %v2099, %v2093
    %v2610 = vpack.c.b16 %v2100, %v2094
    %v2611 = vpack.c.b16 %v2107, %v2101
    %v2612 = vpack.c.b16 %v2108, %v2102
    %v2613 = vpack.c.b16 %v2109, %v2103
    %v2614 = vpack.c.b16 %v2110, %v2104
    %v2615 = vpack.c.b16 %v2111, %v2105
    %v2616 = vpack.c.b16 %v2112, %v2106
    %v2617 = vpack.c.b16 %v2119, %v2113
    %v2618 = vpack.c.b16 %v2120, %v2114
    %v2619 = vpack.c.b16 %v2121, %v2115
    %v2620 = vpack.c.b16 %v2122, %v2116
    %v2621 = vpack.c.b16 %v2123, %v2117
    %v2622 = vpack.c.b16 %v2124, %v2118
    %v2623 = vpack.c.b16 %v2131, %v2125
    %v2624 = vpack.c.b16 %v2132, %v2126
    %v2625 = vpack.c.b16 %v2133, %v2127
    %v2626 = vpack.c.b16 %v2134, %v2128
    %v2627 = vpack.c.b16 %v2135, %v2129
    %v2628 = vpack.c.b16 %v2136, %v2130
    %v2629 = vpack.c.b16 %v2143, %v2137
    %v2630 = vpack.c.b16 %v2144, %v2138
    %v2631 = vpack.c.b16 %v2145, %v2139
    %v2632 = vpack.c.b16 %v2146, %v2140
    %v2633 = vpack.c.b16 %v2147, %v2141
    %v2634 = vpack.c.b16 %v2148, %v2142
    %v2635 = vpack.c.b16 %v2155, %v2149
    %v2636 = vpack.c.b16 %v2156, %v2150
    %v2637 = vpack.c.b16 %v2157, %v2151
    %v2638 = vpack.c.b16 %v2158, %v2152
    %v2639 = vpack.c.b16 %v2159, %v2153
    %v2640 = vpack.c.b16 %v2160, %v2154
    %3121 = vmatpush.bf16.msra.mxu0 %v2203
    %3122 = vmatpush.bf16.msra.mxu0 %v2197
    %3123 = vmatpush.bf16.msra.mxu0 %v2191
    %3124 = vmatpush.bf16.msra.mxu0 %v2185
    %3125 = vmatpush.bf16.msra.mxu0 %v2179
    %3126 = vmatpush.bf16.msra.mxu0 %v2173
    %3127 = vmatpush.bf16.msra.mxu0 %v2167
    %3128 = vmatpush.bf16.msra.mxu0 %v2161
    %3129 = vmatmul.bf16.gmra.mxu0 %v701
    %v3130 = vpop.f32.mrf.mxu0
    %v3131 = vadd.f32 %v659, %v3130
    %v3132 = vpop.f32.mrf.mxu0
    %v3133 = vadd.f32 %v659, %v3132
    %3134 = vdwg.mxu0
    %3135 = vmatpush.bf16.msra.mxu0 %v2251
    %3136 = vmatpush.bf16.msra.mxu0 %v2245
    %3137 = vmatpush.bf16.msra.mxu0 %v2239
    %3138 = vmatpush.bf16.msra.mxu0 %v2233
    %3139 = vmatpush.bf16.msra.mxu0 %v2227
    %3140 = vmatpush.bf16.msra.mxu0 %v2221
    %3141 = vmatpush.bf16.msra.mxu0 %v2215
    %3142 = vmatpush.bf16.msra.mxu0 %v2209
    %3143 = vmatmul.bf16.gmra.mxu0 %v702
    %v3144 = vpop.f32.mrf.mxu0
    %v3145 = vadd.f32 %v3131, %v3144
    %v3146 = vpop.f32.mrf.mxu0
    %v3147 = vadd.f32 %v3133, %v3146
    %3148 = vdwg.mxu0
    %3149 = vmatpush.bf16.msra.mxu0 %v2299
    %3150 = vmatpush.bf16.msra.mxu0 %v2293
    %3151 = vmatpush.bf16.msra.mxu0 %v2287
    %3152 = vmatpush.bf16.msra.mxu0 %v2281
    %3153 = vmatpush.bf16.msra.mxu0 %v2275
    %3154 = vmatpush.bf16.msra.mxu0 %v2269
    %3155 = vmatpush.bf16.msra.mxu0 %v2263
    %3156 = vmatpush.bf16.msra.mxu0 %v2257
    %3157 = vmatmul.bf16.gmra.mxu0 %v703
    %v3158 = vpop.f32.mrf.mxu0
    %v3159 = vadd.f32 %v3145, %v3158
    %v3160 = vpop.f32.mrf.mxu0
    %v3161 = vadd.f32 %v3147, %v3160
    %3162 = vdwg.mxu0
    %3163 = vmatpush.bf16.msra.mxu0 %v2347
    %3164 = vmatpush.bf16.msra.mxu0 %v2341
    %3165 = vmatpush.bf16.msra.mxu0 %v2335
    %3166 = vmatpush.bf16.msra.mxu0 %v2329
    %3167 = vmatpush.bf16.msra.mxu0 %v2323
    %3168 = vmatpush.bf16.msra.mxu0 %v2317
    %3169 = vmatpush.bf16.msra.mxu0 %v2311
    %3170 = vmatpush.bf16.msra.mxu0 %v2305
    %3171 = vmatmul.bf16.gmra.mxu0 %v704
    %v3172 = vpop.f32.mrf.mxu0
    %v3173 = vadd.f32 %v3159, %v3172
    %v3174 = vpop.f32.mrf.mxu0
    %v3175 = vadd.f32 %v3161, %v3174
    %3176 = vdwg.mxu0
    %3177 = vmatpush.bf16.msra.mxu0 %v2395
    %3178 = vmatpush.bf16.msra.mxu0 %v2389
    %3179 = vmatpush.bf16.msra.mxu0 %v2383
    %3180 = vmatpush.bf16.msra.mxu0 %v2377
    %3181 = vmatpush.bf16.msra.mxu0 %v2371
    %3182 = vmatpush.bf16.msra.mxu0 %v2365
    %3183 = vmatpush.bf16.msra.mxu0 %v2359
    %3184 = vmatpush.bf16.msra.mxu0 %v2353
    %3185 = vmatmul.bf16.gmra.mxu0 %v705
    %v3186 = vpop.f32.mrf.mxu0
    %v3187 = vadd.f32 %v3173, %v3186
    %v3188 = vpop.f32.mrf.mxu0
    %v3189 = vadd.f32 %v3175, %v3188
    %3190 = vdwg.mxu0
    %3191 = vmatpush.bf16.msra.mxu0 %v2443
    %3192 = vmatpush.bf16.msra.mxu0 %v2437
    %3193 = vmatpush.bf16.msra.mxu0 %v2431
    %3194 = vmatpush.bf16.msra.mxu0 %v2425
    %3195 = vmatpush.bf16.msra.mxu0 %v2419
    %3196 = vmatpush.bf16.msra.mxu0 %v2413
    %3197 = vmatpush.bf16.msra.mxu0 %v2407
    %3198 = vmatpush.bf16.msra.mxu0 %v2401
    %3199 = vmatmul.bf16.gmra.mxu0 %v706
    %v3200 = vpop.f32.mrf.mxu0
    %v3201 = vadd.f32 %v3187, %v3200
    %v3202 = vpop.f32.mrf.mxu0
    %v3203 = vadd.f32 %v3189, %v3202
    %3204 = vdwg.mxu0
    %3205 = vmatpush.bf16.msra.mxu0 %v2491
    %3206 = vmatpush.bf16.msra.mxu0 %v2485
    %3207 = vmatpush.bf16.msra.mxu0 %v2479
    %3208 = vmatpush.bf16.msra.mxu0 %v2473
    %3209 = vmatpush.bf16.msra.mxu0 %v2467
    %3210 = vmatpush.bf16.msra.mxu0 %v2461
    %3211 = vmatpush.bf16.msra.mxu0 %v2455
    %3212 = vmatpush.bf16.msra.mxu0 %v2449
    %3213 = vmatmul.bf16.gmra.mxu0 %v707
    %v3214 = vpop.f32.mrf.mxu0
    %v3215 = vadd.f32 %v3201, %v3214
    %v3216 = vpop.f32.mrf.mxu0
    %v3217 = vadd.f32 %v3203, %v3216
    %3218 = vdwg.mxu0
    %3219 = vmatpush.bf16.msra.mxu0 %v2539
    %3220 = vmatpush.bf16.msra.mxu0 %v2533
    %3221 = vmatpush.bf16.msra.mxu0 %v2527
    %3222 = vmatpush.bf16.msra.mxu0 %v2521
    %3223 = vmatpush.bf16.msra.mxu0 %v2515
    %3224 = vmatpush.bf16.msra.mxu0 %v2509
    %3225 = vmatpush.bf16.msra.mxu0 %v2503
    %3226 = vmatpush.bf16.msra.mxu0 %v2497
    %3227 = vmatmul.bf16.gmra.mxu0 %v708
    %v3228 = vpop.f32.mrf.mxu0
    %v3229 = vadd.f32 %v3215, %v3228
    %v3230 = vpop.f32.mrf.mxu0
    %v3231 = vadd.f32 %v3217, %v3230
    %3232 = vdwg.mxu0
    %3233 = vmatpush.bf16.msra.mxu0 %v2587
    %3234 = vmatpush.bf16.msra.mxu0 %v2581
    %3235 = vmatpush.bf16.msra.mxu0 %v2575
    %3236 = vmatpush.bf16.msra.mxu0 %v2569
    %3237 = vmatpush.bf16.msra.mxu0 %v2563
    %3238 = vmatpush.bf16.msra.mxu0 %v2557
    %3239 = vmatpush.bf16.msra.mxu0 %v2551
    %3240 = vmatpush.bf16.msra.mxu0 %v2545
    %3241 = vmatmul.bf16.gmra.mxu0 %v709
    %v3242 = vpop.f32.mrf.mxu0
    %v3243 = vadd.f32 %v3229, %v3242
    %v3244 = vpop.f32.mrf.mxu0
    %v3245 = vadd.f32 %v3231, %v3244
    %3246 = vdwg.mxu0
    %3247 = vmatpush.bf16.msra.mxu0 %v2635
    %3248 = vmatpush.bf16.msra.mxu0 %v2629
    %3249 = vmatpush.bf16.msra.mxu0 %v2623
    %3250 = vmatpush.bf16.msra.mxu0 %v2617
    %3251 = vmatpush.bf16.msra.mxu0 %v2611
    %3252 = vmatpush.bf16.msra.mxu0 %v2605
    %3253 = vmatpush.bf16.msra.mxu0 %v2599
    %3254 = vmatpush.bf16.msra.mxu0 %v2593
    %3255 = vmatmul.bf16.gmra.mxu0 %v710
    %v3256 = vpop.f32.mrf.mxu0
    %v3257 = vadd.f32 %v3243, %v3256
    %v3258 = vpop.f32.mrf.mxu0
    %v3259 = vadd.f32 %v3245, %v3258
    %3260 = vdwg.mxu0
    %3261 = vmatpush.bf16.msra.mxu0 %v2204
    %3262 = vmatpush.bf16.msra.mxu0 %v2198
    %3263 = vmatpush.bf16.msra.mxu0 %v2192
    %3264 = vmatpush.bf16.msra.mxu0 %v2186
    %3265 = vmatpush.bf16.msra.mxu0 %v2180
    %3266 = vmatpush.bf16.msra.mxu0 %v2174
    %3267 = vmatpush.bf16.msra.mxu0 %v2168
    %3268 = vmatpush.bf16.msra.mxu0 %v2162
    %3269 = vmatmul.bf16.gmra.mxu0 %v701
    %v3270 = vpop.f32.mrf.mxu0
    %v3271 = vadd.f32 %v660, %v3270
    %v3272 = vpop.f32.mrf.mxu0
    %v3273 = vadd.f32 %v660, %v3272
    %3274 = vdwg.mxu0
    %3275 = vmatpush.bf16.msra.mxu0 %v2252
    %3276 = vmatpush.bf16.msra.mxu0 %v2246
    %3277 = vmatpush.bf16.msra.mxu0 %v2240
    %3278 = vmatpush.bf16.msra.mxu0 %v2234
    %3279 = vmatpush.bf16.msra.mxu0 %v2228
    %3280 = vmatpush.bf16.msra.mxu0 %v2222
    %3281 = vmatpush.bf16.msra.mxu0 %v2216
    %3282 = vmatpush.bf16.msra.mxu0 %v2210
    %3283 = vmatmul.bf16.gmra.mxu0 %v702
    %v3284 = vpop.f32.mrf.mxu0
    %v3285 = vadd.f32 %v3271, %v3284
    %v3286 = vpop.f32.mrf.mxu0
    %v3287 = vadd.f32 %v3273, %v3286
    %3288 = vdwg.mxu0
    %3289 = vmatpush.bf16.msra.mxu0 %v2300
    %3290 = vmatpush.bf16.msra.mxu0 %v2294
    %3291 = vmatpush.bf16.msra.mxu0 %v2288
    %3292 = vmatpush.bf16.msra.mxu0 %v2282
    %3293 = vmatpush.bf16.msra.mxu0 %v2276
    %3294 = vmatpush.bf16.msra.mxu0 %v2270
    %3295 = vmatpush.bf16.msra.mxu0 %v2264
    %3296 = vmatpush.bf16.msra.mxu0 %v2258
    %3297 = vmatmul.bf16.gmra.mxu0 %v703
    %v3298 = vpop.f32.mrf.mxu0
    %v3299 = vadd.f32 %v3285, %v3298
    %v3300 = vpop.f32.mrf.mxu0
    %v3301 = vadd.f32 %v3287, %v3300
    %3302 = vdwg.mxu0
    %3303 = vmatpush.bf16.msra.mxu0 %v2348
    %3304 = vmatpush.bf16.msra.mxu0 %v2342
    %3305 = vmatpush.bf16.msra.mxu0 %v2336
    %3306 = vmatpush.bf16.msra.mxu0 %v2330
    %3307 = vmatpush.bf16.msra.mxu0 %v2324
    %3308 = vmatpush.bf16.msra.mxu0 %v2318
    %3309 = vmatpush.bf16.msra.mxu0 %v2312
    %3310 = vmatpush.bf16.msra.mxu0 %v2306
    %3311 = vmatmul.bf16.gmra.mxu0 %v704
    %v3312 = vpop.f32.mrf.mxu0
    %v3313 = vadd.f32 %v3299, %v3312
    %v3314 = vpop.f32.mrf.mxu0
    %v3315 = vadd.f32 %v3301, %v3314
    %3316 = vdwg.mxu0
    %3317 = vmatpush.bf16.msra.mxu0 %v2396
    %3318 = vmatpush.bf16.msra.mxu0 %v2390
    %3319 = vmatpush.bf16.msra.mxu0 %v2384
    %3320 = vmatpush.bf16.msra.mxu0 %v2378
    %3321 = vmatpush.bf16.msra.mxu0 %v2372
    %3322 = vmatpush.bf16.msra.mxu0 %v2366
    %3323 = vmatpush.bf16.msra.mxu0 %v2360
    %3324 = vmatpush.bf16.msra.mxu0 %v2354
    %3325 = vmatmul.bf16.gmra.mxu0 %v705
    %v3326 = vpop.f32.mrf.mxu0
    %v3327 = vadd.f32 %v3313, %v3326
    %v3328 = vpop.f32.mrf.mxu0
    %v3329 = vadd.f32 %v3315, %v3328
    %3330 = vdwg.mxu0
    %3331 = vmatpush.bf16.msra.mxu0 %v2444
    %3332 = vmatpush.bf16.msra.mxu0 %v2438
    %3333 = vmatpush.bf16.msra.mxu0 %v2432
    %3334 = vmatpush.bf16.msra.mxu0 %v2426
    %3335 = vmatpush.bf16.msra.mxu0 %v2420
    %3336 = vmatpush.bf16.msra.mxu0 %v2414
    %3337 = vmatpush.bf16.msra.mxu0 %v2408
    %3338 = vmatpush.bf16.msra.mxu0 %v2402
    %3339 = vmatmul.bf16.gmra.mxu0 %v706
    %v3340 = vpop.f32.mrf.mxu0
    %v3341 = vadd.f32 %v3327, %v3340
    %v3342 = vpop.f32.mrf.mxu0
    %v3343 = vadd.f32 %v3329, %v3342
    %3344 = vdwg.mxu0
    %3345 = vmatpush.bf16.msra.mxu0 %v2492
    %3346 = vmatpush.bf16.msra.mxu0 %v2486
    %3347 = vmatpush.bf16.msra.mxu0 %v2480
    %3348 = vmatpush.bf16.msra.mxu0 %v2474
    %3349 = vmatpush.bf16.msra.mxu0 %v2468
    %3350 = vmatpush.bf16.msra.mxu0 %v2462
    %3351 = vmatpush.bf16.msra.mxu0 %v2456
    %3352 = vmatpush.bf16.msra.mxu0 %v2450
    %3353 = vmatmul.bf16.gmra.mxu0 %v707
    %v3354 = vpop.f32.mrf.mxu0
    %v3355 = vadd.f32 %v3341, %v3354
    %v3356 = vpop.f32.mrf.mxu0
    %v3357 = vadd.f32 %v3343, %v3356
    %3358 = vdwg.mxu0
    %3359 = vmatpush.bf16.msra.mxu0 %v2540
    %3360 = vmatpush.bf16.msra.mxu0 %v2534
    %3361 = vmatpush.bf16.msra.mxu0 %v2528
    %3362 = vmatpush.bf16.msra.mxu0 %v2522
    %3363 = vmatpush.bf16.msra.mxu0 %v2516
    %3364 = vmatpush.bf16.msra.mxu0 %v2510
    %3365 = vmatpush.bf16.msra.mxu0 %v2504
    %3366 = vmatpush.bf16.msra.mxu0 %v2498
    %3367 = vmatmul.bf16.gmra.mxu0 %v708
    %v3368 = vpop.f32.mrf.mxu0
    %v3369 = vadd.f32 %v3355, %v3368
    %v3370 = vpop.f32.mrf.mxu0
    %v3371 = vadd.f32 %v3357, %v3370
    %3372 = vdwg.mxu0
    %3373 = vmatpush.bf16.msra.mxu0 %v2588
    %3374 = vmatpush.bf16.msra.mxu0 %v2582
    %3375 = vmatpush.bf16.msra.mxu0 %v2576
    %3376 = vmatpush.bf16.msra.mxu0 %v2570
    %3377 = vmatpush.bf16.msra.mxu0 %v2564
    %3378 = vmatpush.bf16.msra.mxu0 %v2558
    %3379 = vmatpush.bf16.msra.mxu0 %v2552
    %3380 = vmatpush.bf16.msra.mxu0 %v2546
    %3381 = vmatmul.bf16.gmra.mxu0 %v709
    %v3382 = vpop.f32.mrf.mxu0
    %v3383 = vadd.f32 %v3369, %v3382
    %v3384 = vpop.f32.mrf.mxu0
    %v3385 = vadd.f32 %v3371, %v3384
    %3386 = vdwg.mxu0
    %3387 = vmatpush.bf16.msra.mxu0 %v2636
    %3388 = vmatpush.bf16.msra.mxu0 %v2630
    %3389 = vmatpush.bf16.msra.mxu0 %v2624
    %3390 = vmatpush.bf16.msra.mxu0 %v2618
    %3391 = vmatpush.bf16.msra.mxu0 %v2612
    %3392 = vmatpush.bf16.msra.mxu0 %v2606
    %3393 = vmatpush.bf16.msra.mxu0 %v2600
    %3394 = vmatpush.bf16.msra.mxu0 %v2594
    %3395 = vmatmul.bf16.gmra.mxu0 %v710
    %v3396 = vpop.f32.mrf.mxu0
    %v3397 = vadd.f32 %v3383, %v3396
    %v3398 = vpop.f32.mrf.mxu0
    %v3399 = vadd.f32 %v3385, %v3398
    %3400 = vdwg.mxu0
    %3401 = vmatpush.bf16.msra.mxu0 %v2205
    %3402 = vmatpush.bf16.msra.mxu0 %v2199
    %3403 = vmatpush.bf16.msra.mxu0 %v2193
    %3404 = vmatpush.bf16.msra.mxu0 %v2187
    %3405 = vmatpush.bf16.msra.mxu0 %v2181
    %3406 = vmatpush.bf16.msra.mxu0 %v2175
    %3407 = vmatpush.bf16.msra.mxu0 %v2169
    %3408 = vmatpush.bf16.msra.mxu0 %v2163
    %3409 = vmatmul.bf16.gmra.mxu0 %v701
    %v3410 = vpop.f32.mrf.mxu0
    %v3411 = vadd.f32 %v661, %v3410
    %v3412 = vpop.f32.mrf.mxu0
    %v3413 = vadd.f32 %v661, %v3412
    %3414 = vdwg.mxu0
    %3415 = vmatpush.bf16.msra.mxu0 %v2253
    %3416 = vmatpush.bf16.msra.mxu0 %v2247
    %3417 = vmatpush.bf16.msra.mxu0 %v2241
    %3418 = vmatpush.bf16.msra.mxu0 %v2235
    %3419 = vmatpush.bf16.msra.mxu0 %v2229
    %3420 = vmatpush.bf16.msra.mxu0 %v2223
    %3421 = vmatpush.bf16.msra.mxu0 %v2217
    %3422 = vmatpush.bf16.msra.mxu0 %v2211
    %3423 = vmatmul.bf16.gmra.mxu0 %v702
    %v3424 = vpop.f32.mrf.mxu0
    %v3425 = vadd.f32 %v3411, %v3424
    %v3426 = vpop.f32.mrf.mxu0
    %v3427 = vadd.f32 %v3413, %v3426
    %3428 = vdwg.mxu0
    %3429 = vmatpush.bf16.msra.mxu0 %v2301
    %3430 = vmatpush.bf16.msra.mxu0 %v2295
    %3431 = vmatpush.bf16.msra.mxu0 %v2289
    %3432 = vmatpush.bf16.msra.mxu0 %v2283
    %3433 = vmatpush.bf16.msra.mxu0 %v2277
    %3434 = vmatpush.bf16.msra.mxu0 %v2271
    %3435 = vmatpush.bf16.msra.mxu0 %v2265
    %3436 = vmatpush.bf16.msra.mxu0 %v2259
    %3437 = vmatmul.bf16.gmra.mxu0 %v703
    %v3438 = vpop.f32.mrf.mxu0
    %v3439 = vadd.f32 %v3425, %v3438
    %v3440 = vpop.f32.mrf.mxu0
    %v3441 = vadd.f32 %v3427, %v3440
    %3442 = vdwg.mxu0
    %3443 = vmatpush.bf16.msra.mxu0 %v2349
    %3444 = vmatpush.bf16.msra.mxu0 %v2343
    %3445 = vmatpush.bf16.msra.mxu0 %v2337
    %3446 = vmatpush.bf16.msra.mxu0 %v2331
    %3447 = vmatpush.bf16.msra.mxu0 %v2325
    %3448 = vmatpush.bf16.msra.mxu0 %v2319
    %3449 = vmatpush.bf16.msra.mxu0 %v2313
    %3450 = vmatpush.bf16.msra.mxu0 %v2307
    %3451 = vmatmul.bf16.gmra.mxu0 %v704
    %v3452 = vpop.f32.mrf.mxu0
    %v3453 = vadd.f32 %v3439, %v3452
    %v3454 = vpop.f32.mrf.mxu0
    %v3455 = vadd.f32 %v3441, %v3454
    %3456 = vdwg.mxu0
    %3457 = vmatpush.bf16.msra.mxu0 %v2397
    %3458 = vmatpush.bf16.msra.mxu0 %v2391
    %3459 = vmatpush.bf16.msra.mxu0 %v2385
    %3460 = vmatpush.bf16.msra.mxu0 %v2379
    %3461 = vmatpush.bf16.msra.mxu0 %v2373
    %3462 = vmatpush.bf16.msra.mxu0 %v2367
    %3463 = vmatpush.bf16.msra.mxu0 %v2361
    %3464 = vmatpush.bf16.msra.mxu0 %v2355
    %3465 = vmatmul.bf16.gmra.mxu0 %v705
    %v3466 = vpop.f32.mrf.mxu0
    %v3467 = vadd.f32 %v3453, %v3466
    %v3468 = vpop.f32.mrf.mxu0
    %v3469 = vadd.f32 %v3455, %v3468
    %3470 = vdwg.mxu0
    %3471 = vmatpush.bf16.msra.mxu0 %v2445
    %3472 = vmatpush.bf16.msra.mxu0 %v2439
    %3473 = vmatpush.bf16.msra.mxu0 %v2433
    %3474 = vmatpush.bf16.msra.mxu0 %v2427
    %3475 = vmatpush.bf16.msra.mxu0 %v2421
    %3476 = vmatpush.bf16.msra.mxu0 %v2415
    %3477 = vmatpush.bf16.msra.mxu0 %v2409
    %3478 = vmatpush.bf16.msra.mxu0 %v2403
    %3479 = vmatmul.bf16.gmra.mxu0 %v706
    %v3480 = vpop.f32.mrf.mxu0
    %v3481 = vadd.f32 %v3467, %v3480
    %v3482 = vpop.f32.mrf.mxu0
    %v3483 = vadd.f32 %v3469, %v3482
    %3484 = vdwg.mxu0
    %3485 = vmatpush.bf16.msra.mxu0 %v2493
    %3486 = vmatpush.bf16.msra.mxu0 %v2487
    %3487 = vmatpush.bf16.msra.mxu0 %v2481
    %3488 = vmatpush.bf16.msra.mxu0 %v2475
    %3489 = vmatpush.bf16.msra.mxu0 %v2469
    %3490 = vmatpush.bf16.msra.mxu0 %v2463
    %3491 = vmatpush.bf16.msra.mxu0 %v2457
    %3492 = vmatpush.bf16.msra.mxu0 %v2451
    %3493 = vmatmul.bf16.gmra.mxu0 %v707
    %v3494 = vpop.f32.mrf.mxu0
    %v3495 = vadd.f32 %v3481, %v3494
    %v3496 = vpop.f32.mrf.mxu0
    %v3497 = vadd.f32 %v3483, %v3496
    %3498 = vdwg.mxu0
    %3499 = vmatpush.bf16.msra.mxu0 %v2541
    %3500 = vmatpush.bf16.msra.mxu0 %v2535
    %3501 = vmatpush.bf16.msra.mxu0 %v2529
    %3502 = vmatpush.bf16.msra.mxu0 %v2523
    %3503 = vmatpush.bf16.msra.mxu0 %v2517
    %3504 = vmatpush.bf16.msra.mxu0 %v2511
    %3505 = vmatpush.bf16.msra.mxu0 %v2505
    %3506 = vmatpush.bf16.msra.mxu0 %v2499
    %3507 = vmatmul.bf16.gmra.mxu0 %v708
    %v3508 = vpop.f32.mrf.mxu0
    %v3509 = vadd.f32 %v3495, %v3508
    %v3510 = vpop.f32.mrf.mxu0
    %v3511 = vadd.f32 %v3497, %v3510
    %3512 = vdwg.mxu0
    %3513 = vmatpush.bf16.msra.mxu0 %v2589
    %3514 = vmatpush.bf16.msra.mxu0 %v2583
    %3515 = vmatpush.bf16.msra.mxu0 %v2577
    %3516 = vmatpush.bf16.msra.mxu0 %v2571
    %3517 = vmatpush.bf16.msra.mxu0 %v2565
    %3518 = vmatpush.bf16.msra.mxu0 %v2559
    %3519 = vmatpush.bf16.msra.mxu0 %v2553
    %3520 = vmatpush.bf16.msra.mxu0 %v2547
    %3521 = vmatmul.bf16.gmra.mxu0 %v709
    %v3522 = vpop.f32.mrf.mxu0
    %v3523 = vadd.f32 %v3509, %v3522
    %v3524 = vpop.f32.mrf.mxu0
    %v3525 = vadd.f32 %v3511, %v3524
    %3526 = vdwg.mxu0
    %3527 = vmatpush.bf16.msra.mxu0 %v2637
    %3528 = vmatpush.bf16.msra.mxu0 %v2631
    %3529 = vmatpush.bf16.msra.mxu0 %v2625
    %3530 = vmatpush.bf16.msra.mxu0 %v2619
    %3531 = vmatpush.bf16.msra.mxu0 %v2613
    %3532 = vmatpush.bf16.msra.mxu0 %v2607
    %3533 = vmatpush.bf16.msra.mxu0 %v2601
    %3534 = vmatpush.bf16.msra.mxu0 %v2595
    %3535 = vmatmul.bf16.gmra.mxu0 %v710
    %v3536 = vpop.f32.mrf.mxu0
    %v3537 = vadd.f32 %v3523, %v3536
    %v3538 = vpop.f32.mrf.mxu0
    %v3539 = vadd.f32 %v3525, %v3538
    %3540 = vdwg.mxu0
    %3541 = vmatpush.bf16.msra.mxu0 %v2206
    %3542 = vmatpush.bf16.msra.mxu0 %v2200
    %3543 = vmatpush.bf16.msra.mxu0 %v2194
    %3544 = vmatpush.bf16.msra.mxu0 %v2188
    %3545 = vmatpush.bf16.msra.mxu0 %v2182
    %3546 = vmatpush.bf16.msra.mxu0 %v2176
    %3547 = vmatpush.bf16.msra.mxu0 %v2170
    %3548 = vmatpush.bf16.msra.mxu0 %v2164
    %3549 = vmatmul.bf16.gmra.mxu0 %v701
    %v3550 = vpop.f32.mrf.mxu0
    %v3551 = vadd.f32 %v662, %v3550
    %v3552 = vpop.f32.mrf.mxu0
    %v3553 = vadd.f32 %v662, %v3552
    %3554 = vdwg.mxu0
    %3555 = vmatpush.bf16.msra.mxu0 %v2254
    %3556 = vmatpush.bf16.msra.mxu0 %v2248
    %3557 = vmatpush.bf16.msra.mxu0 %v2242
    %3558 = vmatpush.bf16.msra.mxu0 %v2236
    %3559 = vmatpush.bf16.msra.mxu0 %v2230
    %3560 = vmatpush.bf16.msra.mxu0 %v2224
    %3561 = vmatpush.bf16.msra.mxu0 %v2218
    %3562 = vmatpush.bf16.msra.mxu0 %v2212
    %3563 = vmatmul.bf16.gmra.mxu0 %v702
    %v3564 = vpop.f32.mrf.mxu0
    %v3565 = vadd.f32 %v3551, %v3564
    %v3566 = vpop.f32.mrf.mxu0
    %v3567 = vadd.f32 %v3553, %v3566
    %3568 = vdwg.mxu0
    %3569 = vmatpush.bf16.msra.mxu0 %v2302
    %3570 = vmatpush.bf16.msra.mxu0 %v2296
    %3571 = vmatpush.bf16.msra.mxu0 %v2290
    %3572 = vmatpush.bf16.msra.mxu0 %v2284
    %3573 = vmatpush.bf16.msra.mxu0 %v2278
    %3574 = vmatpush.bf16.msra.mxu0 %v2272
    %3575 = vmatpush.bf16.msra.mxu0 %v2266
    %3576 = vmatpush.bf16.msra.mxu0 %v2260
    %3577 = vmatmul.bf16.gmra.mxu0 %v703
    %v3578 = vpop.f32.mrf.mxu0
    %v3579 = vadd.f32 %v3565, %v3578
    %v3580 = vpop.f32.mrf.mxu0
    %v3581 = vadd.f32 %v3567, %v3580
    %3582 = vdwg.mxu0
    %3583 = vmatpush.bf16.msra.mxu0 %v2350
    %3584 = vmatpush.bf16.msra.mxu0 %v2344
    %3585 = vmatpush.bf16.msra.mxu0 %v2338
    %3586 = vmatpush.bf16.msra.mxu0 %v2332
    %3587 = vmatpush.bf16.msra.mxu0 %v2326
    %3588 = vmatpush.bf16.msra.mxu0 %v2320
    %3589 = vmatpush.bf16.msra.mxu0 %v2314
    %3590 = vmatpush.bf16.msra.mxu0 %v2308
    %3591 = vmatmul.bf16.gmra.mxu0 %v704
    %v3592 = vpop.f32.mrf.mxu0
    %v3593 = vadd.f32 %v3579, %v3592
    %v3594 = vpop.f32.mrf.mxu0
    %v3595 = vadd.f32 %v3581, %v3594
    %3596 = vdwg.mxu0
    %3597 = vmatpush.bf16.msra.mxu0 %v2398
    %3598 = vmatpush.bf16.msra.mxu0 %v2392
    %3599 = vmatpush.bf16.msra.mxu0 %v2386
    %3600 = vmatpush.bf16.msra.mxu0 %v2380
    %3601 = vmatpush.bf16.msra.mxu0 %v2374
    %3602 = vmatpush.bf16.msra.mxu0 %v2368
    %3603 = vmatpush.bf16.msra.mxu0 %v2362
    %3604 = vmatpush.bf16.msra.mxu0 %v2356
    %3605 = vmatmul.bf16.gmra.mxu0 %v705
    %v3606 = vpop.f32.mrf.mxu0
    %v3607 = vadd.f32 %v3593, %v3606
    %v3608 = vpop.f32.mrf.mxu0
    %v3609 = vadd.f32 %v3595, %v3608
    %3610 = vdwg.mxu0
    %3611 = vmatpush.bf16.msra.mxu0 %v2446
    %3612 = vmatpush.bf16.msra.mxu0 %v2440
    %3613 = vmatpush.bf16.msra.mxu0 %v2434
    %3614 = vmatpush.bf16.msra.mxu0 %v2428
    %3615 = vmatpush.bf16.msra.mxu0 %v2422
    %3616 = vmatpush.bf16.msra.mxu0 %v2416
    %3617 = vmatpush.bf16.msra.mxu0 %v2410
    %3618 = vmatpush.bf16.msra.mxu0 %v2404
    %3619 = vmatmul.bf16.gmra.mxu0 %v706
    %v3620 = vpop.f32.mrf.mxu0
    %v3621 = vadd.f32 %v3607, %v3620
    %v3622 = vpop.f32.mrf.mxu0
    %v3623 = vadd.f32 %v3609, %v3622
    %3624 = vdwg.mxu0
    %3625 = vmatpush.bf16.msra.mxu0 %v2494
    %3626 = vmatpush.bf16.msra.mxu0 %v2488
    %3627 = vmatpush.bf16.msra.mxu0 %v2482
    %3628 = vmatpush.bf16.msra.mxu0 %v2476
    %3629 = vmatpush.bf16.msra.mxu0 %v2470
    %3630 = vmatpush.bf16.msra.mxu0 %v2464
    %3631 = vmatpush.bf16.msra.mxu0 %v2458
    %3632 = vmatpush.bf16.msra.mxu0 %v2452
    %3633 = vmatmul.bf16.gmra.mxu0 %v707
    %v3634 = vpop.f32.mrf.mxu0
    %v3635 = vadd.f32 %v3621, %v3634
    %v3636 = vpop.f32.mrf.mxu0
    %v3637 = vadd.f32 %v3623, %v3636
    %3638 = vdwg.mxu0
    %3639 = vmatpush.bf16.msra.mxu0 %v2542
    %3640 = vmatpush.bf16.msra.mxu0 %v2536
    %3641 = vmatpush.bf16.msra.mxu0 %v2530
    %3642 = vmatpush.bf16.msra.mxu0 %v2524
    %3643 = vmatpush.bf16.msra.mxu0 %v2518
    %3644 = vmatpush.bf16.msra.mxu0 %v2512
    %3645 = vmatpush.bf16.msra.mxu0 %v2506
    %3646 = vmatpush.bf16.msra.mxu0 %v2500
    %3647 = vmatmul.bf16.gmra.mxu0 %v708
    %v3648 = vpop.f32.mrf.mxu0
    %v3649 = vadd.f32 %v3635, %v3648
    %v3650 = vpop.f32.mrf.mxu0
    %v3651 = vadd.f32 %v3637, %v3650
    %3652 = vdwg.mxu0
    %3653 = vmatpush.bf16.msra.mxu0 %v2590
    %3654 = vmatpush.bf16.msra.mxu0 %v2584
    %3655 = vmatpush.bf16.msra.mxu0 %v2578
    %3656 = vmatpush.bf16.msra.mxu0 %v2572
    %3657 = vmatpush.bf16.msra.mxu0 %v2566
    %3658 = vmatpush.bf16.msra.mxu0 %v2560
    %3659 = vmatpush.bf16.msra.mxu0 %v2554
    %3660 = vmatpush.bf16.msra.mxu0 %v2548
    %3661 = vmatmul.bf16.gmra.mxu0 %v709
    %v3662 = vpop.f32.mrf.mxu0
    %v3663 = vadd.f32 %v3649, %v3662
    %v3664 = vpop.f32.mrf.mxu0
    %v3665 = vadd.f32 %v3651, %v3664
    %3666 = vdwg.mxu0
    %3667 = vmatpush.bf16.msra.mxu0 %v2638
    %3668 = vmatpush.bf16.msra.mxu0 %v2632
    %3669 = vmatpush.bf16.msra.mxu0 %v2626
    %3670 = vmatpush.bf16.msra.mxu0 %v2620
    %3671 = vmatpush.bf16.msra.mxu0 %v2614
    %3672 = vmatpush.bf16.msra.mxu0 %v2608
    %3673 = vmatpush.bf16.msra.mxu0 %v2602
    %3674 = vmatpush.bf16.msra.mxu0 %v2596
    %3675 = vmatmul.bf16.gmra.mxu0 %v710
    %v3676 = vpop.f32.mrf.mxu0
    %v3677 = vadd.f32 %v3663, %v3676
    %v3678 = vpop.f32.mrf.mxu0
    %v3679 = vadd.f32 %v3665, %v3678
    %3680 = vdwg.mxu0
    %3681 = vmatpush.bf16.msra.mxu0 %v2207
    %3682 = vmatpush.bf16.msra.mxu0 %v2201
    %3683 = vmatpush.bf16.msra.mxu0 %v2195
    %3684 = vmatpush.bf16.msra.mxu0 %v2189
    %3685 = vmatpush.bf16.msra.mxu0 %v2183
    %3686 = vmatpush.bf16.msra.mxu0 %v2177
    %3687 = vmatpush.bf16.msra.mxu0 %v2171
    %3688 = vmatpush.bf16.msra.mxu0 %v2165
    %3689 = vmatmul.bf16.gmra.mxu0 %v701
    %v3690 = vpop.f32.mrf.mxu0
    %v3691 = vadd.f32 %v663, %v3690
    %v3692 = vpop.f32.mrf.mxu0
    %v3693 = vadd.f32 %v663, %v3692
    %3694 = vdwg.mxu0
    %3695 = vmatpush.bf16.msra.mxu0 %v2255
    %3696 = vmatpush.bf16.msra.mxu0 %v2249
    %3697 = vmatpush.bf16.msra.mxu0 %v2243
    %3698 = vmatpush.bf16.msra.mxu0 %v2237
    %3699 = vmatpush.bf16.msra.mxu0 %v2231
    %3700 = vmatpush.bf16.msra.mxu0 %v2225
    %3701 = vmatpush.bf16.msra.mxu0 %v2219
    %3702 = vmatpush.bf16.msra.mxu0 %v2213
    %3703 = vmatmul.bf16.gmra.mxu0 %v702
    %v3704 = vpop.f32.mrf.mxu0
    %v3705 = vadd.f32 %v3691, %v3704
    %v3706 = vpop.f32.mrf.mxu0
    %v3707 = vadd.f32 %v3693, %v3706
    %3708 = vdwg.mxu0
    %3709 = vmatpush.bf16.msra.mxu0 %v2303
    %3710 = vmatpush.bf16.msra.mxu0 %v2297
    %3711 = vmatpush.bf16.msra.mxu0 %v2291
    %3712 = vmatpush.bf16.msra.mxu0 %v2285
    %3713 = vmatpush.bf16.msra.mxu0 %v2279
    %3714 = vmatpush.bf16.msra.mxu0 %v2273
    %3715 = vmatpush.bf16.msra.mxu0 %v2267
    %3716 = vmatpush.bf16.msra.mxu0 %v2261
    %3717 = vmatmul.bf16.gmra.mxu0 %v703
    %v3718 = vpop.f32.mrf.mxu0
    %v3719 = vadd.f32 %v3705, %v3718
    %v3720 = vpop.f32.mrf.mxu0
    %v3721 = vadd.f32 %v3707, %v3720
    %3722 = vdwg.mxu0
    %3723 = vmatpush.bf16.msra.mxu0 %v2351
    %3724 = vmatpush.bf16.msra.mxu0 %v2345
    %3725 = vmatpush.bf16.msra.mxu0 %v2339
    %3726 = vmatpush.bf16.msra.mxu0 %v2333
    %3727 = vmatpush.bf16.msra.mxu0 %v2327
    %3728 = vmatpush.bf16.msra.mxu0 %v2321
    %3729 = vmatpush.bf16.msra.mxu0 %v2315
    %3730 = vmatpush.bf16.msra.mxu0 %v2309
    %3731 = vmatmul.bf16.gmra.mxu0 %v704
    %v3732 = vpop.f32.mrf.mxu0
    %v3733 = vadd.f32 %v3719, %v3732
    %v3734 = vpop.f32.mrf.mxu0
    %v3735 = vadd.f32 %v3721, %v3734
    %3736 = vdwg.mxu0
    %3737 = vmatpush.bf16.msra.mxu0 %v2399
    %3738 = vmatpush.bf16.msra.mxu0 %v2393
    %3739 = vmatpush.bf16.msra.mxu0 %v2387
    %3740 = vmatpush.bf16.msra.mxu0 %v2381
    %3741 = vmatpush.bf16.msra.mxu0 %v2375
    %3742 = vmatpush.bf16.msra.mxu0 %v2369
    %3743 = vmatpush.bf16.msra.mxu0 %v2363
    %3744 = vmatpush.bf16.msra.mxu0 %v2357
    %3745 = vmatmul.bf16.gmra.mxu0 %v705
    %v3746 = vpop.f32.mrf.mxu0
    %v3747 = vadd.f32 %v3733, %v3746
    %v3748 = vpop.f32.mrf.mxu0
    %v3749 = vadd.f32 %v3735, %v3748
    %3750 = vdwg.mxu0
    %3751 = vmatpush.bf16.msra.mxu0 %v2447
    %3752 = vmatpush.bf16.msra.mxu0 %v2441
    %3753 = vmatpush.bf16.msra.mxu0 %v2435
    %3754 = vmatpush.bf16.msra.mxu0 %v2429
    %3755 = vmatpush.bf16.msra.mxu0 %v2423
    %3756 = vmatpush.bf16.msra.mxu0 %v2417
    %3757 = vmatpush.bf16.msra.mxu0 %v2411
    %3758 = vmatpush.bf16.msra.mxu0 %v2405
    %3759 = vmatmul.bf16.gmra.mxu0 %v706
    %v3760 = vpop.f32.mrf.mxu0
    %v3761 = vadd.f32 %v3747, %v3760
    %v3762 = vpop.f32.mrf.mxu0
    %v3763 = vadd.f32 %v3749, %v3762
    %3764 = vdwg.mxu0
    %3765 = vmatpush.bf16.msra.mxu0 %v2495
    %3766 = vmatpush.bf16.msra.mxu0 %v2489
    %3767 = vmatpush.bf16.msra.mxu0 %v2483
    %3768 = vmatpush.bf16.msra.mxu0 %v2477
    %3769 = vmatpush.bf16.msra.mxu0 %v2471
    %3770 = vmatpush.bf16.msra.mxu0 %v2465
    %3771 = vmatpush.bf16.msra.mxu0 %v2459
    %3772 = vmatpush.bf16.msra.mxu0 %v2453
    %3773 = vmatmul.bf16.gmra.mxu0 %v707
    %v3774 = vpop.f32.mrf.mxu0
    %v3775 = vadd.f32 %v3761, %v3774
    %v3776 = vpop.f32.mrf.mxu0
    %v3777 = vadd.f32 %v3763, %v3776
    %3778 = vdwg.mxu0
    %3779 = vmatpush.bf16.msra.mxu0 %v2543
    %3780 = vmatpush.bf16.msra.mxu0 %v2537
    %3781 = vmatpush.bf16.msra.mxu0 %v2531
    %3782 = vmatpush.bf16.msra.mxu0 %v2525
    %3783 = vmatpush.bf16.msra.mxu0 %v2519
    %3784 = vmatpush.bf16.msra.mxu0 %v2513
    %3785 = vmatpush.bf16.msra.mxu0 %v2507
    %3786 = vmatpush.bf16.msra.mxu0 %v2501
    %3787 = vmatmul.bf16.gmra.mxu0 %v708
    %v3788 = vpop.f32.mrf.mxu0
    %v3789 = vadd.f32 %v3775, %v3788
    %v3790 = vpop.f32.mrf.mxu0
    %v3791 = vadd.f32 %v3777, %v3790
    %3792 = vdwg.mxu0
    %3793 = vmatpush.bf16.msra.mxu0 %v2591
    %3794 = vmatpush.bf16.msra.mxu0 %v2585
    %3795 = vmatpush.bf16.msra.mxu0 %v2579
    %3796 = vmatpush.bf16.msra.mxu0 %v2573
    %3797 = vmatpush.bf16.msra.mxu0 %v2567
    %3798 = vmatpush.bf16.msra.mxu0 %v2561
    %3799 = vmatpush.bf16.msra.mxu0 %v2555
    %3800 = vmatpush.bf16.msra.mxu0 %v2549
    %3801 = vmatmul.bf16.gmra.mxu0 %v709
    %v3802 = vpop.f32.mrf.mxu0
    %v3803 = vadd.f32 %v3789, %v3802
    %v3804 = vpop.f32.mrf.mxu0
    %v3805 = vadd.f32 %v3791, %v3804
    %3806 = vdwg.mxu0
    %3807 = vmatpush.bf16.msra.mxu0 %v2639
    %3808 = vmatpush.bf16.msra.mxu0 %v2633
    %3809 = vmatpush.bf16.msra.mxu0 %v2627
    %3810 = vmatpush.bf16.msra.mxu0 %v2621
    %3811 = vmatpush.bf16.msra.mxu0 %v2615
    %3812 = vmatpush.bf16.msra.mxu0 %v2609
    %3813 = vmatpush.bf16.msra.mxu0 %v2603
    %3814 = vmatpush.bf16.msra.mxu0 %v2597
    %3815 = vmatmul.bf16.gmra.mxu0 %v710
    %v3816 = vpop.f32.mrf.mxu0
    %v3817 = vadd.f32 %v3803, %v3816
    %v3818 = vpop.f32.mrf.mxu0
    %v3819 = vadd.f32 %v3805, %v3818
    %3820 = vdwg.mxu0
    %3821 = vmatpush.bf16.msra.mxu0 %v2208
    %3822 = vmatpush.bf16.msra.mxu0 %v2202
    %3823 = vmatpush.bf16.msra.mxu0 %v2196
    %3824 = vmatpush.bf16.msra.mxu0 %v2190
    %3825 = vmatpush.bf16.msra.mxu0 %v2184
    %3826 = vmatpush.bf16.msra.mxu0 %v2178
    %3827 = vmatpush.bf16.msra.mxu0 %v2172
    %3828 = vmatpush.bf16.msra.mxu0 %v2166
    %3829 = vmatmul.bf16.gmra.mxu0 %v701
    %v3830 = vpop.f32.mrf.mxu0
    %v3831 = vadd.f32 %v664, %v3830
    %v3832 = vpop.f32.mrf.mxu0
    %v3833 = vadd.f32 %v664, %v3832
    %3834 = vdwg.mxu0
    %3835 = vmatpush.bf16.msra.mxu0 %v2256
    %3836 = vmatpush.bf16.msra.mxu0 %v2250
    %3837 = vmatpush.bf16.msra.mxu0 %v2244
    %3838 = vmatpush.bf16.msra.mxu0 %v2238
    %3839 = vmatpush.bf16.msra.mxu0 %v2232
    %3840 = vmatpush.bf16.msra.mxu0 %v2226
    %3841 = vmatpush.bf16.msra.mxu0 %v2220
    %3842 = vmatpush.bf16.msra.mxu0 %v2214
    %3843 = vmatmul.bf16.gmra.mxu0 %v702
    %v3844 = vpop.f32.mrf.mxu0
    %v3845 = vadd.f32 %v3831, %v3844
    %v3846 = vpop.f32.mrf.mxu0
    %v3847 = vadd.f32 %v3833, %v3846
    %3848 = vdwg.mxu0
    %3849 = vmatpush.bf16.msra.mxu0 %v2304
    %3850 = vmatpush.bf16.msra.mxu0 %v2298
    %3851 = vmatpush.bf16.msra.mxu0 %v2292
    %3852 = vmatpush.bf16.msra.mxu0 %v2286
    %3853 = vmatpush.bf16.msra.mxu0 %v2280
    %3854 = vmatpush.bf16.msra.mxu0 %v2274
    %3855 = vmatpush.bf16.msra.mxu0 %v2268
    %3856 = vmatpush.bf16.msra.mxu0 %v2262
    %3857 = vmatmul.bf16.gmra.mxu0 %v703
    %v3858 = vpop.f32.mrf.mxu0
    %v3859 = vadd.f32 %v3845, %v3858
    %v3860 = vpop.f32.mrf.mxu0
    %v3861 = vadd.f32 %v3847, %v3860
    %3862 = vdwg.mxu0
    %3863 = vmatpush.bf16.msra.mxu0 %v2352
    %3864 = vmatpush.bf16.msra.mxu0 %v2346
    %3865 = vmatpush.bf16.msra.mxu0 %v2340
    %3866 = vmatpush.bf16.msra.mxu0 %v2334
    %3867 = vmatpush.bf16.msra.mxu0 %v2328
    %3868 = vmatpush.bf16.msra.mxu0 %v2322
    %3869 = vmatpush.bf16.msra.mxu0 %v2316
    %3870 = vmatpush.bf16.msra.mxu0 %v2310
    %3871 = vmatmul.bf16.gmra.mxu0 %v704
    %v3872 = vpop.f32.mrf.mxu0
    %v3873 = vadd.f32 %v3859, %v3872
    %v3874 = vpop.f32.mrf.mxu0
    %v3875 = vadd.f32 %v3861, %v3874
    %3876 = vdwg.mxu0
    %3877 = vmatpush.bf16.msra.mxu0 %v2400
    %3878 = vmatpush.bf16.msra.mxu0 %v2394
    %3879 = vmatpush.bf16.msra.mxu0 %v2388
    %3880 = vmatpush.bf16.msra.mxu0 %v2382
    %3881 = vmatpush.bf16.msra.mxu0 %v2376
    %3882 = vmatpush.bf16.msra.mxu0 %v2370
    %3883 = vmatpush.bf16.msra.mxu0 %v2364
    %3884 = vmatpush.bf16.msra.mxu0 %v2358
    %3885 = vmatmul.bf16.gmra.mxu0 %v705
    %v3886 = vpop.f32.mrf.mxu0
    %v3887 = vadd.f32 %v3873, %v3886
    %v3888 = vpop.f32.mrf.mxu0
    %v3889 = vadd.f32 %v3875, %v3888
    %3890 = vdwg.mxu0
    %3891 = vmatpush.bf16.msra.mxu0 %v2448
    %3892 = vmatpush.bf16.msra.mxu0 %v2442
    %3893 = vmatpush.bf16.msra.mxu0 %v2436
    %3894 = vmatpush.bf16.msra.mxu0 %v2430
    %3895 = vmatpush.bf16.msra.mxu0 %v2424
    %3896 = vmatpush.bf16.msra.mxu0 %v2418
    %3897 = vmatpush.bf16.msra.mxu0 %v2412
    %3898 = vmatpush.bf16.msra.mxu0 %v2406
    %3899 = vmatmul.bf16.gmra.mxu0 %v706
    %v3900 = vpop.f32.mrf.mxu0
    %v3901 = vadd.f32 %v3887, %v3900
    %v3902 = vpop.f32.mrf.mxu0
    %v3903 = vadd.f32 %v3889, %v3902
    %3904 = vdwg.mxu0
    %3905 = vmatpush.bf16.msra.mxu0 %v2496
    %3906 = vmatpush.bf16.msra.mxu0 %v2490
    %3907 = vmatpush.bf16.msra.mxu0 %v2484
    %3908 = vmatpush.bf16.msra.mxu0 %v2478
    %3909 = vmatpush.bf16.msra.mxu0 %v2472
    %3910 = vmatpush.bf16.msra.mxu0 %v2466
    %3911 = vmatpush.bf16.msra.mxu0 %v2460
    %3912 = vmatpush.bf16.msra.mxu0 %v2454
    %3913 = vmatmul.bf16.gmra.mxu0 %v707
    %v3914 = vpop.f32.mrf.mxu0
    %v3915 = vadd.f32 %v3901, %v3914
    %v3916 = vpop.f32.mrf.mxu0
    %v3917 = vadd.f32 %v3903, %v3916
    %3918 = vdwg.mxu0
    %3919 = vmatpush.bf16.msra.mxu0 %v2544
    %3920 = vmatpush.bf16.msra.mxu0 %v2538
    %3921 = vmatpush.bf16.msra.mxu0 %v2532
    %3922 = vmatpush.bf16.msra.mxu0 %v2526
    %3923 = vmatpush.bf16.msra.mxu0 %v2520
    %3924 = vmatpush.bf16.msra.mxu0 %v2514
    %3925 = vmatpush.bf16.msra.mxu0 %v2508
    %3926 = vmatpush.bf16.msra.mxu0 %v2502
    %3927 = vmatmul.bf16.gmra.mxu0 %v708
    %v3928 = vpop.f32.mrf.mxu0
    %v3929 = vadd.f32 %v3915, %v3928
    %v3930 = vpop.f32.mrf.mxu0
    %v3931 = vadd.f32 %v3917, %v3930
    %3932 = vdwg.mxu0
    %3933 = vmatpush.bf16.msra.mxu0 %v2592
    %3934 = vmatpush.bf16.msra.mxu0 %v2586
    %3935 = vmatpush.bf16.msra.mxu0 %v2580
    %3936 = vmatpush.bf16.msra.mxu0 %v2574
    %3937 = vmatpush.bf16.msra.mxu0 %v2568
    %3938 = vmatpush.bf16.msra.mxu0 %v2562
    %3939 = vmatpush.bf16.msra.mxu0 %v2556
    %3940 = vmatpush.bf16.msra.mxu0 %v2550
    %3941 = vmatmul.bf16.gmra.mxu0 %v709
    %v3942 = vpop.f32.mrf.mxu0
    %v3943 = vadd.f32 %v3929, %v3942
    %v3944 = vpop.f32.mrf.mxu0
    %v3945 = vadd.f32 %v3931, %v3944
    %3946 = vdwg.mxu0
    %3947 = vmatpush.bf16.msra.mxu0 %v2640
    %3948 = vmatpush.bf16.msra.mxu0 %v2634
    %3949 = vmatpush.bf16.msra.mxu0 %v2628
    %3950 = vmatpush.bf16.msra.mxu0 %v2622
    %3951 = vmatpush.bf16.msra.mxu0 %v2616
    %3952 = vmatpush.bf16.msra.mxu0 %v2610
    %3953 = vmatpush.bf16.msra.mxu0 %v2604
    %3954 = vmatpush.bf16.msra.mxu0 %v2598
    %3955 = vmatmul.bf16.gmra.mxu0 %v710
    %v3956 = vpop.f32.mrf.mxu0
    %v3957 = vadd.f32 %v3943, %v3956
    %v3958 = vpop.f32.mrf.mxu0
    %v3959 = vadd.f32 %v3945, %v3958
    %3960 = vdwg.mxu0
    %v3961 = vpack.c.bf16 %v3259, %v3257
    %v3962 = vld [vmem:[#allocation6] sm:$0xf]
    %v3963 = vld [vmem:[#allocation6 + $0x4] sm:$0xf]
    %v3964 = vld [vmem:[#allocation6 + $0x8] sm:$0xf]
    %v3965 = vld [vmem:[#allocation6 + $0xc] sm:$0xf]
    %v3966 = vld [vmem:[#allocation6 + $0x10] sm:$0xf]
    %v3967 = vld [vmem:[#allocation6 + $0x14] sm:$0xf]
    %v3968 = vld [vmem:[#allocation6 + $0x18] sm:$0xf]
    %v3969 = vld [vmem:[#allocation6 + $0x1c] sm:$0xf]
    %v3970 = vld [vmem:[#allocation6 + $0x20] sm:$0xf]
    %v3971 = vld [vmem:[#allocation6 + $0x24] sm:$0xf]
    %v3972 = vld [vmem:[#allocation6 + $0x28] sm:$0xf]
    %v3973 = vld [vmem:[#allocation6 + $0x2c] sm:$0xf]
    %v3974 = vld [vmem:[#allocation6 + $0x30] sm:$0xf]
    %v3975 = vld [vmem:[#allocation6 + $0x34] sm:$0xf]
    %v3976 = vld [vmem:[#allocation6 + $0x38] sm:$0xf]
    %v3977 = vld [vmem:[#allocation6 + $0x3c] sm:$0xf]
    %v3978 = vld [vmem:[#allocation7] sm:$0x1]
    %v3980 = vperm.slane %v3978, 0
    %v3998 = vunpack.c.l.b16 %v3962
    %v3999 = vunpack.c.l.b16 %v3963
    %v4000 = vunpack.c.l.b16 %v3964
    %v4001 = vunpack.c.l.b16 %v3965
    %v4002 = vunpack.c.l.b16 %v3966
    %v4003 = vunpack.c.l.b16 %v3967
    %v4004 = vunpack.c.l.b16 %v3968
    %v4005 = vunpack.c.l.b16 %v3969
    %v4006 = vunpack.c.l.b16 %v3970
    %v4007 = vunpack.c.l.b16 %v3971
    %v4008 = vunpack.c.l.b16 %v3972
    %v4009 = vunpack.c.l.b16 %v3973
    %v4010 = vunpack.c.l.b16 %v3974
    %v4011 = vunpack.c.l.b16 %v3975
    %v4012 = vunpack.c.l.b16 %v3976
    %v4013 = vunpack.c.l.b16 %v3977
    %v4014 = vpack.c.b16 %v3999, %v3998
    %v4015 = vpack.c.b16 %v4001, %v4000
    %v4016 = vpack.c.b16 %v4003, %v4002
    %v4017 = vpack.c.b16 %v4005, %v4004
    %v4018 = vpack.c.b16 %v4007, %v4006
    %v4019 = vpack.c.b16 %v4009, %v4008
    %v4020 = vpack.c.b16 %v4011, %v4010
    %v4021 = vpack.c.b16 %v4013, %v4012
    %4030 = vmatpush.bf16.msra.mxu0 %v4021
    %4031 = vmatpush.bf16.msra.mxu0 %v4020
    %4032 = vmatpush.bf16.msra.mxu0 %v4019
    %4033 = vmatpush.bf16.msra.mxu0 %v4018
    %4034 = vmatpush.bf16.msra.mxu0 %v4017
    %4035 = vmatpush.bf16.msra.mxu0 %v4016
    %4036 = vmatpush.bf16.msra.mxu0 %v4015
    %4037 = vmatpush.bf16.msra.mxu0 %v4014
    %4038 = vmatmul.bf16.gmra.mxu0 %v3961
    %v4039 = vpop.f32.mrf.mxu0
    %v4040 = vadd.f32 %v3980, %v4039
    %v4041 = vpop.f32.mrf.mxu0
    %v4042 = vadd.f32 %v3980, %v4041
    %4043 = vdwg.mxu0
    %v4044 = vpack.c.bf16 %v4042, %v4040
    %v4045 = vld [vmem:[#allocation9] sm:$0xff]
    %v4046 = vld [vmem:[#allocation9 + $0x8] sm:$0xff]
    %v4047 = vld [vmem:[#allocation9 + $0x10] sm:$0xff]
    %v4048 = vld [vmem:[#allocation9 + $0x18] sm:$0xff]
    %v4049 = vld [vmem:[#allocation9 + $0x20] sm:$0xff]
    %v4050 = vld [vmem:[#allocation9 + $0x28] sm:$0xff]
    %v4051 = vld [vmem:[#allocation9 + $0x30] sm:$0xff]
    %v4052 = vld [vmem:[#allocation9 + $0x38] sm:$0xff]
    %v4053 = vld [vmem:[#allocation9 + $0x40] sm:$0xff]
    %v4054 = vld [vmem:[#allocation9 + $0x48] sm:$0xff]
    %v4055 = vld [vmem:[#allocation9 + $0x50] sm:$0xff]
    %v4056 = vld [vmem:[#allocation9 + $0x58] sm:$0xff]
    %v4057 = vld [vmem:[#allocation9 + $0x60] sm:$0xff]
    %v4058 = vld [vmem:[#allocation9 + $0x68] sm:$0xff]
    %v4059 = vld [vmem:[#allocation9 + $0x70] sm:$0xff]
    %v4060 = vld [vmem:[#allocation9 + $0x78] sm:$0xff]
    %v4061 = vld [vmem:[#allocation9 + $0x80] sm:$0xff]
    %v4062 = vld [vmem:[#allocation9 + $0x88] sm:$0xff]
    %v4063 = vld [vmem:[#allocation9 + $0x90] sm:$0xff]
    %v4064 = vld [vmem:[#allocation9 + $0x98] sm:$0xff]
    %v4065 = vld [vmem:[#allocation9 + $0xa0] sm:$0xff]
    %v4066 = vld [vmem:[#allocation9 + $0xa8] sm:$0xff]
    %v4067 = vld [vmem:[#allocation9 + $0xb0] sm:$0xff]
    %v4068 = vld [vmem:[#allocation9 + $0xb8] sm:$0xff]
    %v4069 = vld [vmem:[#allocation9 + $0xc0] sm:$0xff]
    %v4070 = vld [vmem:[#allocation9 + $0xc8] sm:$0xff]
    %v4071 = vld [vmem:[#allocation9 + $0xd0] sm:$0xff]
    %v4072 = vld [vmem:[#allocation9 + $0xd8] sm:$0xff]
    %v4073 = vld [vmem:[#allocation9 + $0xe0] sm:$0xff]
    %v4074 = vld [vmem:[#allocation9 + $0xe8] sm:$0xff]
    %v4075 = vld [vmem:[#allocation9 + $0xf0] sm:$0xff]
    %v4076 = vld [vmem:[#allocation9 + $0xf8] sm:$0xff]
    %v4109 = vunpack.c.l.b16 %v4045
    %v4110 = vunpack.c.h.b16 %v4045
    %v4111 = vunpack.c.l.b16 %v4046
    %v4112 = vunpack.c.h.b16 %v4046
    %v4113 = vunpack.c.l.b16 %v4047
    %v4114 = vunpack.c.h.b16 %v4047
    %v4115 = vunpack.c.l.b16 %v4048
    %v4116 = vunpack.c.h.b16 %v4048
    %v4117 = vunpack.c.l.b16 %v4049
    %v4118 = vunpack.c.h.b16 %v4049
    %v4119 = vunpack.c.l.b16 %v4050
    %v4120 = vunpack.c.h.b16 %v4050
    %v4121 = vunpack.c.l.b16 %v4051
    %v4122 = vunpack.c.h.b16 %v4051
    %v4123 = vunpack.c.l.b16 %v4052
    %v4124 = vunpack.c.h.b16 %v4052
    %v4125 = vunpack.c.l.b16 %v4053
    %v4126 = vunpack.c.h.b16 %v4053
    %v4127 = vunpack.c.l.b16 %v4054
    %v4128 = vunpack.c.h.b16 %v4054
    %v4129 = vunpack.c.l.b16 %v4055
    %v4130 = vunpack.c.h.b16 %v4055
    %v4131 = vunpack.c.l.b16 %v4056
    %v4132 = vunpack.c.h.b16 %v4056
    %v4133 = vunpack.c.l.b16 %v4057
    %v4134 = vunpack.c.h.b16 %v4057
    %v4135 = vunpack.c.l.b16 %v4058
    %v4136 = vunpack.c.h.b16 %v4058
    %v4137 = vunpack.c.l.b16 %v4059
    %v4138 = vunpack.c.h.b16 %v4059
    %v4139 = vunpack.c.l.b16 %v4060
    %v4140 = vunpack.c.h.b16 %v4060
    %v4141 = vunpack.c.l.b16 %v4061
    %v4142 = vunpack.c.h.b16 %v4061
    %v4143 = vunpack.c.l.b16 %v4062
    %v4144 = vunpack.c.h.b16 %v4062
    %v4145 = vunpack.c.l.b16 %v4063
    %v4146 = vunpack.c.h.b16 %v4063
    %v4147 = vunpack.c.l.b16 %v4064
    %v4148 = vunpack.c.h.b16 %v4064
    %v4149 = vunpack.c.l.b16 %v4065
    %v4150 = vunpack.c.h.b16 %v4065
    %v4151 = vunpack.c.l.b16 %v4066
    %v4152 = vunpack.c.h.b16 %v4066
    %v4153 = vunpack.c.l.b16 %v4067
    %v4154 = vunpack.c.h.b16 %v4067
    %v4155 = vunpack.c.l.b16 %v4068
    %v4156 = vunpack.c.h.b16 %v4068
    %v4157 = vunpack.c.l.b16 %v4069
    %v4158 = vunpack.c.h.b16 %v4069
    %v4159 = vunpack.c.l.b16 %v4070
    %v4160 = vunpack.c.h.b16 %v4070
    %v4161 = vunpack.c.l.b16 %v4071
    %v4162 = vunpack.c.h.b16 %v4071
    %v4163 = vunpack.c.l.b16 %v4072
    %v4164 = vunpack.c.h.b16 %v4072
    %v4165 = vunpack.c.l.b16 %v4073
    %v4166 = vunpack.c.h.b16 %v4073
    %v4167 = vunpack.c.l.b16 %v4074
    %v4168 = vunpack.c.h.b16 %v4074
    %v4169 = vunpack.c.l.b16 %v4075
    %v4170 = vunpack.c.h.b16 %v4075
    %v4171 = vunpack.c.l.b16 %v4076
    %v4172 = vunpack.c.h.b16 %v4076
    %v4173 = vpack.c.b16 %v4113, %v4109
    %v4174 = vpack.c.b16 %v4114, %v4110
    %v4175 = vpack.c.b16 %v4115, %v4111
    %v4176 = vpack.c.b16 %v4116, %v4112
    %v4177 = vpack.c.b16 %v4121, %v4117
    %v4178 = vpack.c.b16 %v4122, %v4118
    %v4179 = vpack.c.b16 %v4123, %v4119
    %v4180 = vpack.c.b16 %v4124, %v4120
    %v4181 = vpack.c.b16 %v4129, %v4125
    %v4182 = vpack.c.b16 %v4130, %v4126
    %v4183 = vpack.c.b16 %v4131, %v4127
    %v4184 = vpack.c.b16 %v4132, %v4128
    %v4185 = vpack.c.b16 %v4137, %v4133
    %v4186 = vpack.c.b16 %v4138, %v4134
    %v4187 = vpack.c.b16 %v4139, %v4135
    %v4188 = vpack.c.b16 %v4140, %v4136
    %v4189 = vpack.c.b16 %v4145, %v4141
    %v4190 = vpack.c.b16 %v4146, %v4142
    %v4191 = vpack.c.b16 %v4147, %v4143
    %v4192 = vpack.c.b16 %v4148, %v4144
    %v4193 = vpack.c.b16 %v4153, %v4149
    %v4194 = vpack.c.b16 %v4154, %v4150
    %v4195 = vpack.c.b16 %v4155, %v4151
    %v4196 = vpack.c.b16 %v4156, %v4152
    %v4197 = vpack.c.b16 %v4161, %v4157
    %v4198 = vpack.c.b16 %v4162, %v4158
    %v4199 = vpack.c.b16 %v4163, %v4159
    %v4200 = vpack.c.b16 %v4164, %v4160
    %v4201 = vpack.c.b16 %v4169, %v4165
    %v4202 = vpack.c.b16 %v4170, %v4166
    %v4203 = vpack.c.b16 %v4171, %v4167
    %v4204 = vpack.c.b16 %v4172, %v4168
    %4237 = vmatpush.bf16.msra.mxu0 %v4201
    %4238 = vmatpush.bf16.msra.mxu0 %v4197
    %4239 = vmatpush.bf16.msra.mxu0 %v4193
    %4240 = vmatpush.bf16.msra.mxu0 %v4189
    %4241 = vmatpush.bf16.msra.mxu0 %v4185
    %4242 = vmatpush.bf16.msra.mxu0 %v4181
    %4243 = vmatpush.bf16.msra.mxu0 %v4177
    %4244 = vmatpush.bf16.msra.mxu0 %v4173
    %4245 = vmatmul.bf16.gmra.mxu0 %v4044
    %v4246 = vpop.f32.mrf.mxu0
    %v4247 = vadd.f32 0.0, %v4246
    %v4248 = vpop.f32.mrf.mxu0
    %v4249 = vadd.f32 0.0, %v4248
    %4250 = vdwg.mxu0
    %4251 = vmatpush.bf16.msra.mxu0 %v4202
    %4252 = vmatpush.bf16.msra.mxu0 %v4198
    %4253 = vmatpush.bf16.msra.mxu0 %v4194
    %4254 = vmatpush.bf16.msra.mxu0 %v4190
    %4255 = vmatpush.bf16.msra.mxu0 %v4186
    %4256 = vmatpush.bf16.msra.mxu0 %v4182
    %4257 = vmatpush.bf16.msra.mxu0 %v4178
    %4258 = vmatpush.bf16.msra.mxu0 %v4174
    %4259 = vmatmul.bf16.gmra.mxu0 %v4044
    %v4260 = vpop.f32.mrf.mxu0
    %v4261 = vadd.f32 0.0, %v4260
    %v4262 = vpop.f32.mrf.mxu0
    %v4263 = vadd.f32 0.0, %v4262
    %4264 = vdwg.mxu0
    %4265 = vmatpush.bf16.msra.mxu0 %v4203
    %4266 = vmatpush.bf16.msra.mxu0 %v4199
    %4267 = vmatpush.bf16.msra.mxu0 %v4195
    %4268 = vmatpush.bf16.msra.mxu0 %v4191
    %4269 = vmatpush.bf16.msra.mxu0 %v4187
    %4270 = vmatpush.bf16.msra.mxu0 %v4183
    %4271 = vmatpush.bf16.msra.mxu0 %v4179
    %4272 = vmatpush.bf16.msra.mxu0 %v4175
    %4273 = vmatmul.bf16.gmra.mxu0 %v4044
    %v4274 = vpop.f32.mrf.mxu0
    %v4275 = vadd.f32 0.0, %v4274
    %v4276 = vpop.f32.mrf.mxu0
    %v4277 = vadd.f32 0.0, %v4276
    %4278 = vdwg.mxu0
    %4279 = vmatpush.bf16.msra.mxu0 %v4204
    %4280 = vmatpush.bf16.msra.mxu0 %v4200
    %4281 = vmatpush.bf16.msra.mxu0 %v4196
    %4282 = vmatpush.bf16.msra.mxu0 %v4192
    %4283 = vmatpush.bf16.msra.mxu0 %v4188
    %4284 = vmatpush.bf16.msra.mxu0 %v4184
    %4285 = vmatpush.bf16.msra.mxu0 %v4180
    %4286 = vmatpush.bf16.msra.mxu0 %v4176
    %4287 = vmatmul.bf16.gmra.mxu0 %v4044
    %v4288 = vpop.f32.mrf.mxu0
    %v4289 = vadd.f32 0.0, %v4288
    %v4290 = vpop.f32.mrf.mxu0
    %v4291 = vadd.f32 0.0, %v4290
    %4292 = vdwg.mxu0
    %v4293 = vadd.f32 %v3397, %v4247
    %v4294 = vadd.f32 %v3537, %v4261
    %v4295 = vadd.f32 %v3677, %v4275
    %v4296 = vadd.f32 %v3817, %v4289
    %v4297 = vadd.f32 %v3399, %v4249
    %v4298 = vadd.f32 %v3539, %v4263
    %v4299 = vadd.f32 %v3679, %v4277
    %v4300 = vadd.f32 %v3819, %v4291
    %v4301 = vmax.f32 %v4293, 0.0
    %v4302 = vmax.f32 %v4294, 0.0
    %v4303 = vmax.f32 %v4295, 0.0
    %v4304 = vmax.f32 %v4296, 0.0
    %v4305 = vmax.f32 %v4297, 0.0
    %v4306 = vmax.f32 %v4298, 0.0
    %v4307 = vmax.f32 %v4299, 0.0
    %v4308 = vmax.f32 %v4300, 0.0
    %v4309 = vpack.c.bf16 %v4305, %v4301
    %v4310 = vpack.c.bf16 %v4306, %v4302
    %v4311 = vpack.c.bf16 %v4307, %v4303
    %v4312 = vpack.c.bf16 %v4308, %v4304
    %v4313 = vld [vmem:[#allocation10] sm:$0xf]
    %v4314 = vld [vmem:[#allocation10 + $0x4] sm:$0xf]
    %v4315 = vld [vmem:[#allocation10 + $0x8] sm:$0xf]
    %v4316 = vld [vmem:[#allocation10 + $0xc] sm:$0xf]
    %v4317 = vld [vmem:[#allocation10 + $0x10] sm:$0xf]
    %v4318 = vld [vmem:[#allocation10 + $0x14] sm:$0xf]
    %v4319 = vld [vmem:[#allocation10 + $0x18] sm:$0xf]
    %v4320 = vld [vmem:[#allocation10 + $0x1c] sm:$0xf]
    %v4321 = vld [vmem:[#allocation10 + $0x20] sm:$0xf]
    %v4322 = vld [vmem:[#allocation10 + $0x24] sm:$0xf]
    %v4323 = vld [vmem:[#allocation10 + $0x28] sm:$0xf]
    %v4324 = vld [vmem:[#allocation10 + $0x2c] sm:$0xf]
    %v4325 = vld [vmem:[#allocation10 + $0x30] sm:$0xf]
    %v4326 = vld [vmem:[#allocation10 + $0x34] sm:$0xf]
    %v4327 = vld [vmem:[#allocation10 + $0x38] sm:$0xf]
    %v4328 = vld [vmem:[#allocation10 + $0x3c] sm:$0xf]
    %v4329 = vld [vmem:[#allocation10 + $0x40] sm:$0xf]
    %v4330 = vld [vmem:[#allocation10 + $0x44] sm:$0xf]
    %v4331 = vld [vmem:[#allocation10 + $0x48] sm:$0xf]
    %v4332 = vld [vmem:[#allocation10 + $0x4c] sm:$0xf]
    %v4333 = vld [vmem:[#allocation10 + $0x50] sm:$0xf]
    %v4334 = vld [vmem:[#allocation10 + $0x54] sm:$0xf]
    %v4335 = vld [vmem:[#allocation10 + $0x58] sm:$0xf]
    %v4336 = vld [vmem:[#allocation10 + $0x5c] sm:$0xf]
    %v4337 = vld [vmem:[#allocation10 + $0x60] sm:$0xf]
    %v4338 = vld [vmem:[#allocation10 + $0x64] sm:$0xf]
    %v4339 = vld [vmem:[#allocation10 + $0x68] sm:$0xf]
    %v4340 = vld [vmem:[#allocation10 + $0x6c] sm:$0xf]
    %v4341 = vld [vmem:[#allocation10 + $0x70] sm:$0xf]
    %v4342 = vld [vmem:[#allocation10 + $0x74] sm:$0xf]
    %v4343 = vld [vmem:[#allocation10 + $0x78] sm:$0xf]
    %v4344 = vld [vmem:[#allocation10 + $0x7c] sm:$0xf]
    %v4345 = vld [vmem:[#allocation10 + $0x80] sm:$0xf]
    %v4346 = vld [vmem:[#allocation10 + $0x84] sm:$0xf]
    %v4347 = vld [vmem:[#allocation10 + $0x88] sm:$0xf]
    %v4348 = vld [vmem:[#allocation10 + $0x8c] sm:$0xf]
    %v4349 = vld [vmem:[#allocation10 + $0x90] sm:$0xf]
    %v4350 = vld [vmem:[#allocation10 + $0x94] sm:$0xf]
    %v4351 = vld [vmem:[#allocation10 + $0x98] sm:$0xf]
    %v4352 = vld [vmem:[#allocation10 + $0x9c] sm:$0xf]
    %v4353 = vld [vmem:[#allocation10 + $0xa0] sm:$0xf]
    %v4354 = vld [vmem:[#allocation10 + $0xa4] sm:$0xf]
    %v4355 = vld [vmem:[#allocation10 + $0xa8] sm:$0xf]
    %v4356 = vld [vmem:[#allocation10 + $0xac] sm:$0xf]
    %v4357 = vld [vmem:[#allocation10 + $0xb0] sm:$0xf]
    %v4358 = vld [vmem:[#allocation10 + $0xb4] sm:$0xf]
    %v4359 = vld [vmem:[#allocation10 + $0xb8] sm:$0xf]
    %v4360 = vld [vmem:[#allocation10 + $0xbc] sm:$0xf]
    %v4361 = vld [vmem:[#allocation10 + $0xc0] sm:$0xf]
    %v4362 = vld [vmem:[#allocation10 + $0xc4] sm:$0xf]
    %v4363 = vld [vmem:[#allocation10 + $0xc8] sm:$0xf]
    %v4364 = vld [vmem:[#allocation10 + $0xcc] sm:$0xf]
    %v4365 = vld [vmem:[#allocation10 + $0xd0] sm:$0xf]
    %v4366 = vld [vmem:[#allocation10 + $0xd4] sm:$0xf]
    %v4367 = vld [vmem:[#allocation10 + $0xd8] sm:$0xf]
    %v4368 = vld [vmem:[#allocation10 + $0xdc] sm:$0xf]
    %v4369 = vld [vmem:[#allocation10 + $0xe0] sm:$0xf]
    %v4370 = vld [vmem:[#allocation10 + $0xe4] sm:$0xf]
    %v4371 = vld [vmem:[#allocation10 + $0xe8] sm:$0xf]
    %v4372 = vld [vmem:[#allocation10 + $0xec] sm:$0xf]
    %v4373 = vld [vmem:[#allocation10 + $0xf0] sm:$0xf]
    %v4374 = vld [vmem:[#allocation10 + $0xf4] sm:$0xf]
    %v4375 = vld [vmem:[#allocation10 + $0xf8] sm:$0xf]
    %v4376 = vld [vmem:[#allocation10 + $0xfc] sm:$0xf]
    %v4377 = vld [vmem:[#allocation12] sm:$0x1]
    %v4379 = vperm.slane %v4377, 0
    %v4445 = vunpack.c.l.b16 %v4313
    %v4446 = vunpack.c.l.b16 %v4314
    %v4447 = vunpack.c.l.b16 %v4315
    %v4448 = vunpack.c.l.b16 %v4316
    %v4449 = vunpack.c.l.b16 %v4317
    %v4450 = vunpack.c.l.b16 %v4318
    %v4451 = vunpack.c.l.b16 %v4319
    %v4452 = vunpack.c.l.b16 %v4320
    %v4453 = vunpack.c.l.b16 %v4321
    %v4454 = vunpack.c.l.b16 %v4322
    %v4455 = vunpack.c.l.b16 %v4323
    %v4456 = vunpack.c.l.b16 %v4324
    %v4457 = vunpack.c.l.b16 %v4325
    %v4458 = vunpack.c.l.b16 %v4326
    %v4459 = vunpack.c.l.b16 %v4327
    %v4460 = vunpack.c.l.b16 %v4328
    %v4461 = vunpack.c.l.b16 %v4329
    %v4462 = vunpack.c.l.b16 %v4330
    %v4463 = vunpack.c.l.b16 %v4331
    %v4464 = vunpack.c.l.b16 %v4332
    %v4465 = vunpack.c.l.b16 %v4333
    %v4466 = vunpack.c.l.b16 %v4334
    %v4467 = vunpack.c.l.b16 %v4335
    %v4468 = vunpack.c.l.b16 %v4336
    %v4469 = vunpack.c.l.b16 %v4337
    %v4470 = vunpack.c.l.b16 %v4338
    %v4471 = vunpack.c.l.b16 %v4339
    %v4472 = vunpack.c.l.b16 %v4340
    %v4473 = vunpack.c.l.b16 %v4341
    %v4474 = vunpack.c.l.b16 %v4342
    %v4475 = vunpack.c.l.b16 %v4343
    %v4476 = vunpack.c.l.b16 %v4344
    %v4477 = vunpack.c.l.b16 %v4345
    %v4478 = vunpack.c.l.b16 %v4346
    %v4479 = vunpack.c.l.b16 %v4347
    %v4480 = vunpack.c.l.b16 %v4348
    %v4481 = vunpack.c.l.b16 %v4349
    %v4482 = vunpack.c.l.b16 %v4350
    %v4483 = vunpack.c.l.b16 %v4351
    %v4484 = vunpack.c.l.b16 %v4352
    %v4485 = vunpack.c.l.b16 %v4353
    %v4486 = vunpack.c.l.b16 %v4354
    %v4487 = vunpack.c.l.b16 %v4355
    %v4488 = vunpack.c.l.b16 %v4356
    %v4489 = vunpack.c.l.b16 %v4357
    %v4490 = vunpack.c.l.b16 %v4358
    %v4491 = vunpack.c.l.b16 %v4359
    %v4492 = vunpack.c.l.b16 %v4360
    %v4493 = vunpack.c.l.b16 %v4361
    %v4494 = vunpack.c.l.b16 %v4362
    %v4495 = vunpack.c.l.b16 %v4363
    %v4496 = vunpack.c.l.b16 %v4364
    %v4497 = vunpack.c.l.b16 %v4365
    %v4498 = vunpack.c.l.b16 %v4366
    %v4499 = vunpack.c.l.b16 %v4367
    %v4500 = vunpack.c.l.b16 %v4368
    %v4501 = vunpack.c.l.b16 %v4369
    %v4502 = vunpack.c.l.b16 %v4370
    %v4503 = vunpack.c.l.b16 %v4371
    %v4504 = vunpack.c.l.b16 %v4372
    %v4505 = vunpack.c.l.b16 %v4373
    %v4506 = vunpack.c.l.b16 %v4374
    %v4507 = vunpack.c.l.b16 %v4375
    %v4508 = vunpack.c.l.b16 %v4376
    %v4509 = vpack.c.b16 %v4446, %v4445
    %v4510 = vpack.c.b16 %v4448, %v4447
    %v4511 = vpack.c.b16 %v4450, %v4449
    %v4512 = vpack.c.b16 %v4452, %v4451
    %v4513 = vpack.c.b16 %v4454, %v4453
    %v4514 = vpack.c.b16 %v4456, %v4455
    %v4515 = vpack.c.b16 %v4458, %v4457
    %v4516 = vpack.c.b16 %v4460, %v4459
    %v4517 = vpack.c.b16 %v4462, %v4461
    %v4518 = vpack.c.b16 %v4464, %v4463
    %v4519 = vpack.c.b16 %v4466, %v4465
    %v4520 = vpack.c.b16 %v4468, %v4467
    %v4521 = vpack.c.b16 %v4470, %v4469
    %v4522 = vpack.c.b16 %v4472, %v4471
    %v4523 = vpack.c.b16 %v4474, %v4473
    %v4524 = vpack.c.b16 %v4476, %v4475
    %v4525 = vpack.c.b16 %v4478, %v4477
    %v4526 = vpack.c.b16 %v4480, %v4479
    %v4527 = vpack.c.b16 %v4482, %v4481
    %v4528 = vpack.c.b16 %v4484, %v4483
    %v4529 = vpack.c.b16 %v4486, %v4485
    %v4530 = vpack.c.b16 %v4488, %v4487
    %v4531 = vpack.c.b16 %v4490, %v4489
    %v4532 = vpack.c.b16 %v4492, %v4491
    %v4533 = vpack.c.b16 %v4494, %v4493
    %v4534 = vpack.c.b16 %v4496, %v4495
    %v4535 = vpack.c.b16 %v4498, %v4497
    %v4536 = vpack.c.b16 %v4500, %v4499
    %v4537 = vpack.c.b16 %v4502, %v4501
    %v4538 = vpack.c.b16 %v4504, %v4503
    %v4539 = vpack.c.b16 %v4506, %v4505
    %v4540 = vpack.c.b16 %v4508, %v4507
    %4573 = vmatpush.bf16.msra.mxu0 %v4516
    %4574 = vmatpush.bf16.msra.mxu0 %v4515
    %4575 = vmatpush.bf16.msra.mxu0 %v4514
    %4576 = vmatpush.bf16.msra.mxu0 %v4513
    %4577 = vmatpush.bf16.msra.mxu0 %v4512
    %4578 = vmatpush.bf16.msra.mxu0 %v4511
    %4579 = vmatpush.bf16.msra.mxu0 %v4510
    %4580 = vmatpush.bf16.msra.mxu0 %v4509
    %4581 = vmatmul.bf16.gmra.mxu0 %v4309
    %v4582 = vpop.f32.mrf.mxu0
    %v4583 = vadd.f32 %v4379, %v4582
    %v4584 = vpop.f32.mrf.mxu0
    %v4585 = vadd.f32 %v4379, %v4584
    %4586 = vdwg.mxu0
    %4587 = vmatpush.bf16.msra.mxu0 %v4524
    %4588 = vmatpush.bf16.msra.mxu0 %v4523
    %4589 = vmatpush.bf16.msra.mxu0 %v4522
    %4590 = vmatpush.bf16.msra.mxu0 %v4521
    %4591 = vmatpush.bf16.msra.mxu0 %v4520
    %4592 = vmatpush.bf16.msra.mxu0 %v4519
    %4593 = vmatpush.bf16.msra.mxu0 %v4518
    %4594 = vmatpush.bf16.msra.mxu0 %v4517
    %4595 = vmatmul.bf16.gmra.mxu0 %v4310
    %v4596 = vpop.f32.mrf.mxu0
    %v4597 = vadd.f32 %v4583, %v4596
    %v4598 = vpop.f32.mrf.mxu0
    %v4599 = vadd.f32 %v4585, %v4598
    %4600 = vdwg.mxu0
    %4601 = vmatpush.bf16.msra.mxu0 %v4532
    %4602 = vmatpush.bf16.msra.mxu0 %v4531
    %4603 = vmatpush.bf16.msra.mxu0 %v4530
    %4604 = vmatpush.bf16.msra.mxu0 %v4529
    %4605 = vmatpush.bf16.msra.mxu0 %v4528
    %4606 = vmatpush.bf16.msra.mxu0 %v4527
    %4607 = vmatpush.bf16.msra.mxu0 %v4526
    %4608 = vmatpush.bf16.msra.mxu0 %v4525
    %4609 = vmatmul.bf16.gmra.mxu0 %v4311
    %v4610 = vpop.f32.mrf.mxu0
    %v4611 = vadd.f32 %v4597, %v4610
    %v4612 = vpop.f32.mrf.mxu0
    %v4613 = vadd.f32 %v4599, %v4612
    %4614 = vdwg.mxu0
    %4615 = vmatpush.bf16.msra.mxu0 %v4540
    %4616 = vmatpush.bf16.msra.mxu0 %v4539
    %4617 = vmatpush.bf16.msra.mxu0 %v4538
    %4618 = vmatpush.bf16.msra.mxu0 %v4537
    %4619 = vmatpush.bf16.msra.mxu0 %v4536
    %4620 = vmatpush.bf16.msra.mxu0 %v4535
    %4621 = vmatpush.bf16.msra.mxu0 %v4534
    %4622 = vmatpush.bf16.msra.mxu0 %v4533
    %4623 = vmatmul.bf16.gmra.mxu0 %v4312
    %v4624 = vpop.f32.mrf.mxu0
    %v4625 = vadd.f32 %v4611, %v4624
    %v4626 = vpop.f32.mrf.mxu0
    %v4627 = vadd.f32 %v4613, %v4626
    %4628 = vdwg.mxu0
    %v4629 = vmax.f32 %v4625, 0.0
    %v4630 = vmax.f32 %v4627, 0.0
    %v4631 = vpack.c.bf16 %v4630, %v4629
    %v4632 = vld [vmem:[#allocation13] sm:$0xf]
    %v4633 = vld [vmem:[#allocation13 + $0x4] sm:$0xf]
    %v4634 = vld [vmem:[#allocation13 + $0x8] sm:$0xf]
    %v4635 = vld [vmem:[#allocation13 + $0xc] sm:$0xf]
    %v4636 = vld [vmem:[#allocation13 + $0x10] sm:$0xf]
    %v4637 = vld [vmem:[#allocation13 + $0x14] sm:$0xf]
    %v4638 = vld [vmem:[#allocation13 + $0x18] sm:$0xf]
    %v4639 = vld [vmem:[#allocation13 + $0x1c] sm:$0xf]
    %v4640 = vld [vmem:[#allocation13 + $0x20] sm:$0xf]
    %v4641 = vld [vmem:[#allocation13 + $0x24] sm:$0xf]
    %v4642 = vld [vmem:[#allocation13 + $0x28] sm:$0xf]
    %v4643 = vld [vmem:[#allocation13 + $0x2c] sm:$0xf]
    %v4644 = vld [vmem:[#allocation13 + $0x30] sm:$0xf]
    %v4645 = vld [vmem:[#allocation13 + $0x34] sm:$0xf]
    %v4646 = vld [vmem:[#allocation13 + $0x38] sm:$0xf]
    %v4647 = vld [vmem:[#allocation13 + $0x3c] sm:$0xf]
    %v4664 = vunpack.c.l.b16 %v4632
    %v4665 = vunpack.c.l.b16 %v4633
    %v4666 = vunpack.c.l.b16 %v4634
    %v4667 = vunpack.c.l.b16 %v4635
    %v4668 = vunpack.c.l.b16 %v4636
    %v4669 = vunpack.c.l.b16 %v4637
    %v4670 = vunpack.c.l.b16 %v4638
    %v4671 = vunpack.c.l.b16 %v4639
    %v4672 = vunpack.c.l.b16 %v4640
    %v4673 = vunpack.c.l.b16 %v4641
    %v4674 = vunpack.c.l.b16 %v4642
    %v4675 = vunpack.c.l.b16 %v4643
    %v4676 = vunpack.c.l.b16 %v4644
    %v4677 = vunpack.c.l.b16 %v4645
    %v4678 = vunpack.c.l.b16 %v4646
    %v4679 = vunpack.c.l.b16 %v4647
    %v4680 = vpack.c.b16 %v4665, %v4664
    %v4681 = vpack.c.b16 %v4667, %v4666
    %v4682 = vpack.c.b16 %v4669, %v4668
    %v4683 = vpack.c.b16 %v4671, %v4670
    %v4684 = vpack.c.b16 %v4673, %v4672
    %v4685 = vpack.c.b16 %v4675, %v4674
    %v4686 = vpack.c.b16 %v4677, %v4676
    %v4687 = vpack.c.b16 %v4679, %v4678
    %4696 = vmatpush.bf16.msra.mxu0 %v4687
    %4697 = vmatpush.bf16.msra.mxu0 %v4686
    %4698 = vmatpush.bf16.msra.mxu0 %v4685
    %4699 = vmatpush.bf16.msra.mxu0 %v4684
    %4700 = vmatpush.bf16.msra.mxu0 %v4683
    %4701 = vmatpush.bf16.msra.mxu0 %v4682
    %4702 = vmatpush.bf16.msra.mxu0 %v4681
    %4703 = vmatpush.bf16.msra.mxu0 %v4680
    %4704 = vmatmul.bf16.gmra.mxu0 %v4631
    %v4705 = vpop.f32.mrf.mxu0
    %v4706 = vadd.f32 0.0, %v4705
    %v4707 = vpop.f32.mrf.mxu0
    %v4708 = vadd.f32 0.0, %v4707
    %4709 = vdwg.mxu0
    %v4710 = vadd.f32 %v3957, %v4706
    %v4711 = vadd.f32 %v3959, %v4708
    %v4712 = vld [vmem:[#allocation15] sm:$0x1]
    %v4714 = vperm.slane %v4712, 0
    %v4716 = vadd.f32 %v4710, %v4714
    %v4717 = vadd.f32 %v4711, %v4714
    %4718 = vst [vmem:[%s10] sm:$0xff] %v4716
    %4719 = vst [vmem:[%s10 + $0x8] sm:$0xff] %v4717
    // Predicated region
    $region78: #{multimodal_predict.1} parent=1 // pred_check
      _
    $region79: #{multimodal_predict.1} parent=1 // pred_check_branch
      %4721 = sbr.rel (0) target = $region81
    $region80: #{multimodal_predict.1} parent=1 // pred_region
      _
    $region81: #{multimodal_predict.1} parent=1 // pred_fallthru
      _
    // Predicated region
    $region82: #{multimodal_predict.1} parent=1 // pred_check
      _
    $region83: #{multimodal_predict.1} parent=1 // pred_check_branch
      %4723 = sbr.rel (0) target = $region85
    $region84: #{multimodal_predict.1} parent=1 // pred_region
      _
    $region85: #{multimodal_predict.1} parent=1 // pred_fallthru
      _
    %4724 = vsyncpa [#allocation3], 1
    %4725 = vsyncpa [#allocation5], 1
    %4726 = vsyncpa [#allocation8], 1
    %4727 = vsyncpa [#allocation11], 1
    %4728 = vsyncpa [#allocation14], 1

</llo_original>
